<compile_context>
chip_gen: v7x
topology: tpu7x:2x2x1
jax: 0.10.0
libtpu: 0.0.40
codegen_flags: <defaults>
</compile_context>

<pallas_src>
import functools

import jax
import jax.numpy as jnp
from jax.experimental import pallas as pl
from jax.experimental.pallas import tpu as pltpu

BN_EPS = 1e-5


# -----------------------------------------------------------------------------
# Single fused kernel for the whole residual block (canvas-in -> canvas-out).
# -----------------------------------------------------------------------------
def _block_kernel(x_ref, w1_ref, g1_ref, beta1_ref, w2_ref, g2_ref, beta2_ref,
                  o_ref, *, B, C, H, W):
    Hp, Wp = H + 2, W + 2
    Np = B * Hp * Wp                    # valid canvas rows
    Npad = x_ref.shape[0]               # rows padded up to a multiple of 8

    x = x_ref[...]                       # (Npad, C) input canvas

    def tap(a, s):
        # tap(a, s)[r] == a[(r + s) % Npad] : cyclic sublane rotation (XLU).
        k = (-s) % Npad
        return a if k == 0 else pltpu.roll(a, shift=k, axis=0)

    # ---- BN validity masks from an in-kernel iota (no mask operands) -------
    rf = jax.lax.broadcasted_iota(jnp.int32, (Npad, 1), 0).astype(jnp.float32)
    bi = (rf * (1.0 / (Hp * Wp)) + 1e-4).astype(jnp.int32).astype(jnp.float32)
    rr = rf - bi * float(Hp * Wp)        # row index within one image canvas
    ii = (rr * (1.0 / Wp) + 1e-4).astype(jnp.int32).astype(jnp.float32)
    jj = rr - ii * float(Wp)
    in_img = rf < float(Np)
    # conv1 output rows: (i, j) in [0, H+1) x [0, W+1)
    m1 = ((ii < H + 0.5) & (jj < W + 0.5) & in_img).astype(jnp.float32)
    # block output rows (input-canvas convention): (i, j) in [1, H+1) x [1, W+1)
    m2 = ((ii > 0.5) & (ii < H + 0.5) & (jj > 0.5) & (jj < W + 0.5)
          & in_img).astype(jnp.float32)
    inv_cnt1 = 1.0 / float(B * (H + 1) * (W + 1))
    inv_cnt2 = 1.0 / float(B * H * W)

    # ---- conv1 (k=2, pad=1): ONE K=4C matmul over an in-VMEM im2col slab ---
    # conv1 output at canvas row r reads canvas rows r + {0, 1, Wp, Wp+1}.
    slab1 = jnp.concatenate([x, tap(x, 1), tap(x, Wp), tap(x, Wp + 1)], axis=1)
    acc1 = jnp.dot(slab1, w1_ref[...], preferred_element_type=jnp.float32)

    # ---- BN1 (training-mode, masked, one-pass variance) + ReLU -------------
    a1m = acc1 * m1
    mean1 = jnp.sum(a1m, axis=0, keepdims=True) * inv_cnt1
    var1 = jnp.sum(a1m * acc1, axis=0, keepdims=True) * inv_cnt1 - mean1 * mean1
    scale1 = g1_ref[...] * jax.lax.rsqrt(var1 + BN_EPS)
    h = jnp.maximum((acc1 - mean1) * scale1 + beta1_ref[...], 0.0)

    # ---- conv2 (k=2, no pad): taps shifted so the block output lands back
    #      on the input-canvas convention (output (i,j) at row b,(i+1),(j+1)) -
    slab2 = jnp.concatenate(
        [tap(h, -(Wp + 1)), tap(h, -Wp), tap(h, -1), h], axis=1)
    acc2 = jnp.dot(slab2, w2_ref[...], preferred_element_type=jnp.float32)

    # ---- BN2 + residual + ReLU, masked back onto a clean canvas ------------
    a2m = acc2 * m2
    mean2 = jnp.sum(a2m, axis=0, keepdims=True) * inv_cnt2
    var2 = jnp.sum(a2m * acc2, axis=0, keepdims=True) * inv_cnt2 - mean2 * mean2
    scale2 = g2_ref[...] * jax.lax.rsqrt(var2 + BN_EPS)
    y = (acc2 - mean2) * scale2 + beta2_ref[...]
    # Residual: original x[b, i, j] already sits at this canvas row (no shift).
    o_ref[...] = jnp.maximum(y + x, 0.0) * m2


# -----------------------------------------------------------------------------
# Canvas layout helpers (done ONCE per network, not per Block).
# -----------------------------------------------------------------------------
def _round_up(n, m):
    return (n + m - 1) // m * m


def nchw_to_canvas(x_nchw):
    """NCHW -> flattened zero-padded NHWC canvas of shape (Npad, C)."""
    B, C, H, W = x_nchw.shape
    Hp, Wp = H + 2, W + 2
    Np = B * Hp * Wp
    Npad = _round_up(Np, 8)
    x = jnp.transpose(x_nchw, (0, 2, 3, 1))                       # NHWC
    canvas = jnp.pad(x, ((0, 0), (1, 1), (1, 1), (0, 0))).reshape(Np, C)
    return jnp.pad(canvas, ((0, Npad - Np), (0, 0)))


def canvas_to_nchw(canvas, B, C, H, W):
    Hp, Wp = H + 2, W + 2
    Np = B * Hp * Wp
    out = canvas[:Np].reshape(B, Hp, Wp, C)[:, 1:H + 1, 1:W + 1, :]
    return jnp.transpose(out, (0, 3, 1, 2))


def block_forward_canvas(canvas, params, *, B, C, H, W):
    """Canvas-in -> canvas-out (same layout): chain across Blocks directly."""
    Npad = canvas.shape[0]
    kernel = functools.partial(_block_kernel, B=B, C=C, H=H, W=W)
    vmem = pl.BlockSpec(memory_space=pltpu.MemorySpace.VMEM)
    return pl.pallas_call(
        kernel,
        out_shape=jax.ShapeDtypeStruct((Npad, C), jnp.float32),
        in_specs=[vmem] * 7,
        out_specs=vmem,
    )(canvas, params["w1"], params["gamma1"], params["beta1"],
      params["w2"], params["gamma2"], params["beta2"])


def block_forward(x_nchw, params):
    B, C, H, W = x_nchw.shape
    canvas = nchw_to_canvas(x_nchw)
    out_canvas = block_forward_canvas(canvas, params, B=B, C=C, H=H, W=W)
    return canvas_to_nchw(out_canvas, B, C, H, W)


# -----------------------------------------------------------------------------
# Deterministic synthetic parameters.
#  w1, w2: (4*C, C), tap order t = ki*2 + kj, per-tap layout (Cin, Cout).
#  bias1/bias2 exist only for the reference (BN cancels them; kernel skips them).
# -----------------------------------------------------------------------------
def init_params(key, num_channel):
    C = num_channel

    def nxt():
        nonlocal key
        key, sub = jax.random.split(key)
        return sub

    def rnd(shape, scale=0.1):
        return scale * jax.random.normal(nxt(), shape, jnp.float32)

    return {
        "w1": rnd((4 * C, C)), "bias1": rnd((C,)),
        "gamma1": 1.0 + rnd((1, C)), "beta1": rnd((1, C)),
        "w2": rnd((4 * C, C)), "bias2": rnd((C,)),
        "gamma2": 1.0 + rnd((1, C)), "beta2": rnd((1, C)),
    }


# -----------------------------------------------------------------------------
# Pure-JAX reference implementing the literal PyTorch Block semantics
# (real 2x2 convs WITH bias, training-mode BatchNorm with batch stats).
# -----------------------------------------------------------------------------
def block_reference(x_nchw, params):
    B, C, H, W = x_nchw.shape
    x = jnp.transpose(x_nchw, (0, 2, 3, 1))           # NHWC

    def conv2x2(inp, w_flat, bias, pad):
        w = w_flat.reshape(2, 2, C, C)                # (kh, kw, Cin, Cout) == HWIO
        padding = ((1, 1), (1, 1)) if pad else ((0, 0), (0, 0))
        y = jax.lax.conv_general_dilated(
            inp, w, (1, 1), padding,
            dimension_numbers=("NHWC", "HWIO", "NHWC"))
        return y + bias.reshape(1, 1, 1, C)

    def bn(y, gamma, beta):
        mean = jnp.mean(y, axis=(0, 1, 2), keepdims=True)
        var = jnp.mean(jnp.square(y - mean), axis=(0, 1, 2), keepdims=True)
        return ((y - mean) * jax.lax.rsqrt(var + BN_EPS)
                * gamma.reshape(1, 1, 1, C) + beta.reshape(1, 1, 1, C))

    h = jnp.maximum(bn(conv2x2(x, params["w1"], params["bias1"], True),
                       params["gamma1"], params["beta1"]), 0.0)
    y = bn(conv2x2(h, params["w2"], params["bias2"], False),
           params["gamma2"], params["beta2"])
    y = jnp.maximum(y + x, 0.0)
    return jnp.transpose(y, (0, 3, 1, 2))


if __name__ == "__main__":
    key = jax.random.PRNGKey(0)
    key, xkey = jax.random.split(key)

    B, C, BOARD = 2, 128, 9            # lane-dense channel count
    x = jax.random.normal(xkey, (B, C, BOARD, BOARD), jnp.float32)   # NCHW
    params = init_params(key, num_channel=C)

    fwd = jax.jit(block_forward)
    out = fwd(x, params)
    jax.block_until_ready(out)

    assert out.shape == (B, C, BOARD, BOARD)

    ref = block_reference(x, params)
    assert jnp.allclose(out, ref, atol=5e-4, rtol=5e-4), (
        float(jnp.max(jnp.abs(out - ref))))

    print("KERNEL_OK")
</pallas_src>

<mosaic_0001>
module attributes {stable_mosaic.version = 11 : i64} {
  func.func @_block_kernel(%arg0: memref<248x128xf32, #tpu.memory_space<vmem>>, %arg1: memref<512x128xf32, #tpu.memory_space<vmem>>, %arg2: memref<1x128xf32, #tpu.memory_space<vmem>>, %arg3: memref<1x128xf32, #tpu.memory_space<vmem>>, %arg4: memref<512x128xf32, #tpu.memory_space<vmem>>, %arg5: memref<1x128xf32, #tpu.memory_space<vmem>>, %arg6: memref<1x128xf32, #tpu.memory_space<vmem>>, %arg7: memref<248x128xf32, #tpu.memory_space<vmem>>) attributes {dimension_semantics = [], scalar_prefetch = 0 : i64, scratch_operands = 0 : i64, tpu.core_type = #tpu.core_type<tc>} {
    %c0 = arith.constant 0 : index
    %c0_0 = arith.constant 0 : index
    %0 = vector.load %arg0[%c0, %c0_0] : memref<248x128xf32, #tpu.memory_space<vmem>>, vector<248x128xf32>
    %1 = tpu.iota {dimensions = array<i32: 0>} : vector<248x1xi32>
    %2 = arith.sitofp %1 : vector<248x1xi32> to vector<248x1xf32>
    %cst = arith.constant 0.00826446246 : f32
    %3 = vector.broadcast %cst : f32 to vector<248x1xf32>
    %4 = arith.mulf %2, %3 : vector<248x1xf32>
    %cst_1 = arith.constant 9.99999974E-5 : f32
    %5 = vector.broadcast %cst_1 : f32 to vector<248x1xf32>
    %6 = arith.addf %4, %5 : vector<248x1xf32>
    %7 = arith.fptosi %6 : vector<248x1xf32> to vector<248x1xi32>
    %8 = arith.sitofp %7 : vector<248x1xi32> to vector<248x1xf32>
    %cst_2 = arith.constant 1.210000e+02 : f32
    %9 = vector.broadcast %cst_2 : f32 to vector<248x1xf32>
    %10 = arith.mulf %8, %9 : vector<248x1xf32>
    %11 = arith.subf %2, %10 : vector<248x1xf32>
    %cst_3 = arith.constant 0.0909090936 : f32
    %12 = vector.broadcast %cst_3 : f32 to vector<248x1xf32>
    %13 = arith.mulf %11, %12 : vector<248x1xf32>
    %cst_4 = arith.constant 9.99999974E-5 : f32
    %14 = vector.broadcast %cst_4 : f32 to vector<248x1xf32>
    %15 = arith.addf %13, %14 : vector<248x1xf32>
    %16 = arith.fptosi %15 : vector<248x1xf32> to vector<248x1xi32>
    %17 = arith.sitofp %16 : vector<248x1xi32> to vector<248x1xf32>
    %cst_5 = arith.constant 1.100000e+01 : f32
    %18 = vector.broadcast %cst_5 : f32 to vector<248x1xf32>
    %19 = arith.mulf %17, %18 : vector<248x1xf32>
    %20 = arith.subf %11, %19 : vector<248x1xf32>
    %cst_6 = arith.constant 2.420000e+02 : f32
    %21 = vector.broadcast %cst_6 : f32 to vector<248x1xf32>
    %22 = arith.cmpf olt, %2, %21 : vector<248x1xf32>
    %cst_7 = arith.constant 9.500000e+00 : f32
    %23 = vector.broadcast %cst_7 : f32 to vector<248x1xf32>
    %24 = arith.cmpf olt, %17, %23 : vector<248x1xf32>
    %cst_8 = arith.constant 9.500000e+00 : f32
    %25 = vector.broadcast %cst_8 : f32 to vector<248x1xf32>
    %26 = arith.cmpf olt, %20, %25 : vector<248x1xf32>
    %27 = arith.andi %24, %26 : vector<248x1xi1>
    %28 = arith.andi %27, %22 : vector<248x1xi1>
    %29 = arith.extui %28 : vector<248x1xi1> to vector<248x1xi32>
    %30 = arith.sitofp %29 : vector<248x1xi32> to vector<248x1xf32>
    %cst_9 = arith.constant 5.000000e-01 : f32
    %31 = vector.broadcast %cst_9 : f32 to vector<248x1xf32>
    %32 = arith.cmpf ogt, %17, %31 : vector<248x1xf32>
    %cst_10 = arith.constant 9.500000e+00 : f32
    %33 = vector.broadcast %cst_10 : f32 to vector<248x1xf32>
    %34 = arith.cmpf olt, %17, %33 : vector<248x1xf32>
    %35 = arith.andi %32, %34 : vector<248x1xi1>
    %cst_11 = arith.constant 5.000000e-01 : f32
    %36 = vector.broadcast %cst_11 : f32 to vector<248x1xf32>
    %37 = arith.cmpf ogt, %20, %36 : vector<248x1xf32>
    %38 = arith.andi %35, %37 : vector<248x1xi1>
    %cst_12 = arith.constant 9.500000e+00 : f32
    %39 = vector.broadcast %cst_12 : f32 to vector<248x1xf32>
    %40 = arith.cmpf olt, %20, %39 : vector<248x1xf32>
    %41 = arith.andi %38, %40 : vector<248x1xi1>
    %42 = arith.andi %41, %22 : vector<248x1xi1>
    %43 = arith.extui %42 : vector<248x1xi1> to vector<248x1xi32>
    %44 = arith.sitofp %43 : vector<248x1xi32> to vector<248x1xf32>
    %c247_i32 = arith.constant 247 : i32
    %45 = tpu.dynamic_rotate %0 by %c247_i32 dim 0 : vector<248x128xf32>, i32 -> vector<248x128xf32>
    %c237_i32 = arith.constant 237 : i32
    %46 = tpu.dynamic_rotate %0 by %c237_i32 dim 0 : vector<248x128xf32>, i32 -> vector<248x128xf32>
    %c236_i32 = arith.constant 236 : i32
    %47 = tpu.dynamic_rotate %0 by %c236_i32 dim 0 : vector<248x128xf32>, i32 -> vector<248x128xf32>
    %48 = tpu.concatenate %0, %45, %46, %47 in 1 : vector<248x128xf32>, vector<248x128xf32>, vector<248x128xf32>, vector<248x128xf32> -> vector<248x512xf32>
    %c0_13 = arith.constant 0 : index
    %c0_14 = arith.constant 0 : index
    %49 = vector.load %arg1[%c0_13, %c0_14] : memref<512x128xf32, #tpu.memory_space<vmem>>, vector<512x128xf32>
    %cst_15 = arith.constant dense<0.000000e+00> : vector<248x128xf32>
    %50 = tpu.matmul %48, %49, %cst_15 {dimension_numbers = #tpu.dot_dimension_numbers<[1], [0], [0], [1], [0, 0, 1, 1], [], []>} : vector<248x512xf32>, vector<512x128xf32>, vector<248x128xf32> -> vector<248x128xf32>
    %51 = vector.broadcast %30 : vector<248x1xf32> to vector<248x128xf32>
    %52 = arith.mulf %50, %51 : vector<248x128xf32>
    %cst_16 = arith.constant dense<0.000000e+00> : vector<128xf32>
    %53 = vector.multi_reduction <add>, %52, %cst_16 [0] : vector<248x128xf32> to vector<128xf32>
    %54 = vector.shape_cast %53 : vector<128xf32> to vector<1x128xf32>
    %cst_17 = arith.constant 5.000000e-03 : f32
    %55 = vector.broadcast %cst_17 : f32 to vector<1x128xf32>
    %56 = arith.mulf %54, %55 : vector<1x128xf32>
    %57 = arith.mulf %52, %50 : vector<248x128xf32>
    %cst_18 = arith.constant dense<0.000000e+00> : vector<128xf32>
    %58 = vector.multi_reduction <add>, %57, %cst_18 [0] : vector<248x128xf32> to vector<128xf32>
    %59 = vector.shape_cast %58 : vector<128xf32> to vector<1x128xf32>
    %cst_19 = arith.constant 5.000000e-03 : f32
    %60 = vector.broadcast %cst_19 : f32 to vector<1x128xf32>
    %61 = arith.mulf %59, %60 : vector<1x128xf32>
    %62 = arith.mulf %56, %56 : vector<1x128xf32>
    %63 = arith.subf %61, %62 : vector<1x128xf32>
    %c0_20 = arith.constant 0 : index
    %c0_21 = arith.constant 0 : index
    %64 = vector.load %arg2[%c0_20, %c0_21] : memref<1x128xf32, #tpu.memory_space<vmem>>, vector<1x128xf32>
    %cst_22 = arith.constant 9.99999974E-6 : f32
    %65 = vector.broadcast %cst_22 : f32 to vector<1x128xf32>
    %66 = arith.addf %63, %65 : vector<1x128xf32>
    %67 = math.rsqrt %66 : vector<1x128xf32>
    %68 = arith.mulf %64, %67 : vector<1x128xf32>
    %69 = vector.broadcast %56 : vector<1x128xf32> to vector<248x128xf32>
    %70 = arith.subf %50, %69 : vector<248x128xf32>
    %71 = vector.broadcast %68 : vector<1x128xf32> to vector<248x128xf32>
    %72 = arith.mulf %70, %71 : vector<248x128xf32>
    %c0_23 = arith.constant 0 : index
    %c0_24 = arith.constant 0 : index
    %73 = vector.load %arg3[%c0_23, %c0_24] : memref<1x128xf32, #tpu.memory_space<vmem>>, vector<1x128xf32>
    %74 = vector.broadcast %73 : vector<1x128xf32> to vector<248x128xf32>
    %75 = arith.addf %72, %74 : vector<248x128xf32>
    %cst_25 = arith.constant 0.000000e+00 : f32
    %76 = vector.broadcast %cst_25 : f32 to vector<248x128xf32>
    %77 = arith.maximumf %75, %76 : vector<248x128xf32>
    %c12_i32 = arith.constant 12 : i32
    %78 = tpu.dynamic_rotate %77 by %c12_i32 dim 0 : vector<248x128xf32>, i32 -> vector<248x128xf32>
    %c11_i32 = arith.constant 11 : i32
    %79 = tpu.dynamic_rotate %77 by %c11_i32 dim 0 : vector<248x128xf32>, i32 -> vector<248x128xf32>
    %c1_i32 = arith.constant 1 : i32
    %80 = tpu.dynamic_rotate %77 by %c1_i32 dim 0 : vector<248x128xf32>, i32 -> vector<248x128xf32>
    %81 = tpu.concatenate %78, %79, %80, %77 in 1 : vector<248x128xf32>, vector<248x128xf32>, vector<248x128xf32>, vector<248x128xf32> -> vector<248x512xf32>
    %c0_26 = arith.constant 0 : index
    %c0_27 = arith.constant 0 : index
    %82 = vector.load %arg4[%c0_26, %c0_27] : memref<512x128xf32, #tpu.memory_space<vmem>>, vector<512x128xf32>
    %cst_28 = arith.constant dense<0.000000e+00> : vector<248x128xf32>
    %83 = tpu.matmul %81, %82, %cst_28 {dimension_numbers = #tpu.dot_dimension_numbers<[1], [0], [0], [1], [0, 0, 1, 1], [], []>} : vector<248x512xf32>, vector<512x128xf32>, vector<248x128xf32> -> vector<248x128xf32>
    %84 = vector.broadcast %44 : vector<248x1xf32> to vector<248x128xf32>
    %85 = arith.mulf %83, %84 : vector<248x128xf32>
    %cst_29 = arith.constant dense<0.000000e+00> : vector<128xf32>
    %86 = vector.multi_reduction <add>, %85, %cst_29 [0] : vector<248x128xf32> to vector<128xf32>
    %87 = vector.shape_cast %86 : vector<128xf32> to vector<1x128xf32>
    %cst_30 = arith.constant 0.00617283955 : f32
    %88 = vector.broadcast %cst_30 : f32 to vector<1x128xf32>
    %89 = arith.mulf %87, %88 : vector<1x128xf32>
    %90 = arith.mulf %85, %83 : vector<248x128xf32>
    %cst_31 = arith.constant dense<0.000000e+00> : vector<128xf32>
    %91 = vector.multi_reduction <add>, %90, %cst_31 [0] : vector<248x128xf32> to vector<128xf32>
    %92 = vector.shape_cast %91 : vector<128xf32> to vector<1x128xf32>
    %cst_32 = arith.constant 0.00617283955 : f32
    %93 = vector.broadcast %cst_32 : f32 to vector<1x128xf32>
    %94 = arith.mulf %92, %93 : vector<1x128xf32>
    %95 = arith.mulf %89, %89 : vector<1x128xf32>
    %96 = arith.subf %94, %95 : vector<1x128xf32>
    %c0_33 = arith.constant 0 : index
    %c0_34 = arith.constant 0 : index
    %97 = vector.load %arg5[%c0_33, %c0_34] : memref<1x128xf32, #tpu.memory_space<vmem>>, vector<1x128xf32>
    %cst_35 = arith.constant 9.99999974E-6 : f32
    %98 = vector.broadcast %cst_35 : f32 to vector<1x128xf32>
    %99 = arith.addf %96, %98 : vector<1x128xf32>
    %100 = math.rsqrt %99 : vector<1x128xf32>
    %101 = arith.mulf %97, %100 : vector<1x128xf32>
    %102 = vector.broadcast %89 : vector<1x128xf32> to vector<248x128xf32>
    %103 = arith.subf %83, %102 : vector<248x128xf32>
    %104 = vector.broadcast %101 : vector<1x128xf32> to vector<248x128xf32>
    %105 = arith.mulf %103, %104 : vector<248x128xf32>
    %c0_36 = arith.constant 0 : index
    %c0_37 = arith.constant 0 : index
    %106 = vector.load %arg6[%c0_36, %c0_37] : memref<1x128xf32, #tpu.memory_space<vmem>>, vector<1x128xf32>
    %107 = vector.broadcast %106 : vector<1x128xf32> to vector<248x128xf32>
    %108 = arith.addf %105, %107 : vector<248x128xf32>
    %109 = arith.addf %108, %0 : vector<248x128xf32>
    %cst_38 = arith.constant 0.000000e+00 : f32
    %110 = vector.broadcast %cst_38 : f32 to vector<248x128xf32>
    %111 = arith.maximumf %109, %110 : vector<248x128xf32>
    %112 = vector.broadcast %44 : vector<248x1xf32> to vector<248x128xf32>
    %113 = arith.mulf %111, %112 : vector<248x128xf32>
    %c0_39 = arith.constant 0 : index
    %c0_40 = arith.constant 0 : index
    %114 = vector.load %arg7[%c0_39, %c0_40] : memref<248x128xf32, #tpu.memory_space<vmem>>, vector<248x128xf32>
    tpu.vector_store %arg7[%c0_39, %c0_40], %113 {strides = array<i32>} : memref<248x128xf32, #tpu.memory_space<vmem>>, vector<248x128xf32>,
    return
  }
}

</mosaic_0001>

<llo_original>
// kernel: block_forward.1
$region0: #{block_forward.1}
  #allocation0 [shape = 'u32[]', space=smem, size = 0x4, offset = 0x4, fixed_abs, tag = 'smem constant byte address 0x4 - core index']
  #allocation1 [shape = 'u32[144,128]{1,0:T(1,128)}', space=vmem, size = 0x12000, scoped, tag = 'internal scratch']
  %s0 = inlined_call_operand.vmem [shape: f32[248,128], index: 0, kind: input, shape index: {}]
  %s1 = inlined_call_operand.vmem [shape: f32[512,128], index: 1, kind: input, shape index: {}]
  %s2 = inlined_call_operand.vmem [shape: f32[1,128], index: 2, kind: input, shape index: {}]
  %s3 = inlined_call_operand.vmem [shape: f32[1,128], index: 3, kind: input, shape index: {}]
  %s4 = inlined_call_operand.vmem [shape: f32[512,128], index: 4, kind: input, shape index: {}]
  %s5 = inlined_call_operand.vmem [shape: f32[1,128], index: 5, kind: input, shape index: {}]
  %s6 = inlined_call_operand.vmem [shape: f32[1,128], index: 6, kind: input, shape index: {}]
  %s7 = inlined_call_operand.vmem [shape: f32[248,128], index: 7, kind: output, shape index: {}]
  %s8 = sld [smem:[#allocation0]]
  $region38: #{block_forward.1} parent=0
    _
  %s10 = ssub.s32 1, %s8
  %s11 = scalar_select 0, %s10, %s8
  // Predicated region
  $region2: #{block_forward.1} parent=0 // pred_check
    _
  $region3: #{block_forward.1} parent=0 // pred_check_branch
    %13 = sbr.rel (0) target = $region5
  $region4: #{block_forward.1} parent=0 // pred_region
    _
  $region5: #{block_forward.1} parent=0 // pred_fallthru
    _
  // Predicated region
  $region6: #{block_forward.1} parent=0 // pred_check
    _
  $region7: #{block_forward.1} parent=0 // pred_check_branch
    %15 = sbr.rel (0) target = $region9
  $region8: #{block_forward.1} parent=0 // pred_region
    _
  $region9: #{block_forward.1} parent=0 // pred_fallthru
    _
  // Predicated region
  $region10: #{block_forward.1} parent=0 // pred_check
    _
  $region11: #{block_forward.1} parent=0 // pred_check_branch
    %17 = sbr.rel (0) target = $region13
  $region12: #{block_forward.1} parent=0 // pred_region
    _
  $region13: #{block_forward.1} parent=0 // pred_fallthru
    _
  // Predicated region
  $region14: #{block_forward.1} parent=0 // pred_check
    _
  $region15: #{block_forward.1} parent=0 // pred_check_branch
    %19 = sbr.rel (0) target = $region17
  $region16: #{block_forward.1} parent=0 // pred_region
    _
  $region17: #{block_forward.1} parent=0 // pred_fallthru
    _
  // Predicated region
  $region18: #{block_forward.1} parent=0 // pred_check
    _
  $region19: #{block_forward.1} parent=0 // pred_check_branch
    %21 = sbr.rel (0) target = $region21
  $region20: #{block_forward.1} parent=0 // pred_region
    _
  $region21: #{block_forward.1} parent=0 // pred_fallthru
    _
  // Predicated region
  $region22: #{block_forward.1} parent=0 // pred_check
    _
  $region23: #{block_forward.1} parent=0 // pred_check_branch
    %23 = sbr.rel (0) target = $region25
  $region24: #{block_forward.1} parent=0 // pred_region
    _
  $region25: #{block_forward.1} parent=0 // pred_fallthru
    _
  // Predicated region
  $region26: #{block_forward.1} parent=0 // pred_check
    _
  $region27: #{block_forward.1} parent=0 // pred_check_branch
    %25 = sbr.rel (0) target = $region29
  $region28: #{block_forward.1} parent=0 // pred_region
    _
  $region29: #{block_forward.1} parent=0 // pred_fallthru
    _
  %v26 = vld [vmem:[%s0] sm:$0xff]
  %v27 = vld [vmem:[%s0 + $0x8] sm:$0xff]
  %v28 = vld [vmem:[%s0 + $0x10] sm:$0xff]
  %v29 = vld [vmem:[%s0 + $0x18] sm:$0xff]
  %v30 = vld [vmem:[%s0 + $0x20] sm:$0xff]
  %v31 = vld [vmem:[%s0 + $0x28] sm:$0xff]
  %v32 = vld [vmem:[%s0 + $0x30] sm:$0xff]
  %v33 = vld [vmem:[%s0 + $0x38] sm:$0xff]
  %v34 = vld [vmem:[%s0 + $0x40] sm:$0xff]
  %v35 = vld [vmem:[%s0 + $0x48] sm:$0xff]
  %v36 = vld [vmem:[%s0 + $0x50] sm:$0xff]
  %v37 = vld [vmem:[%s0 + $0x58] sm:$0xff]
  %v38 = vld [vmem:[%s0 + $0x60] sm:$0xff]
  %v39 = vld [vmem:[%s0 + $0x68] sm:$0xff]
  %v40 = vld [vmem:[%s0 + $0x70] sm:$0xff]
  %v41 = vld [vmem:[%s0 + $0x78] sm:$0xff]
  %v42 = vld [vmem:[%s0 + $0x80] sm:$0xff]
  %v43 = vld [vmem:[%s0 + $0x88] sm:$0xff]
  %v44 = vld [vmem:[%s0 + $0x90] sm:$0xff]
  %v45 = vld [vmem:[%s0 + $0x98] sm:$0xff]
  %v46 = vld [vmem:[%s0 + $0xa0] sm:$0xff]
  %v47 = vld [vmem:[%s0 + $0xa8] sm:$0xff]
  %v48 = vld [vmem:[%s0 + $0xb0] sm:$0xff]
  %v49 = vld [vmem:[%s0 + $0xb8] sm:$0xff]
  %v50 = vld [vmem:[%s0 + $0xc0] sm:$0xff]
  %v51 = vld [vmem:[%s0 + $0xc8] sm:$0xff]
  %v52 = vld [vmem:[%s0 + $0xd0] sm:$0xff]
  %v53 = vld [vmem:[%s0 + $0xd8] sm:$0xff]
  %v54 = vld [vmem:[%s0 + $0xe0] sm:$0xff]
  %v55 = vld [vmem:[%s0 + $0xe8] sm:$0xff]
  %v56 = vld [vmem:[%s0 + $0xf0] sm:$0xff]
  %v57 = vlaneseq
  %v58 = vshrl.u32 %v57, 7
  %v59 = vadd.s32 %v58, 8
  %v60 = vadd.s32 %v58, 16
  %v61 = vadd.s32 %v58, 24
  %v62 = vadd.s32 %v58, 32
  %v63 = vadd.s32 %v58, 40
  %v64 = vadd.s32 %v58, 48
  %v65 = vadd.s32 %v58, 56
  %v66 = vadd.s32 %v58, 64
  %v67 = vadd.s32 %v58, 72
  %v68 = vadd.s32 %v58, 80
  %v69 = vadd.s32 %v58, 88
  %v70 = vadd.s32 %v58, 96
  %v71 = vadd.s32 %v58, 104
  %v72 = vadd.s32 %v58, 112
  %v73 = vadd.s32 %v58, 120
  %v74 = vadd.s32 %v58, 128
  %v75 = vadd.s32 %v58, 136
  %v76 = vadd.s32 %v58, 144
  %v77 = vadd.s32 %v58, 152
  %v78 = vadd.s32 %v58, 160
  %v79 = vadd.s32 %v58, 168
  %v80 = vadd.s32 %v58, 176
  %v81 = vadd.s32 %v58, 184
  %v82 = vadd.s32 %v58, 192
  %v83 = vadd.s32 %v58, 200
  %v84 = vadd.s32 %v58, 208
  %v85 = vadd.s32 %v58, 216
  %v86 = vadd.s32 %v58, 224
  %v87 = vadd.s32 %v58, 232
  %v88 = vadd.s32 %v58, 240
  %v89 = vcvt.s32.f32 %v58
  %v90 = vcvt.s32.f32 %v59
  %v91 = vcvt.s32.f32 %v60
  %v92 = vcvt.s32.f32 %v61
  %v93 = vcvt.s32.f32 %v62
  %v94 = vcvt.s32.f32 %v63
  %v95 = vcvt.s32.f32 %v64
  %v96 = vcvt.s32.f32 %v65
  %v97 = vcvt.s32.f32 %v66
  %v98 = vcvt.s32.f32 %v67
  %v99 = vcvt.s32.f32 %v68
  %v100 = vcvt.s32.f32 %v69
  %v101 = vcvt.s32.f32 %v70
  %v102 = vcvt.s32.f32 %v71
  %v103 = vcvt.s32.f32 %v72
  %v104 = vcvt.s32.f32 %v73
  %v105 = vcvt.s32.f32 %v74
  %v106 = vcvt.s32.f32 %v75
  %v107 = vcvt.s32.f32 %v76
  %v108 = vcvt.s32.f32 %v77
  %v109 = vcvt.s32.f32 %v78
  %v110 = vcvt.s32.f32 %v79
  %v111 = vcvt.s32.f32 %v80
  %v112 = vcvt.s32.f32 %v81
  %v113 = vcvt.s32.f32 %v82
  %v114 = vcvt.s32.f32 %v83
  %v115 = vcvt.s32.f32 %v84
  %v116 = vcvt.s32.f32 %v85
  %v117 = vcvt.s32.f32 %v86
  %v118 = vcvt.s32.f32 %v87
  %v119 = vcvt.s32.f32 %v88
  %v120 = vmul.f32 %v89, 0.008264462
  %v121 = vmul.f32 %v90, 0.008264462
  %v122 = vmul.f32 %v91, 0.008264462
  %v123 = vmul.f32 %v92, 0.008264462
  %v124 = vmul.f32 %v93, 0.008264462
  %v125 = vmul.f32 %v94, 0.008264462
  %v126 = vmul.f32 %v95, 0.008264462
  %v127 = vmul.f32 %v96, 0.008264462
  %v128 = vmul.f32 %v97, 0.008264462
  %v129 = vmul.f32 %v98, 0.008264462
  %v130 = vmul.f32 %v99, 0.008264462
  %v131 = vmul.f32 %v100, 0.008264462
  %v132 = vmul.f32 %v101, 0.008264462
  %v133 = vmul.f32 %v102, 0.008264462
  %v134 = vmul.f32 %v103, 0.008264462
  %v135 = vmul.f32 %v104, 0.008264462
  %v136 = vmul.f32 %v105, 0.008264462
  %v137 = vmul.f32 %v106, 0.008264462
  %v138 = vmul.f32 %v107, 0.008264462
  %v139 = vmul.f32 %v108, 0.008264462
  %v140 = vmul.f32 %v109, 0.008264462
  %v141 = vmul.f32 %v110, 0.008264462
  %v142 = vmul.f32 %v111, 0.008264462
  %v143 = vmul.f32 %v112, 0.008264462
  %v144 = vmul.f32 %v113, 0.008264462
  %v145 = vmul.f32 %v114, 0.008264462
  %v146 = vmul.f32 %v115, 0.008264462
  %v147 = vmul.f32 %v116, 0.008264462
  %v148 = vmul.f32 %v117, 0.008264462
  %v149 = vmul.f32 %v118, 0.008264462
  %v150 = vmul.f32 %v119, 0.008264462
  %v151 = vadd.f32 %v120, 0.0001
  %v152 = vadd.f32 %v121, 0.0001
  %v153 = vadd.f32 %v122, 0.0001
  %v154 = vadd.f32 %v123, 0.0001
  %v155 = vadd.f32 %v124, 0.0001
  %v156 = vadd.f32 %v125, 0.0001
  %v157 = vadd.f32 %v126, 0.0001
  %v158 = vadd.f32 %v127, 0.0001
  %v159 = vadd.f32 %v128, 0.0001
  %v160 = vadd.f32 %v129, 0.0001
  %v161 = vadd.f32 %v130, 0.0001
  %v162 = vadd.f32 %v131, 0.0001
  %v163 = vadd.f32 %v132, 0.0001
  %v164 = vadd.f32 %v133, 0.0001
  %v165 = vadd.f32 %v134, 0.0001
  %v166 = vadd.f32 %v135, 0.0001
  %v167 = vadd.f32 %v136, 0.0001
  %v168 = vadd.f32 %v137, 0.0001
  %v169 = vadd.f32 %v138, 0.0001
  %v170 = vadd.f32 %v139, 0.0001
  %v171 = vadd.f32 %v140, 0.0001
  %v172 = vadd.f32 %v141, 0.0001
  %v173 = vadd.f32 %v142, 0.0001
  %v174 = vadd.f32 %v143, 0.0001
  %v175 = vadd.f32 %v144, 0.0001
  %v176 = vadd.f32 %v145, 0.0001
  %v177 = vadd.f32 %v146, 0.0001
  %v178 = vadd.f32 %v147, 0.0001
  %v179 = vadd.f32 %v148, 0.0001
  %v180 = vadd.f32 %v149, 0.0001
  %v181 = vadd.f32 %v150, 0.0001
  %v182 = vcvt.f32.s32.to.zero.pseudo %v151
  %v183 = vcvt.f32.s32.to.zero.pseudo %v152
  %v184 = vcvt.f32.s32.to.zero.pseudo %v153
  %v185 = vcvt.f32.s32.to.zero.pseudo %v154
  %v186 = vcvt.f32.s32.to.zero.pseudo %v155
  %v187 = vcvt.f32.s32.to.zero.pseudo %v156
  %v188 = vcvt.f32.s32.to.zero.pseudo %v157
  %v189 = vcvt.f32.s32.to.zero.pseudo %v158
  %v190 = vcvt.f32.s32.to.zero.pseudo %v159
  %v191 = vcvt.f32.s32.to.zero.pseudo %v160
  %v192 = vcvt.f32.s32.to.zero.pseudo %v161
  %v193 = vcvt.f32.s32.to.zero.pseudo %v162
  %v194 = vcvt.f32.s32.to.zero.pseudo %v163
  %v195 = vcvt.f32.s32.to.zero.pseudo %v164
  %v196 = vcvt.f32.s32.to.zero.pseudo %v165
  %v197 = vcvt.f32.s32.to.zero.pseudo %v166
  %v198 = vcvt.f32.s32.to.zero.pseudo %v167
  %v199 = vcvt.f32.s32.to.zero.pseudo %v168
  %v200 = vcvt.f32.s32.to.zero.pseudo %v169
  %v201 = vcvt.f32.s32.to.zero.pseudo %v170
  %v202 = vcvt.f32.s32.to.zero.pseudo %v171
  %v203 = vcvt.f32.s32.to.zero.pseudo %v172
  %v204 = vcvt.f32.s32.to.zero.pseudo %v173
  %v205 = vcvt.f32.s32.to.zero.pseudo %v174
  %v206 = vcvt.f32.s32.to.zero.pseudo %v175
  %v207 = vcvt.f32.s32.to.zero.pseudo %v176
  %v208 = vcvt.f32.s32.to.zero.pseudo %v177
  %v209 = vcvt.f32.s32.to.zero.pseudo %v178
  %v210 = vcvt.f32.s32.to.zero.pseudo %v179
  %v211 = vcvt.f32.s32.to.zero.pseudo %v180
  %v212 = vcvt.f32.s32.to.zero.pseudo %v181
  %v213 = vcvt.s32.f32 %v182
  %v214 = vcvt.s32.f32 %v183
  %v215 = vcvt.s32.f32 %v184
  %v216 = vcvt.s32.f32 %v185
  %v217 = vcvt.s32.f32 %v186
  %v218 = vcvt.s32.f32 %v187
  %v219 = vcvt.s32.f32 %v188
  %v220 = vcvt.s32.f32 %v189
  %v221 = vcvt.s32.f32 %v190
  %v222 = vcvt.s32.f32 %v191
  %v223 = vcvt.s32.f32 %v192
  %v224 = vcvt.s32.f32 %v193
  %v225 = vcvt.s32.f32 %v194
  %v226 = vcvt.s32.f32 %v195
  %v227 = vcvt.s32.f32 %v196
  %v228 = vcvt.s32.f32 %v197
  %v229 = vcvt.s32.f32 %v198
  %v230 = vcvt.s32.f32 %v199
  %v231 = vcvt.s32.f32 %v200
  %v232 = vcvt.s32.f32 %v201
  %v233 = vcvt.s32.f32 %v202
  %v234 = vcvt.s32.f32 %v203
  %v235 = vcvt.s32.f32 %v204
  %v236 = vcvt.s32.f32 %v205
  %v237 = vcvt.s32.f32 %v206
  %v238 = vcvt.s32.f32 %v207
  %v239 = vcvt.s32.f32 %v208
  %v240 = vcvt.s32.f32 %v209
  %v241 = vcvt.s32.f32 %v210
  %v242 = vcvt.s32.f32 %v211
  %v243 = vcvt.s32.f32 %v212
  %v244 = vmul.f32 %v213, 121.0
  %v245 = vmul.f32 %v214, 121.0
  %v246 = vmul.f32 %v215, 121.0
  %v247 = vmul.f32 %v216, 121.0
  %v248 = vmul.f32 %v217, 121.0
  %v249 = vmul.f32 %v218, 121.0
  %v250 = vmul.f32 %v219, 121.0
  %v251 = vmul.f32 %v220, 121.0
  %v252 = vmul.f32 %v221, 121.0
  %v253 = vmul.f32 %v222, 121.0
  %v254 = vmul.f32 %v223, 121.0
  %v255 = vmul.f32 %v224, 121.0
  %v256 = vmul.f32 %v225, 121.0
  %v257 = vmul.f32 %v226, 121.0
  %v258 = vmul.f32 %v227, 121.0
  %v259 = vmul.f32 %v228, 121.0
  %v260 = vmul.f32 %v229, 121.0
  %v261 = vmul.f32 %v230, 121.0
  %v262 = vmul.f32 %v231, 121.0
  %v263 = vmul.f32 %v232, 121.0
  %v264 = vmul.f32 %v233, 121.0
  %v265 = vmul.f32 %v234, 121.0
  %v266 = vmul.f32 %v235, 121.0
  %v267 = vmul.f32 %v236, 121.0
  %v268 = vmul.f32 %v237, 121.0
  %v269 = vmul.f32 %v238, 121.0
  %v270 = vmul.f32 %v239, 121.0
  %v271 = vmul.f32 %v240, 121.0
  %v272 = vmul.f32 %v241, 121.0
  %v273 = vmul.f32 %v242, 121.0
  %v274 = vmul.f32 %v243, 121.0
  %v275 = vsub.f32 %v89, %v244
  %v276 = vsub.f32 %v90, %v245
  %v277 = vsub.f32 %v91, %v246
  %v278 = vsub.f32 %v92, %v247
  %v279 = vsub.f32 %v93, %v248
  %v280 = vsub.f32 %v94, %v249
  %v281 = vsub.f32 %v95, %v250
  %v282 = vsub.f32 %v96, %v251
  %v283 = vsub.f32 %v97, %v252
  %v284 = vsub.f32 %v98, %v253
  %v285 = vsub.f32 %v99, %v254
  %v286 = vsub.f32 %v100, %v255
  %v287 = vsub.f32 %v101, %v256
  %v288 = vsub.f32 %v102, %v257
  %v289 = vsub.f32 %v103, %v258
  %v290 = vsub.f32 %v104, %v259
  %v291 = vsub.f32 %v105, %v260
  %v292 = vsub.f32 %v106, %v261
  %v293 = vsub.f32 %v107, %v262
  %v294 = vsub.f32 %v108, %v263
  %v295 = vsub.f32 %v109, %v264
  %v296 = vsub.f32 %v110, %v265
  %v297 = vsub.f32 %v111, %v266
  %v298 = vsub.f32 %v112, %v267
  %v299 = vsub.f32 %v113, %v268
  %v300 = vsub.f32 %v114, %v269
  %v301 = vsub.f32 %v115, %v270
  %v302 = vsub.f32 %v116, %v271
  %v303 = vsub.f32 %v117, %v272
  %v304 = vsub.f32 %v118, %v273
  %v305 = vsub.f32 %v119, %v274
  %v306 = vmul.f32 %v275, 0.09090909
  %v307 = vmul.f32 %v276, 0.09090909
  %v308 = vmul.f32 %v277, 0.09090909
  %v309 = vmul.f32 %v278, 0.09090909
  %v310 = vmul.f32 %v279, 0.09090909
  %v311 = vmul.f32 %v280, 0.09090909
  %v312 = vmul.f32 %v281, 0.09090909
  %v313 = vmul.f32 %v282, 0.09090909
  %v314 = vmul.f32 %v283, 0.09090909
  %v315 = vmul.f32 %v284, 0.09090909
  %v316 = vmul.f32 %v285, 0.09090909
  %v317 = vmul.f32 %v286, 0.09090909
  %v318 = vmul.f32 %v287, 0.09090909
  %v319 = vmul.f32 %v288, 0.09090909
  %v320 = vmul.f32 %v289, 0.09090909
  %v321 = vmul.f32 %v290, 0.09090909
  %v322 = vmul.f32 %v291, 0.09090909
  %v323 = vmul.f32 %v292, 0.09090909
  %v324 = vmul.f32 %v293, 0.09090909
  %v325 = vmul.f32 %v294, 0.09090909
  %v326 = vmul.f32 %v295, 0.09090909
  %v327 = vmul.f32 %v296, 0.09090909
  %v328 = vmul.f32 %v297, 0.09090909
  %v329 = vmul.f32 %v298, 0.09090909
  %v330 = vmul.f32 %v299, 0.09090909
  %v331 = vmul.f32 %v300, 0.09090909
  %v332 = vmul.f32 %v301, 0.09090909
  %v333 = vmul.f32 %v302, 0.09090909
  %v334 = vmul.f32 %v303, 0.09090909
  %v335 = vmul.f32 %v304, 0.09090909
  %v336 = vmul.f32 %v305, 0.09090909
  %v337 = vadd.f32 %v306, 0.0001
  %v338 = vadd.f32 %v307, 0.0001
  %v339 = vadd.f32 %v308, 0.0001
  %v340 = vadd.f32 %v309, 0.0001
  %v341 = vadd.f32 %v310, 0.0001
  %v342 = vadd.f32 %v311, 0.0001
  %v343 = vadd.f32 %v312, 0.0001
  %v344 = vadd.f32 %v313, 0.0001
  %v345 = vadd.f32 %v314, 0.0001
  %v346 = vadd.f32 %v315, 0.0001
  %v347 = vadd.f32 %v316, 0.0001
  %v348 = vadd.f32 %v317, 0.0001
  %v349 = vadd.f32 %v318, 0.0001
  %v350 = vadd.f32 %v319, 0.0001
  %v351 = vadd.f32 %v320, 0.0001
  %v352 = vadd.f32 %v321, 0.0001
  %v353 = vadd.f32 %v322, 0.0001
  %v354 = vadd.f32 %v323, 0.0001
  %v355 = vadd.f32 %v324, 0.0001
  %v356 = vadd.f32 %v325, 0.0001
  %v357 = vadd.f32 %v326, 0.0001
  %v358 = vadd.f32 %v327, 0.0001
  %v359 = vadd.f32 %v328, 0.0001
  %v360 = vadd.f32 %v329, 0.0001
  %v361 = vadd.f32 %v330, 0.0001
  %v362 = vadd.f32 %v331, 0.0001
  %v363 = vadd.f32 %v332, 0.0001
  %v364 = vadd.f32 %v333, 0.0001
  %v365 = vadd.f32 %v334, 0.0001
  %v366 = vadd.f32 %v335, 0.0001
  %v367 = vadd.f32 %v336, 0.0001
  %v368 = vcvt.f32.s32.to.zero.pseudo %v337
  %v369 = vcvt.f32.s32.to.zero.pseudo %v338
  %v370 = vcvt.f32.s32.to.zero.pseudo %v339
  %v371 = vcvt.f32.s32.to.zero.pseudo %v340
  %v372 = vcvt.f32.s32.to.zero.pseudo %v341
  %v373 = vcvt.f32.s32.to.zero.pseudo %v342
  %v374 = vcvt.f32.s32.to.zero.pseudo %v343
  %v375 = vcvt.f32.s32.to.zero.pseudo %v344
  %v376 = vcvt.f32.s32.to.zero.pseudo %v345
  %v377 = vcvt.f32.s32.to.zero.pseudo %v346
  %v378 = vcvt.f32.s32.to.zero.pseudo %v347
  %v379 = vcvt.f32.s32.to.zero.pseudo %v348
  %v380 = vcvt.f32.s32.to.zero.pseudo %v349
  %v381 = vcvt.f32.s32.to.zero.pseudo %v350
  %v382 = vcvt.f32.s32.to.zero.pseudo %v351
  %v383 = vcvt.f32.s32.to.zero.pseudo %v352
  %v384 = vcvt.f32.s32.to.zero.pseudo %v353
  %v385 = vcvt.f32.s32.to.zero.pseudo %v354
  %v386 = vcvt.f32.s32.to.zero.pseudo %v355
  %v387 = vcvt.f32.s32.to.zero.pseudo %v356
  %v388 = vcvt.f32.s32.to.zero.pseudo %v357
  %v389 = vcvt.f32.s32.to.zero.pseudo %v358
  %v390 = vcvt.f32.s32.to.zero.pseudo %v359
  %v391 = vcvt.f32.s32.to.zero.pseudo %v360
  %v392 = vcvt.f32.s32.to.zero.pseudo %v361
  %v393 = vcvt.f32.s32.to.zero.pseudo %v362
  %v394 = vcvt.f32.s32.to.zero.pseudo %v363
  %v395 = vcvt.f32.s32.to.zero.pseudo %v364
  %v396 = vcvt.f32.s32.to.zero.pseudo %v365
  %v397 = vcvt.f32.s32.to.zero.pseudo %v366
  %v398 = vcvt.f32.s32.to.zero.pseudo %v367
  %v399 = vcvt.s32.f32 %v368
  %v400 = vcvt.s32.f32 %v369
  %v401 = vcvt.s32.f32 %v370
  %v402 = vcvt.s32.f32 %v371
  %v403 = vcvt.s32.f32 %v372
  %v404 = vcvt.s32.f32 %v373
  %v405 = vcvt.s32.f32 %v374
  %v406 = vcvt.s32.f32 %v375
  %v407 = vcvt.s32.f32 %v376
  %v408 = vcvt.s32.f32 %v377
  %v409 = vcvt.s32.f32 %v378
  %v410 = vcvt.s32.f32 %v379
  %v411 = vcvt.s32.f32 %v380
  %v412 = vcvt.s32.f32 %v381
  %v413 = vcvt.s32.f32 %v382
  %v414 = vcvt.s32.f32 %v383
  %v415 = vcvt.s32.f32 %v384
  %v416 = vcvt.s32.f32 %v385
  %v417 = vcvt.s32.f32 %v386
  %v418 = vcvt.s32.f32 %v387
  %v419 = vcvt.s32.f32 %v388
  %v420 = vcvt.s32.f32 %v389
  %v421 = vcvt.s32.f32 %v390
  %v422 = vcvt.s32.f32 %v391
  %v423 = vcvt.s32.f32 %v392
  %v424 = vcvt.s32.f32 %v393
  %v425 = vcvt.s32.f32 %v394
  %v426 = vcvt.s32.f32 %v395
  %v427 = vcvt.s32.f32 %v396
  %v428 = vcvt.s32.f32 %v397
  %v429 = vcvt.s32.f32 %v398
  %v430 = vmul.f32 %v399, 11.0
  %v431 = vmul.f32 %v400, 11.0
  %v432 = vmul.f32 %v401, 11.0
  %v433 = vmul.f32 %v402, 11.0
  %v434 = vmul.f32 %v403, 11.0
  %v435 = vmul.f32 %v404, 11.0
  %v436 = vmul.f32 %v405, 11.0
  %v437 = vmul.f32 %v406, 11.0
  %v438 = vmul.f32 %v407, 11.0
  %v439 = vmul.f32 %v408, 11.0
  %v440 = vmul.f32 %v409, 11.0
  %v441 = vmul.f32 %v410, 11.0
  %v442 = vmul.f32 %v411, 11.0
  %v443 = vmul.f32 %v412, 11.0
  %v444 = vmul.f32 %v413, 11.0
  %v445 = vmul.f32 %v414, 11.0
  %v446 = vmul.f32 %v415, 11.0
  %v447 = vmul.f32 %v416, 11.0
  %v448 = vmul.f32 %v417, 11.0
  %v449 = vmul.f32 %v418, 11.0
  %v450 = vmul.f32 %v419, 11.0
  %v451 = vmul.f32 %v420, 11.0
  %v452 = vmul.f32 %v421, 11.0
  %v453 = vmul.f32 %v422, 11.0
  %v454 = vmul.f32 %v423, 11.0
  %v455 = vmul.f32 %v424, 11.0
  %v456 = vmul.f32 %v425, 11.0
  %v457 = vmul.f32 %v426, 11.0
  %v458 = vmul.f32 %v427, 11.0
  %v459 = vmul.f32 %v428, 11.0
  %v460 = vmul.f32 %v429, 11.0
  %v461 = vsub.f32 %v275, %v430
  %v462 = vsub.f32 %v276, %v431
  %v463 = vsub.f32 %v277, %v432
  %v464 = vsub.f32 %v278, %v433
  %v465 = vsub.f32 %v279, %v434
  %v466 = vsub.f32 %v280, %v435
  %v467 = vsub.f32 %v281, %v436
  %v468 = vsub.f32 %v282, %v437
  %v469 = vsub.f32 %v283, %v438
  %v470 = vsub.f32 %v284, %v439
  %v471 = vsub.f32 %v285, %v440
  %v472 = vsub.f32 %v286, %v441
  %v473 = vsub.f32 %v287, %v442
  %v474 = vsub.f32 %v288, %v443
  %v475 = vsub.f32 %v289, %v444
  %v476 = vsub.f32 %v290, %v445
  %v477 = vsub.f32 %v291, %v446
  %v478 = vsub.f32 %v292, %v447
  %v479 = vsub.f32 %v293, %v448
  %v480 = vsub.f32 %v294, %v449
  %v481 = vsub.f32 %v295, %v450
  %v482 = vsub.f32 %v296, %v451
  %v483 = vsub.f32 %v297, %v452
  %v484 = vsub.f32 %v298, %v453
  %v485 = vsub.f32 %v299, %v454
  %v486 = vsub.f32 %v300, %v455
  %v487 = vsub.f32 %v301, %v456
  %v488 = vsub.f32 %v302, %v457
  %v489 = vsub.f32 %v303, %v458
  %v490 = vsub.f32 %v304, %v459
  %v491 = vsub.f32 %v305, %v460
  %vm492 = vcmp.lt.f32.partialorder %v89, 242.0
  %vm493 = vcmp.lt.f32.partialorder %v90, 242.0
  %vm494 = vcmp.lt.f32.partialorder %v91, 242.0
  %vm495 = vcmp.lt.f32.partialorder %v92, 242.0
  %vm496 = vcmp.lt.f32.partialorder %v93, 242.0
  %vm497 = vcmp.lt.f32.partialorder %v94, 242.0
  %vm498 = vcmp.lt.f32.partialorder %v95, 242.0
  %vm499 = vcmp.lt.f32.partialorder %v96, 242.0
  %vm500 = vcmp.lt.f32.partialorder %v97, 242.0
  %vm501 = vcmp.lt.f32.partialorder %v98, 242.0
  %vm502 = vcmp.lt.f32.partialorder %v99, 242.0
  %vm503 = vcmp.lt.f32.partialorder %v100, 242.0
  %vm504 = vcmp.lt.f32.partialorder %v101, 242.0
  %vm505 = vcmp.lt.f32.partialorder %v102, 242.0
  %vm506 = vcmp.lt.f32.partialorder %v103, 242.0
  %vm507 = vcmp.lt.f32.partialorder %v104, 242.0
  %vm508 = vcmp.lt.f32.partialorder %v105, 242.0
  %vm509 = vcmp.lt.f32.partialorder %v106, 242.0
  %vm510 = vcmp.lt.f32.partialorder %v107, 242.0
  %vm511 = vcmp.lt.f32.partialorder %v108, 242.0
  %vm512 = vcmp.lt.f32.partialorder %v109, 242.0
  %vm513 = vcmp.lt.f32.partialorder %v110, 242.0
  %vm514 = vcmp.lt.f32.partialorder %v111, 242.0
  %vm515 = vcmp.lt.f32.partialorder %v112, 242.0
  %vm516 = vcmp.lt.f32.partialorder %v113, 242.0
  %vm517 = vcmp.lt.f32.partialorder %v114, 242.0
  %vm518 = vcmp.lt.f32.partialorder %v115, 242.0
  %vm519 = vcmp.lt.f32.partialorder %v116, 242.0
  %vm520 = vcmp.lt.f32.partialorder %v117, 242.0
  %vm521 = vcmp.lt.f32.partialorder %v118, 242.0
  %vm522 = vcmp.lt.f32.partialorder %v119, 242.0
  %vm523 = vcmp.lt.f32.partialorder %v399, 9.5
  %vm524 = vcmp.lt.f32.partialorder %v400, 9.5
  %vm525 = vcmp.lt.f32.partialorder %v401, 9.5
  %vm526 = vcmp.lt.f32.partialorder %v402, 9.5
  %vm527 = vcmp.lt.f32.partialorder %v403, 9.5
  %vm528 = vcmp.lt.f32.partialorder %v404, 9.5
  %vm529 = vcmp.lt.f32.partialorder %v405, 9.5
  %vm530 = vcmp.lt.f32.partialorder %v406, 9.5
  %vm531 = vcmp.lt.f32.partialorder %v407, 9.5
  %vm532 = vcmp.lt.f32.partialorder %v408, 9.5
  %vm533 = vcmp.lt.f32.partialorder %v409, 9.5
  %vm534 = vcmp.lt.f32.partialorder %v410, 9.5
  %vm535 = vcmp.lt.f32.partialorder %v411, 9.5
  %vm536 = vcmp.lt.f32.partialorder %v412, 9.5
  %vm537 = vcmp.lt.f32.partialorder %v413, 9.5
  %vm538 = vcmp.lt.f32.partialorder %v414, 9.5
  %vm539 = vcmp.lt.f32.partialorder %v415, 9.5
  %vm540 = vcmp.lt.f32.partialorder %v416, 9.5
  %vm541 = vcmp.lt.f32.partialorder %v417, 9.5
  %vm542 = vcmp.lt.f32.partialorder %v418, 9.5
  %vm543 = vcmp.lt.f32.partialorder %v419, 9.5
  %vm544 = vcmp.lt.f32.partialorder %v420, 9.5
  %vm545 = vcmp.lt.f32.partialorder %v421, 9.5
  %vm546 = vcmp.lt.f32.partialorder %v422, 9.5
  %vm547 = vcmp.lt.f32.partialorder %v423, 9.5
  %vm548 = vcmp.lt.f32.partialorder %v424, 9.5
  %vm549 = vcmp.lt.f32.partialorder %v425, 9.5
  %vm550 = vcmp.lt.f32.partialorder %v426, 9.5
  %vm551 = vcmp.lt.f32.partialorder %v427, 9.5
  %vm552 = vcmp.lt.f32.partialorder %v428, 9.5
  %vm553 = vcmp.lt.f32.partialorder %v429, 9.5
  %vm554 = vcmp.lt.f32.partialorder %v461, 9.5
  %vm555 = vcmp.lt.f32.partialorder %v462, 9.5
  %vm556 = vcmp.lt.f32.partialorder %v463, 9.5
  %vm557 = vcmp.lt.f32.partialorder %v464, 9.5
  %vm558 = vcmp.lt.f32.partialorder %v465, 9.5
  %vm559 = vcmp.lt.f32.partialorder %v466, 9.5
  %vm560 = vcmp.lt.f32.partialorder %v467, 9.5
  %vm561 = vcmp.lt.f32.partialorder %v468, 9.5
  %vm562 = vcmp.lt.f32.partialorder %v469, 9.5
  %vm563 = vcmp.lt.f32.partialorder %v470, 9.5
  %vm564 = vcmp.lt.f32.partialorder %v471, 9.5
  %vm565 = vcmp.lt.f32.partialorder %v472, 9.5
  %vm566 = vcmp.lt.f32.partialorder %v473, 9.5
  %vm567 = vcmp.lt.f32.partialorder %v474, 9.5
  %vm568 = vcmp.lt.f32.partialorder %v475, 9.5
  %vm569 = vcmp.lt.f32.partialorder %v476, 9.5
  %vm570 = vcmp.lt.f32.partialorder %v477, 9.5
  %vm571 = vcmp.lt.f32.partialorder %v478, 9.5
  %vm572 = vcmp.lt.f32.partialorder %v479, 9.5
  %vm573 = vcmp.lt.f32.partialorder %v480, 9.5
  %vm574 = vcmp.lt.f32.partialorder %v481, 9.5
  %vm575 = vcmp.lt.f32.partialorder %v482, 9.5
  %vm576 = vcmp.lt.f32.partialorder %v483, 9.5
  %vm577 = vcmp.lt.f32.partialorder %v484, 9.5
  %vm578 = vcmp.lt.f32.partialorder %v485, 9.5
  %vm579 = vcmp.lt.f32.partialorder %v486, 9.5
  %vm580 = vcmp.lt.f32.partialorder %v487, 9.5
  %vm581 = vcmp.lt.f32.partialorder %v488, 9.5
  %vm582 = vcmp.lt.f32.partialorder %v489, 9.5
  %vm583 = vcmp.lt.f32.partialorder %v490, 9.5
  %vm584 = vcmp.lt.f32.partialorder %v491, 9.5
  %vm585 = vmand %vm523, %vm554
  %vm586 = vmand %vm524, %vm555
  %vm587 = vmand %vm525, %vm556
  %vm588 = vmand %vm526, %vm557
  %vm589 = vmand %vm527, %vm558
  %vm590 = vmand %vm528, %vm559
  %vm591 = vmand %vm529, %vm560
  %vm592 = vmand %vm530, %vm561
  %vm593 = vmand %vm531, %vm562
  %vm594 = vmand %vm532, %vm563
  %vm595 = vmand %vm533, %vm564
  %vm596 = vmand %vm534, %vm565
  %vm597 = vmand %vm535, %vm566
  %vm598 = vmand %vm536, %vm567
  %vm599 = vmand %vm537, %vm568
  %vm600 = vmand %vm538, %vm569
  %vm601 = vmand %vm539, %vm570
  %vm602 = vmand %vm540, %vm571
  %vm603 = vmand %vm541, %vm572
  %vm604 = vmand %vm542, %vm573
  %vm605 = vmand %vm543, %vm574
  %vm606 = vmand %vm544, %vm575
  %vm607 = vmand %vm545, %vm576
  %vm608 = vmand %vm546, %vm577
  %vm609 = vmand %vm547, %vm578
  %vm610 = vmand %vm548, %vm579
  %vm611 = vmand %vm549, %vm580
  %vm612 = vmand %vm550, %vm581
  %vm613 = vmand %vm551, %vm582
  %vm614 = vmand %vm552, %vm583
  %vm615 = vmand %vm553, %vm584
  %vm616 = vmand %vm585, %vm492
  %vm617 = vmand %vm586, %vm493
  %vm618 = vmand %vm587, %vm494
  %vm619 = vmand %vm588, %vm495
  %vm620 = vmand %vm589, %vm496
  %vm621 = vmand %vm590, %vm497
  %vm622 = vmand %vm591, %vm498
  %vm623 = vmand %vm592, %vm499
  %vm624 = vmand %vm593, %vm500
  %vm625 = vmand %vm594, %vm501
  %vm626 = vmand %vm595, %vm502
  %vm627 = vmand %vm596, %vm503
  %vm628 = vmand %vm597, %vm504
  %vm629 = vmand %vm598, %vm505
  %vm630 = vmand %vm599, %vm506
  %vm631 = vmand %vm600, %vm507
  %vm632 = vmand %vm601, %vm508
  %vm633 = vmand %vm602, %vm509
  %vm634 = vmand %vm603, %vm510
  %vm635 = vmand %vm604, %vm511
  %vm636 = vmand %vm605, %vm512
  %vm637 = vmand %vm606, %vm513
  %vm638 = vmand %vm607, %vm514
  %vm639 = vmand %vm608, %vm515
  %vm640 = vmand %vm609, %vm516
  %vm641 = vmand %vm610, %vm517
  %vm642 = vmand %vm611, %vm518
  %vm643 = vmand %vm612, %vm519
  %vm644 = vmand %vm613, %vm520
  %vm645 = vmand %vm614, %vm521
  %vm646 = vmand %vm615, %vm522
  %v647 = vsel %vm616, 1, 0
  %v648 = vsel %vm617, 1, 0
  %v649 = vsel %vm618, 1, 0
  %v650 = vsel %vm619, 1, 0
  %v651 = vsel %vm620, 1, 0
  %v652 = vsel %vm621, 1, 0
  %v653 = vsel %vm622, 1, 0
  %v654 = vsel %vm623, 1, 0
  %v655 = vsel %vm624, 1, 0
  %v656 = vsel %vm625, 1, 0
  %v657 = vsel %vm626, 1, 0
  %v658 = vsel %vm627, 1, 0
  %v659 = vsel %vm628, 1, 0
  %v660 = vsel %vm629, 1, 0
  %v661 = vsel %vm630, 1, 0
  %v662 = vsel %vm631, 1, 0
  %v663 = vsel %vm632, 1, 0
  %v664 = vsel %vm633, 1, 0
  %v665 = vsel %vm634, 1, 0
  %v666 = vsel %vm635, 1, 0
  %v667 = vsel %vm636, 1, 0
  %v668 = vsel %vm637, 1, 0
  %v669 = vsel %vm638, 1, 0
  %v670 = vsel %vm639, 1, 0
  %v671 = vsel %vm640, 1, 0
  %v672 = vsel %vm641, 1, 0
  %v673 = vsel %vm642, 1, 0
  %v674 = vsel %vm643, 1, 0
  %v675 = vsel %vm644, 1, 0
  %v676 = vsel %vm645, 1, 0
  %v677 = vsel %vm646, 1, 0
  %v678 = vcvt.s32.f32 %v647
  %v679 = vcvt.s32.f32 %v648
  %v680 = vcvt.s32.f32 %v649
  %v681 = vcvt.s32.f32 %v650
  %v682 = vcvt.s32.f32 %v651
  %v683 = vcvt.s32.f32 %v652
  %v684 = vcvt.s32.f32 %v653
  %v685 = vcvt.s32.f32 %v654
  %v686 = vcvt.s32.f32 %v655
  %v687 = vcvt.s32.f32 %v656
  %v688 = vcvt.s32.f32 %v657
  %v689 = vcvt.s32.f32 %v658
  %v690 = vcvt.s32.f32 %v659
  %v691 = vcvt.s32.f32 %v660
  %v692 = vcvt.s32.f32 %v661
  %v693 = vcvt.s32.f32 %v662
  %v694 = vcvt.s32.f32 %v663
  %v695 = vcvt.s32.f32 %v664
  %v696 = vcvt.s32.f32 %v665
  %v697 = vcvt.s32.f32 %v666
  %v698 = vcvt.s32.f32 %v667
  %v699 = vcvt.s32.f32 %v668
  %v700 = vcvt.s32.f32 %v669
  %v701 = vcvt.s32.f32 %v670
  %v702 = vcvt.s32.f32 %v671
  %v703 = vcvt.s32.f32 %v672
  %v704 = vcvt.s32.f32 %v673
  %v705 = vcvt.s32.f32 %v674
  %v706 = vcvt.s32.f32 %v675
  %v707 = vcvt.s32.f32 %v676
  %v708 = vcvt.s32.f32 %v677
  %vm709 = vcmp.gt.f32.partialorder %v399, 0.5
  %vm710 = vcmp.gt.f32.partialorder %v400, 0.5
  %vm711 = vcmp.gt.f32.partialorder %v401, 0.5
  %vm712 = vcmp.gt.f32.partialorder %v402, 0.5
  %vm713 = vcmp.gt.f32.partialorder %v403, 0.5
  %vm714 = vcmp.gt.f32.partialorder %v404, 0.5
  %vm715 = vcmp.gt.f32.partialorder %v405, 0.5
  %vm716 = vcmp.gt.f32.partialorder %v406, 0.5
  %vm717 = vcmp.gt.f32.partialorder %v407, 0.5
  %vm718 = vcmp.gt.f32.partialorder %v408, 0.5
  %vm719 = vcmp.gt.f32.partialorder %v409, 0.5
  %vm720 = vcmp.gt.f32.partialorder %v410, 0.5
  %vm721 = vcmp.gt.f32.partialorder %v411, 0.5
  %vm722 = vcmp.gt.f32.partialorder %v412, 0.5
  %vm723 = vcmp.gt.f32.partialorder %v413, 0.5
  %vm724 = vcmp.gt.f32.partialorder %v414, 0.5
  %vm725 = vcmp.gt.f32.partialorder %v415, 0.5
  %vm726 = vcmp.gt.f32.partialorder %v416, 0.5
  %vm727 = vcmp.gt.f32.partialorder %v417, 0.5
  %vm728 = vcmp.gt.f32.partialorder %v418, 0.5
  %vm729 = vcmp.gt.f32.partialorder %v419, 0.5
  %vm730 = vcmp.gt.f32.partialorder %v420, 0.5
  %vm731 = vcmp.gt.f32.partialorder %v421, 0.5
  %vm732 = vcmp.gt.f32.partialorder %v422, 0.5
  %vm733 = vcmp.gt.f32.partialorder %v423, 0.5
  %vm734 = vcmp.gt.f32.partialorder %v424, 0.5
  %vm735 = vcmp.gt.f32.partialorder %v425, 0.5
  %vm736 = vcmp.gt.f32.partialorder %v426, 0.5
  %vm737 = vcmp.gt.f32.partialorder %v427, 0.5
  %vm738 = vcmp.gt.f32.partialorder %v428, 0.5
  %vm739 = vcmp.gt.f32.partialorder %v429, 0.5
  %vm740 = vmand %vm709, %vm523
  %vm741 = vmand %vm710, %vm524
  %vm742 = vmand %vm711, %vm525
  %vm743 = vmand %vm712, %vm526
  %vm744 = vmand %vm713, %vm527
  %vm745 = vmand %vm714, %vm528
  %vm746 = vmand %vm715, %vm529
  %vm747 = vmand %vm716, %vm530
  %vm748 = vmand %vm717, %vm531
  %vm749 = vmand %vm718, %vm532
  %vm750 = vmand %vm719, %vm533
  %vm751 = vmand %vm720, %vm534
  %vm752 = vmand %vm721, %vm535
  %vm753 = vmand %vm722, %vm536
  %vm754 = vmand %vm723, %vm537
  %vm755 = vmand %vm724, %vm538
  %vm756 = vmand %vm725, %vm539
  %vm757 = vmand %vm726, %vm540
  %vm758 = vmand %vm727, %vm541
  %vm759 = vmand %vm728, %vm542
  %vm760 = vmand %vm729, %vm543
  %vm761 = vmand %vm730, %vm544
  %vm762 = vmand %vm731, %vm545
  %vm763 = vmand %vm732, %vm546
  %vm764 = vmand %vm733, %vm547
  %vm765 = vmand %vm734, %vm548
  %vm766 = vmand %vm735, %vm549
  %vm767 = vmand %vm736, %vm550
  %vm768 = vmand %vm737, %vm551
  %vm769 = vmand %vm738, %vm552
  %vm770 = vmand %vm739, %vm553
  %vm771 = vcmp.gt.f32.partialorder %v461, 0.5
  %vm772 = vcmp.gt.f32.partialorder %v462, 0.5
  %vm773 = vcmp.gt.f32.partialorder %v463, 0.5
  %vm774 = vcmp.gt.f32.partialorder %v464, 0.5
  %vm775 = vcmp.gt.f32.partialorder %v465, 0.5
  %vm776 = vcmp.gt.f32.partialorder %v466, 0.5
  %vm777 = vcmp.gt.f32.partialorder %v467, 0.5
  %vm778 = vcmp.gt.f32.partialorder %v468, 0.5
  %vm779 = vcmp.gt.f32.partialorder %v469, 0.5
  %vm780 = vcmp.gt.f32.partialorder %v470, 0.5
  %vm781 = vcmp.gt.f32.partialorder %v471, 0.5
  %vm782 = vcmp.gt.f32.partialorder %v472, 0.5
  %vm783 = vcmp.gt.f32.partialorder %v473, 0.5
  %vm784 = vcmp.gt.f32.partialorder %v474, 0.5
  %vm785 = vcmp.gt.f32.partialorder %v475, 0.5
  %vm786 = vcmp.gt.f32.partialorder %v476, 0.5
  %vm787 = vcmp.gt.f32.partialorder %v477, 0.5
  %vm788 = vcmp.gt.f32.partialorder %v478, 0.5
  %vm789 = vcmp.gt.f32.partialorder %v479, 0.5
  %vm790 = vcmp.gt.f32.partialorder %v480, 0.5
  %vm791 = vcmp.gt.f32.partialorder %v481, 0.5
  %vm792 = vcmp.gt.f32.partialorder %v482, 0.5
  %vm793 = vcmp.gt.f32.partialorder %v483, 0.5
  %vm794 = vcmp.gt.f32.partialorder %v484, 0.5
  %vm795 = vcmp.gt.f32.partialorder %v485, 0.5
  %vm796 = vcmp.gt.f32.partialorder %v486, 0.5
  %vm797 = vcmp.gt.f32.partialorder %v487, 0.5
  %vm798 = vcmp.gt.f32.partialorder %v488, 0.5
  %vm799 = vcmp.gt.f32.partialorder %v489, 0.5
  %vm800 = vcmp.gt.f32.partialorder %v490, 0.5
  %vm801 = vcmp.gt.f32.partialorder %v491, 0.5
  %vm802 = vmand %vm740, %vm771
  %vm803 = vmand %vm741, %vm772
  %vm804 = vmand %vm742, %vm773
  %vm805 = vmand %vm743, %vm774
  %vm806 = vmand %vm744, %vm775
  %vm807 = vmand %vm745, %vm776
  %vm808 = vmand %vm746, %vm777
  %vm809 = vmand %vm747, %vm778
  %vm810 = vmand %vm748, %vm779
  %vm811 = vmand %vm749, %vm780
  %vm812 = vmand %vm750, %vm781
  %vm813 = vmand %vm751, %vm782
  %vm814 = vmand %vm752, %vm783
  %vm815 = vmand %vm753, %vm784
  %vm816 = vmand %vm754, %vm785
  %vm817 = vmand %vm755, %vm786
  %vm818 = vmand %vm756, %vm787
  %vm819 = vmand %vm757, %vm788
  %vm820 = vmand %vm758, %vm789
  %vm821 = vmand %vm759, %vm790
  %vm822 = vmand %vm760, %vm791
  %vm823 = vmand %vm761, %vm792
  %vm824 = vmand %vm762, %vm793
  %vm825 = vmand %vm763, %vm794
  %vm826 = vmand %vm764, %vm795
  %vm827 = vmand %vm765, %vm796
  %vm828 = vmand %vm766, %vm797
  %vm829 = vmand %vm767, %vm798
  %vm830 = vmand %vm768, %vm799
  %vm831 = vmand %vm769, %vm800
  %vm832 = vmand %vm770, %vm801
  %vm833 = vmand %vm802, %vm554
  %vm834 = vmand %vm803, %vm555
  %vm835 = vmand %vm804, %vm556
  %vm836 = vmand %vm805, %vm557
  %vm837 = vmand %vm806, %vm558
  %vm838 = vmand %vm807, %vm559
  %vm839 = vmand %vm808, %vm560
  %vm840 = vmand %vm809, %vm561
  %vm841 = vmand %vm810, %vm562
  %vm842 = vmand %vm811, %vm563
  %vm843 = vmand %vm812, %vm564
  %vm844 = vmand %vm813, %vm565
  %vm845 = vmand %vm814, %vm566
  %vm846 = vmand %vm815, %vm567
  %vm847 = vmand %vm816, %vm568
  %vm848 = vmand %vm817, %vm569
  %vm849 = vmand %vm818, %vm570
  %vm850 = vmand %vm819, %vm571
  %vm851 = vmand %vm820, %vm572
  %vm852 = vmand %vm821, %vm573
  %vm853 = vmand %vm822, %vm574
  %vm854 = vmand %vm823, %vm575
  %vm855 = vmand %vm824, %vm576
  %vm856 = vmand %vm825, %vm577
  %vm857 = vmand %vm826, %vm578
  %vm858 = vmand %vm827, %vm579
  %vm859 = vmand %vm828, %vm580
  %vm860 = vmand %vm829, %vm581
  %vm861 = vmand %vm830, %vm582
  %vm862 = vmand %vm831, %vm583
  %vm863 = vmand %vm832, %vm584
  %vm864 = vmand %vm833, %vm492
  %vm865 = vmand %vm834, %vm493
  %vm866 = vmand %vm835, %vm494
  %vm867 = vmand %vm836, %vm495
  %vm868 = vmand %vm837, %vm496
  %vm869 = vmand %vm838, %vm497
  %vm870 = vmand %vm839, %vm498
  %vm871 = vmand %vm840, %vm499
  %vm872 = vmand %vm841, %vm500
  %vm873 = vmand %vm842, %vm501
  %vm874 = vmand %vm843, %vm502
  %vm875 = vmand %vm844, %vm503
  %vm876 = vmand %vm845, %vm504
  %vm877 = vmand %vm846, %vm505
  %vm878 = vmand %vm847, %vm506
  %vm879 = vmand %vm848, %vm507
  %vm880 = vmand %vm849, %vm508
  %vm881 = vmand %vm850, %vm509
  %vm882 = vmand %vm851, %vm510
  %vm883 = vmand %vm852, %vm511
  %vm884 = vmand %vm853, %vm512
  %vm885 = vmand %vm854, %vm513
  %vm886 = vmand %vm855, %vm514
  %vm887 = vmand %vm856, %vm515
  %vm888 = vmand %vm857, %vm516
  %vm889 = vmand %vm858, %vm517
  %vm890 = vmand %vm859, %vm518
  %vm891 = vmand %vm860, %vm519
  %vm892 = vmand %vm861, %vm520
  %vm893 = vmand %vm862, %vm521
  %vm894 = vmand %vm863, %vm522
  %v895 = vsel %vm864, 1, 0
  %v896 = vsel %vm865, 1, 0
  %v897 = vsel %vm866, 1, 0
  %v898 = vsel %vm867, 1, 0
  %v899 = vsel %vm868, 1, 0
  %v900 = vsel %vm869, 1, 0
  %v901 = vsel %vm870, 1, 0
  %v902 = vsel %vm871, 1, 0
  %v903 = vsel %vm872, 1, 0
  %v904 = vsel %vm873, 1, 0
  %v905 = vsel %vm874, 1, 0
  %v906 = vsel %vm875, 1, 0
  %v907 = vsel %vm876, 1, 0
  %v908 = vsel %vm877, 1, 0
  %v909 = vsel %vm878, 1, 0
  %v910 = vsel %vm879, 1, 0
  %v911 = vsel %vm880, 1, 0
  %v912 = vsel %vm881, 1, 0
  %v913 = vsel %vm882, 1, 0
  %v914 = vsel %vm883, 1, 0
  %v915 = vsel %vm884, 1, 0
  %v916 = vsel %vm885, 1, 0
  %v917 = vsel %vm886, 1, 0
  %v918 = vsel %vm887, 1, 0
  %v919 = vsel %vm888, 1, 0
  %v920 = vsel %vm889, 1, 0
  %v921 = vsel %vm890, 1, 0
  %v922 = vsel %vm891, 1, 0
  %v923 = vsel %vm892, 1, 0
  %v924 = vsel %vm893, 1, 0
  %v925 = vsel %vm894, 1, 0
  %v926 = vcvt.s32.f32 %v895
  %v927 = vcvt.s32.f32 %v896
  %v928 = vcvt.s32.f32 %v897
  %v929 = vcvt.s32.f32 %v898
  %v930 = vcvt.s32.f32 %v899
  %v931 = vcvt.s32.f32 %v900
  %v932 = vcvt.s32.f32 %v901
  %v933 = vcvt.s32.f32 %v902
  %v934 = vcvt.s32.f32 %v903
  %v935 = vcvt.s32.f32 %v904
  %v936 = vcvt.s32.f32 %v905
  %v937 = vcvt.s32.f32 %v906
  %v938 = vcvt.s32.f32 %v907
  %v939 = vcvt.s32.f32 %v908
  %v940 = vcvt.s32.f32 %v909
  %v941 = vcvt.s32.f32 %v910
  %v942 = vcvt.s32.f32 %v911
  %v943 = vcvt.s32.f32 %v912
  %v944 = vcvt.s32.f32 %v913
  %v945 = vcvt.s32.f32 %v914
  %v946 = vcvt.s32.f32 %v915
  %v947 = vcvt.s32.f32 %v916
  %v948 = vcvt.s32.f32 %v917
  %v949 = vcvt.s32.f32 %v918
  %v950 = vcvt.s32.f32 %v919
  %v951 = vcvt.s32.f32 %v920
  %v952 = vcvt.s32.f32 %v921
  %v953 = vcvt.s32.f32 %v922
  %v954 = vcvt.s32.f32 %v923
  %v955 = vcvt.s32.f32 %v924
  %v956 = vcvt.s32.f32 %v925
  %v957 = vrot.slane %v26, 1
  %v958 = vrot.slane %v27, 1
  %v959 = vrot.slane %v28, 1
  %v960 = vrot.slane %v29, 1
  %v961 = vrot.slane %v30, 1
  %v962 = vrot.slane %v31, 1
  %v963 = vrot.slane %v32, 1
  %v964 = vrot.slane %v33, 1
  %v965 = vrot.slane %v34, 1
  %v966 = vrot.slane %v35, 1
  %v967 = vrot.slane %v36, 1
  %v968 = vrot.slane %v37, 1
  %v969 = vrot.slane %v38, 1
  %v970 = vrot.slane %v39, 1
  %v971 = vrot.slane %v40, 1
  %v972 = vrot.slane %v41, 1
  %v973 = vrot.slane %v42, 1
  %v974 = vrot.slane %v43, 1
  %v975 = vrot.slane %v44, 1
  %v976 = vrot.slane %v45, 1
  %v977 = vrot.slane %v46, 1
  %v978 = vrot.slane %v47, 1
  %v979 = vrot.slane %v48, 1
  %v980 = vrot.slane %v49, 1
  %v981 = vrot.slane %v50, 1
  %v982 = vrot.slane %v51, 1
  %v983 = vrot.slane %v52, 1
  %v984 = vrot.slane %v53, 1
  %v985 = vrot.slane %v54, 1
  %v986 = vrot.slane %v55, 1
  %v987 = vrot.slane %v56, 1
  %vm988 = vcmp.lt.s32.totalorder %v58, 7
  %v989 = vsel %vm988, %v986, %v987
  %v990 = vsel %vm988, %v985, %v986
  %v991 = vsel %vm988, %v984, %v985
  %v992 = vsel %vm988, %v983, %v984
  %v993 = vsel %vm988, %v982, %v983
  %v994 = vsel %vm988, %v981, %v982
  %v995 = vsel %vm988, %v980, %v981
  %v996 = vsel %vm988, %v979, %v980
  %v997 = vsel %vm988, %v978, %v979
  %v998 = vsel %vm988, %v977, %v978
  %v999 = vsel %vm988, %v976, %v977
  %v1000 = vsel %vm988, %v975, %v976
  %v1001 = vsel %vm988, %v974, %v975
  %v1002 = vsel %vm988, %v973, %v974
  %v1003 = vsel %vm988, %v972, %v973
  %v1004 = vsel %vm988, %v971, %v972
  %v1005 = vsel %vm988, %v970, %v971
  %v1006 = vsel %vm988, %v969, %v970
  %v1007 = vsel %vm988, %v968, %v969
  %v1008 = vsel %vm988, %v967, %v968
  %v1009 = vsel %vm988, %v966, %v967
  %v1010 = vsel %vm988, %v965, %v966
  %v1011 = vsel %vm988, %v964, %v965
  %v1012 = vsel %vm988, %v963, %v964
  %v1013 = vsel %vm988, %v962, %v963
  %v1014 = vsel %vm988, %v961, %v962
  %v1015 = vsel %vm988, %v960, %v961
  %v1016 = vsel %vm988, %v959, %v960
  %v1017 = vsel %vm988, %v958, %v959
  %v1018 = vsel %vm988, %v957, %v958
  %v1019 = vsel %vm988, %v987, %v957
  %v1020 = vrot.slane %v26, 3
  %v1021 = vrot.slane %v27, 3
  %v1022 = vrot.slane %v28, 3
  %v1023 = vrot.slane %v29, 3
  %v1024 = vrot.slane %v30, 3
  %v1025 = vrot.slane %v31, 3
  %v1026 = vrot.slane %v32, 3
  %v1027 = vrot.slane %v33, 3
  %v1028 = vrot.slane %v34, 3
  %v1029 = vrot.slane %v35, 3
  %v1030 = vrot.slane %v36, 3
  %v1031 = vrot.slane %v37, 3
  %v1032 = vrot.slane %v38, 3
  %v1033 = vrot.slane %v39, 3
  %v1034 = vrot.slane %v40, 3
  %v1035 = vrot.slane %v41, 3
  %v1036 = vrot.slane %v42, 3
  %v1037 = vrot.slane %v43, 3
  %v1038 = vrot.slane %v44, 3
  %v1039 = vrot.slane %v45, 3
  %v1040 = vrot.slane %v46, 3
  %v1041 = vrot.slane %v47, 3
  %v1042 = vrot.slane %v48, 3
  %v1043 = vrot.slane %v49, 3
  %v1044 = vrot.slane %v50, 3
  %v1045 = vrot.slane %v51, 3
  %v1046 = vrot.slane %v52, 3
  %v1047 = vrot.slane %v53, 3
  %v1048 = vrot.slane %v54, 3
  %v1049 = vrot.slane %v55, 3
  %v1050 = vrot.slane %v56, 3
  %vm1051 = vcmp.lt.s32.totalorder %v58, 5
  %v1052 = vsel %vm1051, %v1049, %v1050
  %v1053 = vsel %vm1051, %v1048, %v1049
  %v1054 = vsel %vm1051, %v1047, %v1048
  %v1055 = vsel %vm1051, %v1046, %v1047
  %v1056 = vsel %vm1051, %v1045, %v1046
  %v1057 = vsel %vm1051, %v1044, %v1045
  %v1058 = vsel %vm1051, %v1043, %v1044
  %v1059 = vsel %vm1051, %v1042, %v1043
  %v1060 = vsel %vm1051, %v1041, %v1042
  %v1061 = vsel %vm1051, %v1040, %v1041
  %v1062 = vsel %vm1051, %v1039, %v1040
  %v1063 = vsel %vm1051, %v1038, %v1039
  %v1064 = vsel %vm1051, %v1037, %v1038
  %v1065 = vsel %vm1051, %v1036, %v1037
  %v1066 = vsel %vm1051, %v1035, %v1036
  %v1067 = vsel %vm1051, %v1034, %v1035
  %v1068 = vsel %vm1051, %v1033, %v1034
  %v1069 = vsel %vm1051, %v1032, %v1033
  %v1070 = vsel %vm1051, %v1031, %v1032
  %v1071 = vsel %vm1051, %v1030, %v1031
  %v1072 = vsel %vm1051, %v1029, %v1030
  %v1073 = vsel %vm1051, %v1028, %v1029
  %v1074 = vsel %vm1051, %v1027, %v1028
  %v1075 = vsel %vm1051, %v1026, %v1027
  %v1076 = vsel %vm1051, %v1025, %v1026
  %v1077 = vsel %vm1051, %v1024, %v1025
  %v1078 = vsel %vm1051, %v1023, %v1024
  %v1079 = vsel %vm1051, %v1022, %v1023
  %v1080 = vsel %vm1051, %v1021, %v1022
  %v1081 = vsel %vm1051, %v1020, %v1021
  %v1082 = vsel %vm1051, %v1050, %v1020
  %v1083 = vrot.slane %v26, 4
  %v1084 = vrot.slane %v27, 4
  %v1085 = vrot.slane %v28, 4
  %v1086 = vrot.slane %v29, 4
  %v1087 = vrot.slane %v30, 4
  %v1088 = vrot.slane %v31, 4
  %v1089 = vrot.slane %v32, 4
  %v1090 = vrot.slane %v33, 4
  %v1091 = vrot.slane %v34, 4
  %v1092 = vrot.slane %v35, 4
  %v1093 = vrot.slane %v36, 4
  %v1094 = vrot.slane %v37, 4
  %v1095 = vrot.slane %v38, 4
  %v1096 = vrot.slane %v39, 4
  %v1097 = vrot.slane %v40, 4
  %v1098 = vrot.slane %v41, 4
  %v1099 = vrot.slane %v42, 4
  %v1100 = vrot.slane %v43, 4
  %v1101 = vrot.slane %v44, 4
  %v1102 = vrot.slane %v45, 4
  %v1103 = vrot.slane %v46, 4
  %v1104 = vrot.slane %v47, 4
  %v1105 = vrot.slane %v48, 4
  %v1106 = vrot.slane %v49, 4
  %v1107 = vrot.slane %v50, 4
  %v1108 = vrot.slane %v51, 4
  %v1109 = vrot.slane %v52, 4
  %v1110 = vrot.slane %v53, 4
  %v1111 = vrot.slane %v54, 4
  %v1112 = vrot.slane %v55, 4
  %v1113 = vrot.slane %v56, 4
  %vm1114 = vcmp.lt.s32.totalorder %v58, 4
  %v1115 = vsel %vm1114, %v1112, %v1113
  %v1116 = vsel %vm1114, %v1111, %v1112
  %v1117 = vsel %vm1114, %v1110, %v1111
  %v1118 = vsel %vm1114, %v1109, %v1110
  %v1119 = vsel %vm1114, %v1108, %v1109
  %v1120 = vsel %vm1114, %v1107, %v1108
  %v1121 = vsel %vm1114, %v1106, %v1107
  %v1122 = vsel %vm1114, %v1105, %v1106
  %v1123 = vsel %vm1114, %v1104, %v1105
  %v1124 = vsel %vm1114, %v1103, %v1104
  %v1125 = vsel %vm1114, %v1102, %v1103
  %v1126 = vsel %vm1114, %v1101, %v1102
  %v1127 = vsel %vm1114, %v1100, %v1101
  %v1128 = vsel %vm1114, %v1099, %v1100
  %v1129 = vsel %vm1114, %v1098, %v1099
  %v1130 = vsel %vm1114, %v1097, %v1098
  %v1131 = vsel %vm1114, %v1096, %v1097
  %v1132 = vsel %vm1114, %v1095, %v1096
  %v1133 = vsel %vm1114, %v1094, %v1095
  %v1134 = vsel %vm1114, %v1093, %v1094
  %v1135 = vsel %vm1114, %v1092, %v1093
  %v1136 = vsel %vm1114, %v1091, %v1092
  %v1137 = vsel %vm1114, %v1090, %v1091
  %v1138 = vsel %vm1114, %v1089, %v1090
  %v1139 = vsel %vm1114, %v1088, %v1089
  %v1140 = vsel %vm1114, %v1087, %v1088
  %v1141 = vsel %vm1114, %v1086, %v1087
  %v1142 = vsel %vm1114, %v1085, %v1086
  %v1143 = vsel %vm1114, %v1084, %v1085
  %v1144 = vsel %vm1114, %v1083, %v1084
  %v1145 = vsel %vm1114, %v1113, %v1083
  %v1146 = vld [vmem:[%s1] sm:$0xff]
  %v1147 = vld [vmem:[%s1 + $0x8] sm:$0xff]
  %v1148 = vld [vmem:[%s1 + $0x10] sm:$0xff]
  %v1149 = vld [vmem:[%s1 + $0x18] sm:$0xff]
  %v1150 = vld [vmem:[%s1 + $0x20] sm:$0xff]
  %v1151 = vld [vmem:[%s1 + $0x28] sm:$0xff]
  %v1152 = vld [vmem:[%s1 + $0x30] sm:$0xff]
  %v1153 = vld [vmem:[%s1 + $0x38] sm:$0xff]
  %v1154 = vld [vmem:[%s1 + $0x40] sm:$0xff]
  %v1155 = vld [vmem:[%s1 + $0x48] sm:$0xff]
  %v1156 = vld [vmem:[%s1 + $0x50] sm:$0xff]
  %v1157 = vld [vmem:[%s1 + $0x58] sm:$0xff]
  %v1158 = vld [vmem:[%s1 + $0x60] sm:$0xff]
  %v1159 = vld [vmem:[%s1 + $0x68] sm:$0xff]
  %v1160 = vld [vmem:[%s1 + $0x70] sm:$0xff]
  %v1161 = vld [vmem:[%s1 + $0x78] sm:$0xff]
  %v1162 = vld [vmem:[%s1 + $0x80] sm:$0xff]
  %v1163 = vld [vmem:[%s1 + $0x88] sm:$0xff]
  %v1164 = vld [vmem:[%s1 + $0x90] sm:$0xff]
  %v1165 = vld [vmem:[%s1 + $0x98] sm:$0xff]
  %v1166 = vld [vmem:[%s1 + $0xa0] sm:$0xff]
  %v1167 = vld [vmem:[%s1 + $0xa8] sm:$0xff]
  %v1168 = vld [vmem:[%s1 + $0xb0] sm:$0xff]
  %v1169 = vld [vmem:[%s1 + $0xb8] sm:$0xff]
  %v1170 = vld [vmem:[%s1 + $0xc0] sm:$0xff]
  %v1171 = vld [vmem:[%s1 + $0xc8] sm:$0xff]
  %v1172 = vld [vmem:[%s1 + $0xd0] sm:$0xff]
  %v1173 = vld [vmem:[%s1 + $0xd8] sm:$0xff]
  %v1174 = vld [vmem:[%s1 + $0xe0] sm:$0xff]
  %v1175 = vld [vmem:[%s1 + $0xe8] sm:$0xff]
  %v1176 = vld [vmem:[%s1 + $0xf0] sm:$0xff]
  %v1177 = vld [vmem:[%s1 + $0xf8] sm:$0xff]
  %v1178 = vld [vmem:[%s1 + $0x100] sm:$0xff]
  %v1179 = vld [vmem:[%s1 + $0x108] sm:$0xff]
  %v1180 = vld [vmem:[%s1 + $0x110] sm:$0xff]
  %v1181 = vld [vmem:[%s1 + $0x118] sm:$0xff]
  %v1182 = vld [vmem:[%s1 + $0x120] sm:$0xff]
  %v1183 = vld [vmem:[%s1 + $0x128] sm:$0xff]
  %v1184 = vld [vmem:[%s1 + $0x130] sm:$0xff]
  %v1185 = vld [vmem:[%s1 + $0x138] sm:$0xff]
  %v1186 = vld [vmem:[%s1 + $0x140] sm:$0xff]
  %v1187 = vld [vmem:[%s1 + $0x148] sm:$0xff]
  %v1188 = vld [vmem:[%s1 + $0x150] sm:$0xff]
  %v1189 = vld [vmem:[%s1 + $0x158] sm:$0xff]
  %v1190 = vld [vmem:[%s1 + $0x160] sm:$0xff]
  %v1191 = vld [vmem:[%s1 + $0x168] sm:$0xff]
  %v1192 = vld [vmem:[%s1 + $0x170] sm:$0xff]
  %v1193 = vld [vmem:[%s1 + $0x178] sm:$0xff]
  %v1194 = vld [vmem:[%s1 + $0x180] sm:$0xff]
  %v1195 = vld [vmem:[%s1 + $0x188] sm:$0xff]
  %v1196 = vld [vmem:[%s1 + $0x190] sm:$0xff]
  %v1197 = vld [vmem:[%s1 + $0x198] sm:$0xff]
  %v1198 = vld [vmem:[%s1 + $0x1a0] sm:$0xff]
  %v1199 = vld [vmem:[%s1 + $0x1a8] sm:$0xff]
  %v1200 = vld [vmem:[%s1 + $0x1b0] sm:$0xff]
  %v1201 = vld [vmem:[%s1 + $0x1b8] sm:$0xff]
  %v1202 = vld [vmem:[%s1 + $0x1c0] sm:$0xff]
  %v1203 = vld [vmem:[%s1 + $0x1c8] sm:$0xff]
  %v1204 = vld [vmem:[%s1 + $0x1d0] sm:$0xff]
  %v1205 = vld [vmem:[%s1 + $0x1d8] sm:$0xff]
  %v1206 = vld [vmem:[%s1 + $0x1e0] sm:$0xff]
  %v1207 = vld [vmem:[%s1 + $0x1e8] sm:$0xff]
  %v1208 = vld [vmem:[%s1 + $0x1f0] sm:$0xff]
  %v1209 = vld [vmem:[%s1 + $0x1f8] sm:$0xff]
  %1210 = vmatprep.subr.mxu0 0.0
  %1211 = vmatpush1.msra.mxu0 %v1146
  %1212 = vmatprep.subr.mxu0 0.0
  %1213 = vmatpush1.msra.mxu0 %v1147
  %1214 = vmatprep.subr.mxu0 0.0
  %1215 = vmatpush1.msra.mxu0 %v1148
  %1216 = vmatprep.subr.mxu0 0.0
  %1217 = vmatpush1.msra.mxu0 %v1149
  %1218 = vmatprep.subr.mxu0 0.0
  %1219 = vmatpush1.msra.mxu0 %v1150
  %1220 = vmatprep.subr.mxu0 0.0
  %1221 = vmatpush1.msra.mxu0 %v1151
  %1222 = vmatprep.subr.mxu0 0.0
  %1223 = vmatpush1.msra.mxu0 %v1152
  %1224 = vmatprep.subr.mxu0 0.0
  %1225 = vmatpush1.msra.mxu0 %v1153
  %1226 = vmatprep.subr.mxu0 0.0
  %1227 = vmatpush1.msra.mxu0 %v1154
  %1228 = vmatprep.subr.mxu0 0.0
  %1229 = vmatpush1.msra.mxu0 %v1155
  %1230 = vmatprep.subr.mxu0 0.0
  %1231 = vmatpush1.msra.mxu0 %v1156
  %1232 = vmatprep.subr.mxu0 0.0
  %1233 = vmatpush1.msra.mxu0 %v1157
  %1234 = vmatprep.subr.mxu0 0.0
  %1235 = vmatpush1.msra.mxu0 %v1158
  %1236 = vmatprep.subr.mxu0 0.0
  %1237 = vmatpush1.msra.mxu0 %v1159
  %1238 = vmatprep.subr.mxu0 0.0
  %1239 = vmatpush1.msra.mxu0 %v1160
  %1240 = vmatprep.subr.mxu0 0.0
  %1241 = vmatpush1.msra.mxu0 %v1161
  %1242 = vmatprep.subr.mxu0 0.0
  %1243 = vmatpush1.msra.mxu0 %v1162
  %1244 = vmatprep.subr.mxu0 0.0
  %1245 = vmatpush1.msra.mxu0 %v1163
  %1246 = vmatprep.subr.mxu0 0.0
  %1247 = vmatpush1.msra.mxu0 %v1164
  %1248 = vmatprep.subr.mxu0 0.0
  %1249 = vmatpush1.msra.mxu0 %v1165
  %1250 = vmatprep.subr.mxu0 0.0
  %1251 = vmatpush1.msra.mxu0 %v1166
  %1252 = vmatprep.subr.mxu0 0.0
  %1253 = vmatpush1.msra.mxu0 %v1167
  %1254 = vmatprep.subr.mxu0 0.0
  %1255 = vmatpush1.msra.mxu0 %v1168
  %1256 = vmatprep.subr.mxu0 0.0
  %1257 = vmatpush1.msra.mxu0 %v1169
  %1258 = vmatprep.subr.mxu0 0.0
  %1259 = vmatpush1.msra.mxu0 %v1170
  %1260 = vmatprep.subr.mxu0 0.0
  %1261 = vmatpush1.msra.mxu0 %v1171
  %1262 = vmatprep.subr.mxu0 0.0
  %1263 = vmatpush1.msra.mxu0 %v1172
  %1264 = vmatprep.subr.mxu0 0.0
  %1265 = vmatpush1.msra.mxu0 %v1173
  %1266 = vmatprep.subr.mxu0 0.0
  %1267 = vmatpush1.msra.mxu0 %v1174
  %1268 = vmatprep.subr.mxu0 0.0
  %1269 = vmatpush1.msra.mxu0 %v1175
  %1270 = vmatprep.subr.mxu0 0.0
  %1271 = vmatpush1.msra.mxu0 %v1176
  %1272 = vmatprep.subr.mxu0 0.0
  %1273 = vmatpush1.msra.mxu0 %v1177
  %1274 = vmatprep.mubr.f32.mxu0 %v1018
  %1275 = vmatmul.mubr.f32.gmra.mrb[0].mxu0 %v26
  %v1276 = vpop.f32.mrb[0].mxu0
  %v1277 = vadd.f32 0.0, %v1276
  %v1278 = vpop.f32.mrb[0].mxu0
  %1279 = vmatprep.mubr.f32.mxu0 %v1017
  %1280 = vmatmul.mubr.f32.gmra.mrb[0].mxu0 %v27
  %v1281 = vpop.f32.mrb[0].mxu0
  %v1282 = vadd.f32 0.0, %v1281
  %v1283 = vpop.f32.mrb[0].mxu0
  %1284 = vmatprep.mubr.f32.mxu0 %v1016
  %1285 = vmatmul.mubr.f32.gmra.mrb[0].mxu0 %v28
  %v1286 = vpop.f32.mrb[0].mxu0
  %v1287 = vadd.f32 0.0, %v1286
  %v1288 = vpop.f32.mrb[0].mxu0
  %1289 = vmatprep.mubr.f32.mxu0 %v1015
  %1290 = vmatmul.mubr.f32.gmra.mrb[0].mxu0 %v29
  %v1291 = vpop.f32.mrb[0].mxu0
  %v1292 = vadd.f32 0.0, %v1291
  %v1293 = vpop.f32.mrb[0].mxu0
  %1294 = vmatprep.mubr.f32.mxu0 %v1014
  %1295 = vmatmul.mubr.f32.gmra.mrb[0].mxu0 %v30
  %v1296 = vpop.f32.mrb[0].mxu0
  %v1297 = vadd.f32 0.0, %v1296
  %v1298 = vpop.f32.mrb[0].mxu0
  %1299 = vmatprep.mubr.f32.mxu0 %v1013
  %1300 = vmatmul.mubr.f32.gmra.mrb[0].mxu0 %v31
  %v1301 = vpop.f32.mrb[0].mxu0
  %v1302 = vadd.f32 0.0, %v1301
  %v1303 = vpop.f32.mrb[0].mxu0
  %1304 = vmatprep.mubr.f32.mxu0 %v1012
  %1305 = vmatmul.mubr.f32.gmra.mrb[0].mxu0 %v32
  %v1306 = vpop.f32.mrb[0].mxu0
  %v1307 = vadd.f32 0.0, %v1306
  %v1308 = vpop.f32.mrb[0].mxu0
  %1309 = vmatprep.mubr.f32.mxu0 %v1011
  %1310 = vmatmul.mubr.f32.gmra.mrb[0].mxu0 %v33
  %v1311 = vpop.f32.mrb[0].mxu0
  %v1312 = vadd.f32 0.0, %v1311
  %v1313 = vpop.f32.mrb[0].mxu0
  %1314 = vmatprep.mubr.f32.mxu0 %v1010
  %1315 = vmatmul.mubr.f32.gmra.mrb[0].mxu0 %v34
  %v1316 = vpop.f32.mrb[0].mxu0
  %v1317 = vadd.f32 0.0, %v1316
  %v1318 = vpop.f32.mrb[0].mxu0
  %1319 = vmatprep.mubr.f32.mxu0 %v1009
  %1320 = vmatmul.mubr.f32.gmra.mrb[0].mxu0 %v35
  %v1321 = vpop.f32.mrb[0].mxu0
  %v1322 = vadd.f32 0.0, %v1321
  %v1323 = vpop.f32.mrb[0].mxu0
  %1324 = vmatprep.mubr.f32.mxu0 %v1008
  %1325 = vmatmul.mubr.f32.gmra.mrb[0].mxu0 %v36
  %v1326 = vpop.f32.mrb[0].mxu0
  %v1327 = vadd.f32 0.0, %v1326
  %v1328 = vpop.f32.mrb[0].mxu0
  %1329 = vmatprep.mubr.f32.mxu0 %v1007
  %1330 = vmatmul.mubr.f32.gmra.mrb[0].mxu0 %v37
  %v1331 = vpop.f32.mrb[0].mxu0
  %v1332 = vadd.f32 0.0, %v1331
  %v1333 = vpop.f32.mrb[0].mxu0
  %1334 = vmatprep.mubr.f32.mxu0 %v1006
  %1335 = vmatmul.mubr.f32.gmra.mrb[0].mxu0 %v38
  %v1336 = vpop.f32.mrb[0].mxu0
  %v1337 = vadd.f32 0.0, %v1336
  %v1338 = vpop.f32.mrb[0].mxu0
  %1339 = vmatprep.mubr.f32.mxu0 %v1005
  %1340 = vmatmul.mubr.f32.gmra.mrb[0].mxu0 %v39
  %v1341 = vpop.f32.mrb[0].mxu0
  %v1342 = vadd.f32 0.0, %v1341
  %v1343 = vpop.f32.mrb[0].mxu0
  %1344 = vmatprep.mubr.f32.mxu0 %v1004
  %1345 = vmatmul.mubr.f32.gmra.mrb[0].mxu0 %v40
  %v1346 = vpop.f32.mrb[0].mxu0
  %v1347 = vadd.f32 0.0, %v1346
  %v1348 = vpop.f32.mrb[0].mxu0
  %1349 = vmatprep.mubr.f32.mxu0 %v1003
  %1350 = vmatmul.mubr.f32.gmra.mrb[0].mxu0 %v41
  %v1351 = vpop.f32.mrb[0].mxu0
  %v1352 = vadd.f32 0.0, %v1351
  %v1353 = vpop.f32.mrb[0].mxu0
  %1354 = vmatprep.mubr.f32.mxu0 %v1002
  %1355 = vmatmul.mubr.f32.gmra.mrb[0].mxu0 %v42
  %v1356 = vpop.f32.mrb[0].mxu0
  %v1357 = vadd.f32 0.0, %v1356
  %v1358 = vpop.f32.mrb[0].mxu0
  %1359 = vmatprep.mubr.f32.mxu0 %v1001
  %1360 = vmatmul.mubr.f32.gmra.mrb[0].mxu0 %v43
  %v1361 = vpop.f32.mrb[0].mxu0
  %v1362 = vadd.f32 0.0, %v1361
  %v1363 = vpop.f32.mrb[0].mxu0
  %1364 = vmatprep.mubr.f32.mxu0 %v1000
  %1365 = vmatmul.mubr.f32.gmra.mrb[0].mxu0 %v44
  %v1366 = vpop.f32.mrb[0].mxu0
  %v1367 = vadd.f32 0.0, %v1366
  %v1368 = vpop.f32.mrb[0].mxu0
  %1369 = vmatprep.mubr.f32.mxu0 %v999
  %1370 = vmatmul.mubr.f32.gmra.mrb[0].mxu0 %v45
  %v1371 = vpop.f32.mrb[0].mxu0
  %v1372 = vadd.f32 0.0, %v1371
  %v1373 = vpop.f32.mrb[0].mxu0
  %1374 = vmatprep.mubr.f32.mxu0 %v998
  %1375 = vmatmul.mubr.f32.gmra.mrb[0].mxu0 %v46
  %v1376 = vpop.f32.mrb[0].mxu0
  %v1377 = vadd.f32 0.0, %v1376
  %v1378 = vpop.f32.mrb[0].mxu0
  %1379 = vmatprep.mubr.f32.mxu0 %v997
  %1380 = vmatmul.mubr.f32.gmra.mrb[0].mxu0 %v47
  %v1381 = vpop.f32.mrb[0].mxu0
  %v1382 = vadd.f32 0.0, %v1381
  %v1383 = vpop.f32.mrb[0].mxu0
  %1384 = vmatprep.mubr.f32.mxu0 %v996
  %1385 = vmatmul.mubr.f32.gmra.mrb[0].mxu0 %v48
  %v1386 = vpop.f32.mrb[0].mxu0
  %v1387 = vadd.f32 0.0, %v1386
  %v1388 = vpop.f32.mrb[0].mxu0
  %1389 = vmatprep.mubr.f32.mxu0 %v995
  %1390 = vmatmul.mubr.f32.gmra.mrb[0].mxu0 %v49
  %v1391 = vpop.f32.mrb[0].mxu0
  %v1392 = vadd.f32 0.0, %v1391
  %v1393 = vpop.f32.mrb[0].mxu0
  %1394 = vmatprep.mubr.f32.mxu0 %v994
  %1395 = vmatmul.mubr.f32.gmra.mrb[0].mxu0 %v50
  %v1396 = vpop.f32.mrb[0].mxu0
  %v1397 = vadd.f32 0.0, %v1396
  %v1398 = vpop.f32.mrb[0].mxu0
  %1399 = vmatprep.mubr.f32.mxu0 %v993
  %1400 = vmatmul.mubr.f32.gmra.mrb[0].mxu0 %v51
  %v1401 = vpop.f32.mrb[0].mxu0
  %v1402 = vadd.f32 0.0, %v1401
  %v1403 = vpop.f32.mrb[0].mxu0
  %1404 = vmatprep.mubr.f32.mxu0 %v992
  %1405 = vmatmul.mubr.f32.gmra.mrb[0].mxu0 %v52
  %v1406 = vpop.f32.mrb[0].mxu0
  %v1407 = vadd.f32 0.0, %v1406
  %v1408 = vpop.f32.mrb[0].mxu0
  %1409 = vmatprep.mubr.f32.mxu0 %v991
  %1410 = vmatmul.mubr.f32.gmra.mrb[0].mxu0 %v53
  %v1411 = vpop.f32.mrb[0].mxu0
  %v1412 = vadd.f32 0.0, %v1411
  %v1413 = vpop.f32.mrb[0].mxu0
  %1414 = vmatprep.mubr.f32.mxu0 %v990
  %1415 = vmatmul.mubr.f32.gmra.mrb[0].mxu0 %v54
  %v1416 = vpop.f32.mrb[0].mxu0
  %v1417 = vadd.f32 0.0, %v1416
  %v1418 = vpop.f32.mrb[0].mxu0
  %1419 = vmatprep.mubr.f32.mxu0 %v989
  %1420 = vmatmul.mubr.f32.gmra.mrb[0].mxu0 %v55
  %v1421 = vpop.f32.mrb[0].mxu0
  %v1422 = vadd.f32 0.0, %v1421
  %v1423 = vpop.f32.mrb[0].mxu0
  %1424 = vmatprep.mubr.f32.mxu0 %v1019
  %1425 = vmatmul.mubr.f32.gmra.mrb[0].mxu0 %v56
  %v1426 = vpop.f32.mrb[0].mxu0
  %v1427 = vadd.f32 0.0, %v1426
  %v1428 = vpop.f32.mrb[0].mxu0
  %1429 = vdwg.mxu0
  %1430 = vmatprep.subr.mxu0 0.0
  %1431 = vmatpush1.msra.mxu0 %v1178
  %1432 = vmatprep.subr.mxu0 0.0
  %1433 = vmatpush1.msra.mxu0 %v1179
  %1434 = vmatprep.subr.mxu0 0.0
  %1435 = vmatpush1.msra.mxu0 %v1180
  %1436 = vmatprep.subr.mxu0 0.0
  %1437 = vmatpush1.msra.mxu0 %v1181
  %1438 = vmatprep.subr.mxu0 0.0
  %1439 = vmatpush1.msra.mxu0 %v1182
  %1440 = vmatprep.subr.mxu0 0.0
  %1441 = vmatpush1.msra.mxu0 %v1183
  %1442 = vmatprep.subr.mxu0 0.0
  %1443 = vmatpush1.msra.mxu0 %v1184
  %1444 = vmatprep.subr.mxu0 0.0
  %1445 = vmatpush1.msra.mxu0 %v1185
  %1446 = vmatprep.subr.mxu0 0.0
  %1447 = vmatpush1.msra.mxu0 %v1186
  %1448 = vmatprep.subr.mxu0 0.0
  %1449 = vmatpush1.msra.mxu0 %v1187
  %1450 = vmatprep.subr.mxu0 0.0
  %1451 = vmatpush1.msra.mxu0 %v1188
  %1452 = vmatprep.subr.mxu0 0.0
  %1453 = vmatpush1.msra.mxu0 %v1189
  %1454 = vmatprep.subr.mxu0 0.0
  %1455 = vmatpush1.msra.mxu0 %v1190
  %1456 = vmatprep.subr.mxu0 0.0
  %1457 = vmatpush1.msra.mxu0 %v1191
  %1458 = vmatprep.subr.mxu0 0.0
  %1459 = vmatpush1.msra.mxu0 %v1192
  %1460 = vmatprep.subr.mxu0 0.0
  %1461 = vmatpush1.msra.mxu0 %v1193
  %1462 = vmatprep.subr.mxu0 0.0
  %1463 = vmatpush1.msra.mxu0 %v1194
  %1464 = vmatprep.subr.mxu0 0.0
  %1465 = vmatpush1.msra.mxu0 %v1195
  %1466 = vmatprep.subr.mxu0 0.0
  %1467 = vmatpush1.msra.mxu0 %v1196
  %1468 = vmatprep.subr.mxu0 0.0
  %1469 = vmatpush1.msra.mxu0 %v1197
  %1470 = vmatprep.subr.mxu0 0.0
  %1471 = vmatpush1.msra.mxu0 %v1198
  %1472 = vmatprep.subr.mxu0 0.0
  %1473 = vmatpush1.msra.mxu0 %v1199
  %1474 = vmatprep.subr.mxu0 0.0
  %1475 = vmatpush1.msra.mxu0 %v1200
  %1476 = vmatprep.subr.mxu0 0.0
  %1477 = vmatpush1.msra.mxu0 %v1201
  %1478 = vmatprep.subr.mxu0 0.0
  %1479 = vmatpush1.msra.mxu0 %v1202
  %1480 = vmatprep.subr.mxu0 0.0
  %1481 = vmatpush1.msra.mxu0 %v1203
  %1482 = vmatprep.subr.mxu0 0.0
  %1483 = vmatpush1.msra.mxu0 %v1204
  %1484 = vmatprep.subr.mxu0 0.0
  %1485 = vmatpush1.msra.mxu0 %v1205
  %1486 = vmatprep.subr.mxu0 0.0
  %1487 = vmatpush1.msra.mxu0 %v1206
  %1488 = vmatprep.subr.mxu0 0.0
  %1489 = vmatpush1.msra.mxu0 %v1207
  %1490 = vmatprep.subr.mxu0 0.0
  %1491 = vmatpush1.msra.mxu0 %v1208
  %1492 = vmatprep.subr.mxu0 0.0
  %1493 = vmatpush1.msra.mxu0 %v1209
  %1494 = vmatprep.mubr.f32.mxu0 %v1143
  %1495 = vmatmul.mubr.f32.gmra.mrb[0].mxu0 %v1080
  %v1496 = vpop.f32.mrb[0].mxu0
  %v1497 = vadd.f32 %v1277, %v1496
  %v1498 = vpop.f32.mrb[0].mxu0
  %1499 = vmatprep.mubr.f32.mxu0 %v1142
  %1500 = vmatmul.mubr.f32.gmra.mrb[0].mxu0 %v1079
  %v1501 = vpop.f32.mrb[0].mxu0
  %v1502 = vadd.f32 %v1282, %v1501
  %v1503 = vpop.f32.mrb[0].mxu0
  %1504 = vmatprep.mubr.f32.mxu0 %v1141
  %1505 = vmatmul.mubr.f32.gmra.mrb[0].mxu0 %v1078
  %v1506 = vpop.f32.mrb[0].mxu0
  %v1507 = vadd.f32 %v1287, %v1506
  %v1508 = vpop.f32.mrb[0].mxu0
  %1509 = vmatprep.mubr.f32.mxu0 %v1140
  %1510 = vmatmul.mubr.f32.gmra.mrb[0].mxu0 %v1077
  %v1511 = vpop.f32.mrb[0].mxu0
  %v1512 = vadd.f32 %v1292, %v1511
  %v1513 = vpop.f32.mrb[0].mxu0
  %1514 = vmatprep.mubr.f32.mxu0 %v1139
  %1515 = vmatmul.mubr.f32.gmra.mrb[0].mxu0 %v1076
  %v1516 = vpop.f32.mrb[0].mxu0
  %v1517 = vadd.f32 %v1297, %v1516
  %v1518 = vpop.f32.mrb[0].mxu0
  %1519 = vmatprep.mubr.f32.mxu0 %v1138
  %1520 = vmatmul.mubr.f32.gmra.mrb[0].mxu0 %v1075
  %v1521 = vpop.f32.mrb[0].mxu0
  %v1522 = vadd.f32 %v1302, %v1521
  %v1523 = vpop.f32.mrb[0].mxu0
  %1524 = vmatprep.mubr.f32.mxu0 %v1137
  %1525 = vmatmul.mubr.f32.gmra.mrb[0].mxu0 %v1074
  %v1526 = vpop.f32.mrb[0].mxu0
  %v1527 = vadd.f32 %v1307, %v1526
  %v1528 = vpop.f32.mrb[0].mxu0
  %1529 = vmatprep.mubr.f32.mxu0 %v1136
  %1530 = vmatmul.mubr.f32.gmra.mrb[0].mxu0 %v1073
  %v1531 = vpop.f32.mrb[0].mxu0
  %v1532 = vadd.f32 %v1312, %v1531
  %v1533 = vpop.f32.mrb[0].mxu0
  %1534 = vmatprep.mubr.f32.mxu0 %v1135
  %1535 = vmatmul.mubr.f32.gmra.mrb[0].mxu0 %v1072
  %v1536 = vpop.f32.mrb[0].mxu0
  %v1537 = vadd.f32 %v1317, %v1536
  %v1538 = vpop.f32.mrb[0].mxu0
  %1539 = vmatprep.mubr.f32.mxu0 %v1134
  %1540 = vmatmul.mubr.f32.gmra.mrb[0].mxu0 %v1071
  %v1541 = vpop.f32.mrb[0].mxu0
  %v1542 = vadd.f32 %v1322, %v1541
  %v1543 = vpop.f32.mrb[0].mxu0
  %1544 = vmatprep.mubr.f32.mxu0 %v1133
  %1545 = vmatmul.mubr.f32.gmra.mrb[0].mxu0 %v1070
  %v1546 = vpop.f32.mrb[0].mxu0
  %v1547 = vadd.f32 %v1327, %v1546
  %v1548 = vpop.f32.mrb[0].mxu0
  %1549 = vmatprep.mubr.f32.mxu0 %v1132
  %1550 = vmatmul.mubr.f32.gmra.mrb[0].mxu0 %v1069
  %v1551 = vpop.f32.mrb[0].mxu0
  %v1552 = vadd.f32 %v1332, %v1551
  %v1553 = vpop.f32.mrb[0].mxu0
  %1554 = vmatprep.mubr.f32.mxu0 %v1131
  %1555 = vmatmul.mubr.f32.gmra.mrb[0].mxu0 %v1068
  %v1556 = vpop.f32.mrb[0].mxu0
  %v1557 = vadd.f32 %v1337, %v1556
  %v1558 = vpop.f32.mrb[0].mxu0
  %1559 = vmatprep.mubr.f32.mxu0 %v1130
  %1560 = vmatmul.mubr.f32.gmra.mrb[0].mxu0 %v1067
  %v1561 = vpop.f32.mrb[0].mxu0
  %v1562 = vadd.f32 %v1342, %v1561
  %v1563 = vpop.f32.mrb[0].mxu0
  %1564 = vmatprep.mubr.f32.mxu0 %v1129
  %1565 = vmatmul.mubr.f32.gmra.mrb[0].mxu0 %v1066
  %v1566 = vpop.f32.mrb[0].mxu0
  %v1567 = vadd.f32 %v1347, %v1566
  %v1568 = vpop.f32.mrb[0].mxu0
  %1569 = vmatprep.mubr.f32.mxu0 %v1128
  %1570 = vmatmul.mubr.f32.gmra.mrb[0].mxu0 %v1065
  %v1571 = vpop.f32.mrb[0].mxu0
  %v1572 = vadd.f32 %v1352, %v1571
  %v1573 = vpop.f32.mrb[0].mxu0
  %1574 = vmatprep.mubr.f32.mxu0 %v1127
  %1575 = vmatmul.mubr.f32.gmra.mrb[0].mxu0 %v1064
  %v1576 = vpop.f32.mrb[0].mxu0
  %v1577 = vadd.f32 %v1357, %v1576
  %v1578 = vpop.f32.mrb[0].mxu0
  %1579 = vmatprep.mubr.f32.mxu0 %v1126
  %1580 = vmatmul.mubr.f32.gmra.mrb[0].mxu0 %v1063
  %v1581 = vpop.f32.mrb[0].mxu0
  %v1582 = vadd.f32 %v1362, %v1581
  %v1583 = vpop.f32.mrb[0].mxu0
  %1584 = vmatprep.mubr.f32.mxu0 %v1125
  %1585 = vmatmul.mubr.f32.gmra.mrb[0].mxu0 %v1062
  %v1586 = vpop.f32.mrb[0].mxu0
  %v1587 = vadd.f32 %v1367, %v1586
  %v1588 = vpop.f32.mrb[0].mxu0
  %1589 = vmatprep.mubr.f32.mxu0 %v1124
  %1590 = vmatmul.mubr.f32.gmra.mrb[0].mxu0 %v1061
  %v1591 = vpop.f32.mrb[0].mxu0
  %v1592 = vadd.f32 %v1372, %v1591
  %v1593 = vpop.f32.mrb[0].mxu0
  %1594 = vmatprep.mubr.f32.mxu0 %v1123
  %1595 = vmatmul.mubr.f32.gmra.mrb[0].mxu0 %v1060
  %v1596 = vpop.f32.mrb[0].mxu0
  %v1597 = vadd.f32 %v1377, %v1596
  %v1598 = vpop.f32.mrb[0].mxu0
  %1599 = vmatprep.mubr.f32.mxu0 %v1122
  %1600 = vmatmul.mubr.f32.gmra.mrb[0].mxu0 %v1059
  %v1601 = vpop.f32.mrb[0].mxu0
  %v1602 = vadd.f32 %v1382, %v1601
  %v1603 = vpop.f32.mrb[0].mxu0
  %1604 = vmatprep.mubr.f32.mxu0 %v1121
  %1605 = vmatmul.mubr.f32.gmra.mrb[0].mxu0 %v1058
  %v1606 = vpop.f32.mrb[0].mxu0
  %v1607 = vadd.f32 %v1387, %v1606
  %v1608 = vpop.f32.mrb[0].mxu0
  %1609 = vmatprep.mubr.f32.mxu0 %v1120
  %1610 = vmatmul.mubr.f32.gmra.mrb[0].mxu0 %v1057
  %v1611 = vpop.f32.mrb[0].mxu0
  %v1612 = vadd.f32 %v1392, %v1611
  %v1613 = vpop.f32.mrb[0].mxu0
  %1614 = vmatprep.mubr.f32.mxu0 %v1119
  %1615 = vmatmul.mubr.f32.gmra.mrb[0].mxu0 %v1056
  %v1616 = vpop.f32.mrb[0].mxu0
  %v1617 = vadd.f32 %v1397, %v1616
  %v1618 = vpop.f32.mrb[0].mxu0
  %1619 = vmatprep.mubr.f32.mxu0 %v1118
  %1620 = vmatmul.mubr.f32.gmra.mrb[0].mxu0 %v1055
  %v1621 = vpop.f32.mrb[0].mxu0
  %v1622 = vadd.f32 %v1402, %v1621
  %v1623 = vpop.f32.mrb[0].mxu0
  %1624 = vmatprep.mubr.f32.mxu0 %v1117
  %1625 = vmatmul.mubr.f32.gmra.mrb[0].mxu0 %v1054
  %v1626 = vpop.f32.mrb[0].mxu0
  %v1627 = vadd.f32 %v1407, %v1626
  %v1628 = vpop.f32.mrb[0].mxu0
  %1629 = vmatprep.mubr.f32.mxu0 %v1116
  %1630 = vmatmul.mubr.f32.gmra.mrb[0].mxu0 %v1053
  %v1631 = vpop.f32.mrb[0].mxu0
  %v1632 = vadd.f32 %v1412, %v1631
  %v1633 = vpop.f32.mrb[0].mxu0
  %1634 = vmatprep.mubr.f32.mxu0 %v1115
  %1635 = vmatmul.mubr.f32.gmra.mrb[0].mxu0 %v1052
  %v1636 = vpop.f32.mrb[0].mxu0
  %v1637 = vadd.f32 %v1417, %v1636
  %v1638 = vpop.f32.mrb[0].mxu0
  %1639 = vmatprep.mubr.f32.mxu0 %v1145
  %1640 = vmatmul.mubr.f32.gmra.mrb[0].mxu0 %v1082
  %v1641 = vpop.f32.mrb[0].mxu0
  %v1642 = vadd.f32 %v1422, %v1641
  %v1643 = vpop.f32.mrb[0].mxu0
  %1644 = vmatprep.mubr.f32.mxu0 %v1144
  %1645 = vmatmul.mubr.f32.gmra.mrb[0].mxu0 %v1081
  %v1646 = vpop.f32.mrb[0].mxu0
  %v1647 = vadd.f32 %v1427, %v1646
  %v1648 = vpop.f32.mrb[0].mxu0
  %1649 = vdwg.mxu0
  %v1650 = vmul.f32 %v1497, %v678
  %v1651 = vmul.f32 %v1502, %v679
  %v1652 = vmul.f32 %v1507, %v680
  %v1653 = vmul.f32 %v1512, %v681
  %v1654 = vmul.f32 %v1517, %v682
  %v1655 = vmul.f32 %v1522, %v683
  %v1656 = vmul.f32 %v1527, %v684
  %v1657 = vmul.f32 %v1532, %v685
  %v1658 = vmul.f32 %v1537, %v686
  %v1659 = vmul.f32 %v1542, %v687
  %v1660 = vmul.f32 %v1547, %v688
  %v1661 = vmul.f32 %v1552, %v689
  %v1662 = vmul.f32 %v1557, %v690
  %v1663 = vmul.f32 %v1562, %v691
  %v1664 = vmul.f32 %v1567, %v692
  %v1665 = vmul.f32 %v1572, %v693
  %v1666 = vmul.f32 %v1577, %v694
  %v1667 = vmul.f32 %v1582, %v695
  %v1668 = vmul.f32 %v1587, %v696
  %v1669 = vmul.f32 %v1592, %v697
  %v1670 = vmul.f32 %v1597, %v698
  %v1671 = vmul.f32 %v1602, %v699
  %v1672 = vmul.f32 %v1607, %v700
  %v1673 = vmul.f32 %v1612, %v701
  %v1674 = vmul.f32 %v1617, %v702
  %v1675 = vmul.f32 %v1622, %v703
  %v1676 = vmul.f32 %v1627, %v704
  %v1677 = vmul.f32 %v1632, %v705
  %v1678 = vmul.f32 %v1637, %v706
  %v1679 = vmul.f32 %v1642, %v707
  %v1680 = vmul.f32 %v1647, %v708
  %v1681 = vadd.f32 %v1650, %v1651
  %v1682 = vadd.f32 %v1681, %v1652
  %v1683 = vadd.f32 %v1682, %v1653
  %v1684 = vadd.f32 %v1683, %v1654
  %v1685 = vadd.f32 %v1684, %v1655
  %v1686 = vadd.f32 %v1685, %v1656
  %v1687 = vadd.f32 %v1686, %v1657
  %v1688 = vadd.f32 %v1687, %v1658
  %v1689 = vadd.f32 %v1688, %v1659
  %v1690 = vadd.f32 %v1689, %v1660
  %v1691 = vadd.f32 %v1690, %v1661
  %v1692 = vadd.f32 %v1691, %v1662
  %v1693 = vadd.f32 %v1692, %v1663
  %v1694 = vadd.f32 %v1693, %v1664
  %v1695 = vadd.f32 %v1694, %v1665
  %v1696 = vadd.f32 %v1695, %v1666
  %v1697 = vadd.f32 %v1696, %v1667
  %v1698 = vadd.f32 %v1697, %v1668
  %v1699 = vadd.f32 %v1698, %v1669
  %v1700 = vadd.f32 %v1699, %v1670
  %v1701 = vadd.f32 %v1700, %v1671
  %v1702 = vadd.f32 %v1701, %v1672
  %v1703 = vadd.f32 %v1702, %v1673
  %v1704 = vadd.f32 %v1703, %v1674
  %v1705 = vadd.f32 %v1704, %v1675
  %v1706 = vadd.f32 %v1705, %v1676
  %v1707 = vadd.f32 %v1706, %v1677
  %v1708 = vadd.f32 %v1707, %v1678
  %v1709 = vadd.f32 %v1708, %v1679
  %v1710 = vadd.f32 %v1709, %v1680
  %v1711 = vrot.slane %v1710, 4
  %v1712 = vadd.f32 %v1710, %v1711
  %v1713 = vrot.slane %v1712, 2
  %v1714 = vadd.f32 %v1712, %v1713
  %v1715 = vrot.slane %v1714, 1
  %v1716 = vadd.f32 %v1714, %v1715
  %v1717 = vmul.f32 %v1716, 0.005
  %v1718 = vmul.f32 %v1650, %v1497
  %v1719 = vmul.f32 %v1651, %v1502
  %v1720 = vmul.f32 %v1652, %v1507
  %v1721 = vmul.f32 %v1653, %v1512
  %v1722 = vmul.f32 %v1654, %v1517
  %v1723 = vmul.f32 %v1655, %v1522
  %v1724 = vmul.f32 %v1656, %v1527
  %v1725 = vmul.f32 %v1657, %v1532
  %v1726 = vmul.f32 %v1658, %v1537
  %v1727 = vmul.f32 %v1659, %v1542
  %v1728 = vmul.f32 %v1660, %v1547
  %v1729 = vmul.f32 %v1661, %v1552
  %v1730 = vmul.f32 %v1662, %v1557
  %v1731 = vmul.f32 %v1663, %v1562
  %v1732 = vmul.f32 %v1664, %v1567
  %v1733 = vmul.f32 %v1665, %v1572
  %v1734 = vmul.f32 %v1666, %v1577
  %v1735 = vmul.f32 %v1667, %v1582
  %v1736 = vmul.f32 %v1668, %v1587
  %v1737 = vmul.f32 %v1669, %v1592
  %v1738 = vmul.f32 %v1670, %v1597
  %v1739 = vmul.f32 %v1671, %v1602
  %v1740 = vmul.f32 %v1672, %v1607
  %v1741 = vmul.f32 %v1673, %v1612
  %v1742 = vmul.f32 %v1674, %v1617
  %v1743 = vmul.f32 %v1675, %v1622
  %v1744 = vmul.f32 %v1676, %v1627
  %v1745 = vmul.f32 %v1677, %v1632
  %v1746 = vmul.f32 %v1678, %v1637
  %v1747 = vmul.f32 %v1679, %v1642
  %v1748 = vmul.f32 %v1680, %v1647
  %v1749 = vadd.f32 %v1718, %v1719
  %v1750 = vadd.f32 %v1749, %v1720
  %v1751 = vadd.f32 %v1750, %v1721
  %v1752 = vadd.f32 %v1751, %v1722
  %v1753 = vadd.f32 %v1752, %v1723
  %v1754 = vadd.f32 %v1753, %v1724
  %v1755 = vadd.f32 %v1754, %v1725
  %v1756 = vadd.f32 %v1755, %v1726
  %v1757 = vadd.f32 %v1756, %v1727
  %v1758 = vadd.f32 %v1757, %v1728
  %v1759 = vadd.f32 %v1758, %v1729
  %v1760 = vadd.f32 %v1759, %v1730
  %v1761 = vadd.f32 %v1760, %v1731
  %v1762 = vadd.f32 %v1761, %v1732
  %v1763 = vadd.f32 %v1762, %v1733
  %v1764 = vadd.f32 %v1763, %v1734
  %v1765 = vadd.f32 %v1764, %v1735
  %v1766 = vadd.f32 %v1765, %v1736
  %v1767 = vadd.f32 %v1766, %v1737
  %v1768 = vadd.f32 %v1767, %v1738
  %v1769 = vadd.f32 %v1768, %v1739
  %v1770 = vadd.f32 %v1769, %v1740
  %v1771 = vadd.f32 %v1770, %v1741
  %v1772 = vadd.f32 %v1771, %v1742
  %v1773 = vadd.f32 %v1772, %v1743
  %v1774 = vadd.f32 %v1773, %v1744
  %v1775 = vadd.f32 %v1774, %v1745
  %v1776 = vadd.f32 %v1775, %v1746
  %v1777 = vadd.f32 %v1776, %v1747
  %v1778 = vadd.f32 %v1777, %v1748
  %v1779 = vrot.slane %v1778, 4
  %v1780 = vadd.f32 %v1778, %v1779
  %v1781 = vrot.slane %v1780, 2
  %v1782 = vadd.f32 %v1780, %v1781
  %v1783 = vrot.slane %v1782, 1
  %v1784 = vadd.f32 %v1782, %v1783
  %v1785 = vmul.f32 %v1784, 0.005
  %v1786 = vmul.f32 %v1717, %v1717
  %v1787 = vsub.f32 %v1785, %v1786
  %v1788 = vld [vmem:[%s2] sm:$0x1]
  %v1789 = vadd.f32 %v1787, 1e-05
  %v1790 = vrsqrt.pop %v1789
  %v1791 = vmul.f32 %v1788, %v1790
  %v1792 = vsub.f32 %v1497, %v1717
  %v1793 = vsub.f32 %v1502, %v1717
  %v1794 = vsub.f32 %v1507, %v1717
  %v1795 = vsub.f32 %v1512, %v1717
  %v1796 = vsub.f32 %v1517, %v1717
  %v1797 = vsub.f32 %v1522, %v1717
  %v1798 = vsub.f32 %v1527, %v1717
  %v1799 = vsub.f32 %v1532, %v1717
  %v1800 = vsub.f32 %v1537, %v1717
  %v1801 = vsub.f32 %v1542, %v1717
  %v1802 = vsub.f32 %v1547, %v1717
  %v1803 = vsub.f32 %v1552, %v1717
  %v1804 = vsub.f32 %v1557, %v1717
  %v1805 = vsub.f32 %v1562, %v1717
  %v1806 = vsub.f32 %v1567, %v1717
  %v1807 = vsub.f32 %v1572, %v1717
  %v1808 = vsub.f32 %v1577, %v1717
  %v1809 = vsub.f32 %v1582, %v1717
  %v1810 = vsub.f32 %v1587, %v1717
  %v1811 = vsub.f32 %v1592, %v1717
  %v1812 = vsub.f32 %v1597, %v1717
  %v1813 = vsub.f32 %v1602, %v1717
  %v1814 = vsub.f32 %v1607, %v1717
  %v1815 = vsub.f32 %v1612, %v1717
  %v1816 = vsub.f32 %v1617, %v1717
  %v1817 = vsub.f32 %v1622, %v1717
  %v1818 = vsub.f32 %v1627, %v1717
  %v1819 = vsub.f32 %v1632, %v1717
  %v1820 = vsub.f32 %v1637, %v1717
  %v1821 = vsub.f32 %v1642, %v1717
  %v1822 = vsub.f32 %v1647, %v1717
  %v1824 = vlaneseq
  %v1825 = vshrl.u32 %v1824, 7
  %v1826 = vsub.s32 0, %v1825
  %v1827 = vrot.slane %v1791, %v1826
  %v1829 = vmul.f32 %v1792, %v1827
  %v1830 = vmul.f32 %v1793, %v1827
  %v1831 = vmul.f32 %v1794, %v1827
  %v1832 = vmul.f32 %v1795, %v1827
  %v1833 = vmul.f32 %v1796, %v1827
  %v1834 = vmul.f32 %v1797, %v1827
  %v1835 = vmul.f32 %v1798, %v1827
  %v1836 = vmul.f32 %v1799, %v1827
  %v1837 = vmul.f32 %v1800, %v1827
  %v1838 = vmul.f32 %v1801, %v1827
  %v1839 = vmul.f32 %v1802, %v1827
  %v1840 = vmul.f32 %v1803, %v1827
  %v1841 = vmul.f32 %v1804, %v1827
  %v1842 = vmul.f32 %v1805, %v1827
  %v1843 = vmul.f32 %v1806, %v1827
  %v1844 = vmul.f32 %v1807, %v1827
  %v1845 = vmul.f32 %v1808, %v1827
  %v1846 = vmul.f32 %v1809, %v1827
  %v1847 = vmul.f32 %v1810, %v1827
  %v1848 = vmul.f32 %v1811, %v1827
  %v1849 = vmul.f32 %v1812, %v1827
  %v1850 = vmul.f32 %v1813, %v1827
  %v1851 = vmul.f32 %v1814, %v1827
  %v1852 = vmul.f32 %v1815, %v1827
  %v1853 = vmul.f32 %v1816, %v1827
  %v1854 = vmul.f32 %v1817, %v1827
  %v1855 = vmul.f32 %v1818, %v1827
  %v1856 = vmul.f32 %v1819, %v1827
  %v1857 = vmul.f32 %v1820, %v1827
  %v1858 = vmul.f32 %v1821, %v1827
  %v1859 = vmul.f32 %v1822, %v1827
  %v1860 = vld [vmem:[%s3] sm:$0x1]
  %v1862 = vlaneseq
  %v1863 = vshrl.u32 %v1862, 7
  %v1864 = vsub.s32 0, %v1863
  %v1865 = vrot.slane %v1860, %v1864
  %v1867 = vadd.f32 %v1829, %v1865
  %v1868 = vadd.f32 %v1830, %v1865
  %v1869 = vadd.f32 %v1831, %v1865
  %v1870 = vadd.f32 %v1832, %v1865
  %v1871 = vadd.f32 %v1833, %v1865
  %v1872 = vadd.f32 %v1834, %v1865
  %v1873 = vadd.f32 %v1835, %v1865
  %v1874 = vadd.f32 %v1836, %v1865
  %v1875 = vadd.f32 %v1837, %v1865
  %v1876 = vadd.f32 %v1838, %v1865
  %v1877 = vadd.f32 %v1839, %v1865
  %v1878 = vadd.f32 %v1840, %v1865
  %v1879 = vadd.f32 %v1841, %v1865
  %v1880 = vadd.f32 %v1842, %v1865
  %v1881 = vadd.f32 %v1843, %v1865
  %v1882 = vadd.f32 %v1844, %v1865
  %v1883 = vadd.f32 %v1845, %v1865
  %v1884 = vadd.f32 %v1846, %v1865
  %v1885 = vadd.f32 %v1847, %v1865
  %v1886 = vadd.f32 %v1848, %v1865
  %v1887 = vadd.f32 %v1849, %v1865
  %v1888 = vadd.f32 %v1850, %v1865
  %v1889 = vadd.f32 %v1851, %v1865
  %v1890 = vadd.f32 %v1852, %v1865
  %v1891 = vadd.f32 %v1853, %v1865
  %v1892 = vadd.f32 %v1854, %v1865
  %v1893 = vadd.f32 %v1855, %v1865
  %v1894 = vadd.f32 %v1856, %v1865
  %v1895 = vadd.f32 %v1857, %v1865
  %v1896 = vadd.f32 %v1858, %v1865
  %v1897 = vadd.f32 %v1859, %v1865
  %v1898 = vmax.f32 %v1867, 0.0
  %v1899 = vmax.f32 %v1868, 0.0
  %v1900 = vmax.f32 %v1869, 0.0
  %v1901 = vmax.f32 %v1870, 0.0
  %v1902 = vmax.f32 %v1871, 0.0
  %v1903 = vmax.f32 %v1872, 0.0
  %v1904 = vmax.f32 %v1873, 0.0
  %v1905 = vmax.f32 %v1874, 0.0
  %v1906 = vmax.f32 %v1875, 0.0
  %v1907 = vmax.f32 %v1876, 0.0
  %v1908 = vmax.f32 %v1877, 0.0
  %v1909 = vmax.f32 %v1878, 0.0
  %v1910 = vmax.f32 %v1879, 0.0
  %v1911 = vmax.f32 %v1880, 0.0
  %v1912 = vmax.f32 %v1881, 0.0
  %v1913 = vmax.f32 %v1882, 0.0
  %v1914 = vmax.f32 %v1883, 0.0
  %v1915 = vmax.f32 %v1884, 0.0
  %v1916 = vmax.f32 %v1885, 0.0
  %v1917 = vmax.f32 %v1886, 0.0
  %v1918 = vmax.f32 %v1887, 0.0
  %v1919 = vmax.f32 %v1888, 0.0
  %v1920 = vmax.f32 %v1889, 0.0
  %v1921 = vmax.f32 %v1890, 0.0
  %v1922 = vmax.f32 %v1891, 0.0
  %v1923 = vmax.f32 %v1892, 0.0
  %v1924 = vmax.f32 %v1893, 0.0
  %v1925 = vmax.f32 %v1894, 0.0
  %v1926 = vmax.f32 %v1895, 0.0
  %v1927 = vmax.f32 %v1896, 0.0
  %v1928 = vmax.f32 %v1897, 0.0
  %v1929 = vrot.slane %v1898, 4
  %v1930 = vrot.slane %v1899, 4
  %v1931 = vrot.slane %v1900, 4
  %v1932 = vrot.slane %v1901, 4
  %v1933 = vrot.slane %v1902, 4
  %v1934 = vrot.slane %v1903, 4
  %v1935 = vrot.slane %v1904, 4
  %v1936 = vrot.slane %v1905, 4
  %v1937 = vrot.slane %v1906, 4
  %v1938 = vrot.slane %v1907, 4
  %v1939 = vrot.slane %v1908, 4
  %v1940 = vrot.slane %v1909, 4
  %v1941 = vrot.slane %v1910, 4
  %v1942 = vrot.slane %v1911, 4
  %v1943 = vrot.slane %v1912, 4
  %v1944 = vrot.slane %v1913, 4
  %v1945 = vrot.slane %v1914, 4
  %v1946 = vrot.slane %v1915, 4
  %v1947 = vrot.slane %v1916, 4
  %v1948 = vrot.slane %v1917, 4
  %v1949 = vrot.slane %v1918, 4
  %v1950 = vrot.slane %v1919, 4
  %v1951 = vrot.slane %v1920, 4
  %v1952 = vrot.slane %v1921, 4
  %v1953 = vrot.slane %v1922, 4
  %v1954 = vrot.slane %v1923, 4
  %v1955 = vrot.slane %v1924, 4
  %v1956 = vrot.slane %v1925, 4
  %v1957 = vrot.slane %v1926, 4
  %v1958 = vrot.slane %v1927, 4
  %v1959 = vrot.slane %v1928, 4
  %v1960 = vsel %vm1114, %v1958, %v1959
  %v1961 = vsel %vm1114, %v1957, %v1958
  %v1962 = vsel %vm1114, %v1956, %v1957
  %v1963 = vsel %vm1114, %v1955, %v1956
  %v1964 = vsel %vm1114, %v1954, %v1955
  %v1965 = vsel %vm1114, %v1953, %v1954
  %v1966 = vsel %vm1114, %v1952, %v1953
  %v1967 = vsel %vm1114, %v1951, %v1952
  %v1968 = vsel %vm1114, %v1950, %v1951
  %v1969 = vsel %vm1114, %v1949, %v1950
  %v1970 = vsel %vm1114, %v1948, %v1949
  %v1971 = vsel %vm1114, %v1947, %v1948
  %v1972 = vsel %vm1114, %v1946, %v1947
  %v1973 = vsel %vm1114, %v1945, %v1946
  %v1974 = vsel %vm1114, %v1944, %v1945
  %v1975 = vsel %vm1114, %v1943, %v1944
  %v1976 = vsel %vm1114, %v1942, %v1943
  %v1977 = vsel %vm1114, %v1941, %v1942
  %v1978 = vsel %vm1114, %v1940, %v1941
  %v1979 = vsel %vm1114, %v1939, %v1940
  %v1980 = vsel %vm1114, %v1938, %v1939
  %v1981 = vsel %vm1114, %v1937, %v1938
  %v1982 = vsel %vm1114, %v1936, %v1937
  %v1983 = vsel %vm1114, %v1935, %v1936
  %v1984 = vsel %vm1114, %v1934, %v1935
  %v1985 = vsel %vm1114, %v1933, %v1934
  %v1986 = vsel %vm1114, %v1932, %v1933
  %v1987 = vsel %vm1114, %v1931, %v1932
  %v1988 = vsel %vm1114, %v1930, %v1931
  %v1989 = vsel %vm1114, %v1929, %v1930
  %v1990 = vsel %vm1114, %v1959, %v1929
  %v1991 = vrot.slane %v1898, 5
  %v1992 = vrot.slane %v1899, 5
  %v1993 = vrot.slane %v1900, 5
  %v1994 = vrot.slane %v1901, 5
  %v1995 = vrot.slane %v1902, 5
  %v1996 = vrot.slane %v1903, 5
  %v1997 = vrot.slane %v1904, 5
  %v1998 = vrot.slane %v1905, 5
  %v1999 = vrot.slane %v1906, 5
  %v2000 = vrot.slane %v1907, 5
  %v2001 = vrot.slane %v1908, 5
  %v2002 = vrot.slane %v1909, 5
  %v2003 = vrot.slane %v1910, 5
  %v2004 = vrot.slane %v1911, 5
  %v2005 = vrot.slane %v1912, 5
  %v2006 = vrot.slane %v1913, 5
  %v2007 = vrot.slane %v1914, 5
  %v2008 = vrot.slane %v1915, 5
  %v2009 = vrot.slane %v1916, 5
  %v2010 = vrot.slane %v1917, 5
  %v2011 = vrot.slane %v1918, 5
  %v2012 = vrot.slane %v1919, 5
  %v2013 = vrot.slane %v1920, 5
  %v2014 = vrot.slane %v1921, 5
  %v2015 = vrot.slane %v1922, 5
  %v2016 = vrot.slane %v1923, 5
  %v2017 = vrot.slane %v1924, 5
  %v2018 = vrot.slane %v1925, 5
  %v2019 = vrot.slane %v1926, 5
  %v2020 = vrot.slane %v1927, 5
  %v2021 = vrot.slane %v1928, 5
  %vm2022 = vcmp.lt.s32.totalorder %v58, 3
  %v2023 = vsel %vm2022, %v2020, %v2021
  %v2024 = vsel %vm2022, %v2019, %v2020
  %v2025 = vsel %vm2022, %v2018, %v2019
  %v2026 = vsel %vm2022, %v2017, %v2018
  %v2027 = vsel %vm2022, %v2016, %v2017
  %v2028 = vsel %vm2022, %v2015, %v2016
  %v2029 = vsel %vm2022, %v2014, %v2015
  %v2030 = vsel %vm2022, %v2013, %v2014
  %v2031 = vsel %vm2022, %v2012, %v2013
  %v2032 = vsel %vm2022, %v2011, %v2012
  %v2033 = vsel %vm2022, %v2010, %v2011
  %v2034 = vsel %vm2022, %v2009, %v2010
  %v2035 = vsel %vm2022, %v2008, %v2009
  %v2036 = vsel %vm2022, %v2007, %v2008
  %v2037 = vsel %vm2022, %v2006, %v2007
  %v2038 = vsel %vm2022, %v2005, %v2006
  %v2039 = vsel %vm2022, %v2004, %v2005
  %v2040 = vsel %vm2022, %v2003, %v2004
  %v2041 = vsel %vm2022, %v2002, %v2003
  %v2042 = vsel %vm2022, %v2001, %v2002
  %v2043 = vsel %vm2022, %v2000, %v2001
  %v2044 = vsel %vm2022, %v1999, %v2000
  %v2045 = vsel %vm2022, %v1998, %v1999
  %v2046 = vsel %vm2022, %v1997, %v1998
  %v2047 = vsel %vm2022, %v1996, %v1997
  %v2048 = vsel %vm2022, %v1995, %v1996
  %v2049 = vsel %vm2022, %v1994, %v1995
  %v2050 = vsel %vm2022, %v1993, %v1994
  %v2051 = vsel %vm2022, %v1992, %v1993
  %v2052 = vsel %vm2022, %v1991, %v1992
  %v2053 = vsel %vm2022, %v2021, %v1991
  %v2054 = vrot.slane %v1898, 7
  %v2055 = vrot.slane %v1899, 7
  %v2056 = vrot.slane %v1900, 7
  %v2057 = vrot.slane %v1901, 7
  %v2058 = vrot.slane %v1902, 7
  %v2059 = vrot.slane %v1903, 7
  %v2060 = vrot.slane %v1904, 7
  %v2061 = vrot.slane %v1905, 7
  %v2062 = vrot.slane %v1906, 7
  %v2063 = vrot.slane %v1907, 7
  %v2064 = vrot.slane %v1908, 7
  %v2065 = vrot.slane %v1909, 7
  %v2066 = vrot.slane %v1910, 7
  %v2067 = vrot.slane %v1911, 7
  %v2068 = vrot.slane %v1912, 7
  %v2069 = vrot.slane %v1913, 7
  %v2070 = vrot.slane %v1914, 7
  %v2071 = vrot.slane %v1915, 7
  %v2072 = vrot.slane %v1916, 7
  %v2073 = vrot.slane %v1917, 7
  %v2074 = vrot.slane %v1918, 7
  %v2075 = vrot.slane %v1919, 7
  %v2076 = vrot.slane %v1920, 7
  %v2077 = vrot.slane %v1921, 7
  %v2078 = vrot.slane %v1922, 7
  %v2079 = vrot.slane %v1923, 7
  %v2080 = vrot.slane %v1924, 7
  %v2081 = vrot.slane %v1925, 7
  %v2082 = vrot.slane %v1926, 7
  %v2083 = vrot.slane %v1927, 7
  %v2084 = vrot.slane %v1928, 7
  %vm2085 = vcmp.lt.s32.totalorder %v58, 1
  %v2086 = vsel %vm2085, %v2083, %v2084
  %v2087 = vsel %vm2085, %v2082, %v2083
  %v2088 = vsel %vm2085, %v2081, %v2082
  %v2089 = vsel %vm2085, %v2080, %v2081
  %v2090 = vsel %vm2085, %v2079, %v2080
  %v2091 = vsel %vm2085, %v2078, %v2079
  %v2092 = vsel %vm2085, %v2077, %v2078
  %v2093 = vsel %vm2085, %v2076, %v2077
  %v2094 = vsel %vm2085, %v2075, %v2076
  %v2095 = vsel %vm2085, %v2074, %v2075
  %v2096 = vsel %vm2085, %v2073, %v2074
  %v2097 = vsel %vm2085, %v2072, %v2073
  %v2098 = vsel %vm2085, %v2071, %v2072
  %v2099 = vsel %vm2085, %v2070, %v2071
  %v2100 = vsel %vm2085, %v2069, %v2070
  %v2101 = vsel %vm2085, %v2068, %v2069
  %v2102 = vsel %vm2085, %v2067, %v2068
  %v2103 = vsel %vm2085, %v2066, %v2067
  %v2104 = vsel %vm2085, %v2065, %v2066
  %v2105 = vsel %vm2085, %v2064, %v2065
  %v2106 = vsel %vm2085, %v2063, %v2064
  %v2107 = vsel %vm2085, %v2062, %v2063
  %v2108 = vsel %vm2085, %v2061, %v2062
  %v2109 = vsel %vm2085, %v2060, %v2061
  %v2110 = vsel %vm2085, %v2059, %v2060
  %v2111 = vsel %vm2085, %v2058, %v2059
  %v2112 = vsel %vm2085, %v2057, %v2058
  %v2113 = vsel %vm2085, %v2056, %v2057
  %v2114 = vsel %vm2085, %v2055, %v2056
  %v2115 = vsel %vm2085, %v2054, %v2055
  %v2116 = vsel %vm2085, %v2084, %v2054
  %v2117 = vld [vmem:[%s4] sm:$0xff]
  %v2118 = vld [vmem:[%s4 + $0x8] sm:$0xff]
  %v2119 = vld [vmem:[%s4 + $0x10] sm:$0xff]
  %v2120 = vld [vmem:[%s4 + $0x18] sm:$0xff]
  %v2121 = vld [vmem:[%s4 + $0x20] sm:$0xff]
  %v2122 = vld [vmem:[%s4 + $0x28] sm:$0xff]
  %v2123 = vld [vmem:[%s4 + $0x30] sm:$0xff]
  %v2124 = vld [vmem:[%s4 + $0x38] sm:$0xff]
  %v2125 = vld [vmem:[%s4 + $0x40] sm:$0xff]
  %v2126 = vld [vmem:[%s4 + $0x48] sm:$0xff]
  %v2127 = vld [vmem:[%s4 + $0x50] sm:$0xff]
  %v2128 = vld [vmem:[%s4 + $0x58] sm:$0xff]
  %v2129 = vld [vmem:[%s4 + $0x60] sm:$0xff]
  %v2130 = vld [vmem:[%s4 + $0x68] sm:$0xff]
  %v2131 = vld [vmem:[%s4 + $0x70] sm:$0xff]
  %v2132 = vld [vmem:[%s4 + $0x78] sm:$0xff]
  %v2133 = vld [vmem:[%s4 + $0x80] sm:$0xff]
  %v2134 = vld [vmem:[%s4 + $0x88] sm:$0xff]
  %v2135 = vld [vmem:[%s4 + $0x90] sm:$0xff]
  %v2136 = vld [vmem:[%s4 + $0x98] sm:$0xff]
  %v2137 = vld [vmem:[%s4 + $0xa0] sm:$0xff]
  %v2138 = vld [vmem:[%s4 + $0xa8] sm:$0xff]
  %v2139 = vld [vmem:[%s4 + $0xb0] sm:$0xff]
  %v2140 = vld [vmem:[%s4 + $0xb8] sm:$0xff]
  %v2141 = vld [vmem:[%s4 + $0xc0] sm:$0xff]
  %v2142 = vld [vmem:[%s4 + $0xc8] sm:$0xff]
  %v2143 = vld [vmem:[%s4 + $0xd0] sm:$0xff]
  %v2144 = vld [vmem:[%s4 + $0xd8] sm:$0xff]
  %v2145 = vld [vmem:[%s4 + $0xe0] sm:$0xff]
  %v2146 = vld [vmem:[%s4 + $0xe8] sm:$0xff]
  %v2147 = vld [vmem:[%s4 + $0xf0] sm:$0xff]
  %v2148 = vld [vmem:[%s4 + $0xf8] sm:$0xff]
  %v2149 = vld [vmem:[%s4 + $0x100] sm:$0xff]
  %v2150 = vld [vmem:[%s4 + $0x108] sm:$0xff]
  %v2151 = vld [vmem:[%s4 + $0x110] sm:$0xff]
  %v2152 = vld [vmem:[%s4 + $0x118] sm:$0xff]
  %v2153 = vld [vmem:[%s4 + $0x120] sm:$0xff]
  %v2154 = vld [vmem:[%s4 + $0x128] sm:$0xff]
  %v2155 = vld [vmem:[%s4 + $0x130] sm:$0xff]
  %v2156 = vld [vmem:[%s4 + $0x138] sm:$0xff]
  %v2157 = vld [vmem:[%s4 + $0x140] sm:$0xff]
  %v2158 = vld [vmem:[%s4 + $0x148] sm:$0xff]
  %v2159 = vld [vmem:[%s4 + $0x150] sm:$0xff]
  %v2160 = vld [vmem:[%s4 + $0x158] sm:$0xff]
  %v2161 = vld [vmem:[%s4 + $0x160] sm:$0xff]
  %v2162 = vld [vmem:[%s4 + $0x168] sm:$0xff]
  %v2163 = vld [vmem:[%s4 + $0x170] sm:$0xff]
  %v2164 = vld [vmem:[%s4 + $0x178] sm:$0xff]
  %v2165 = vld [vmem:[%s4 + $0x180] sm:$0xff]
  %v2166 = vld [vmem:[%s4 + $0x188] sm:$0xff]
  %v2167 = vld [vmem:[%s4 + $0x190] sm:$0xff]
  %v2168 = vld [vmem:[%s4 + $0x198] sm:$0xff]
  %v2169 = vld [vmem:[%s4 + $0x1a0] sm:$0xff]
  %v2170 = vld [vmem:[%s4 + $0x1a8] sm:$0xff]
  %v2171 = vld [vmem:[%s4 + $0x1b0] sm:$0xff]
  %v2172 = vld [vmem:[%s4 + $0x1b8] sm:$0xff]
  %v2173 = vld [vmem:[%s4 + $0x1c0] sm:$0xff]
  %v2174 = vld [vmem:[%s4 + $0x1c8] sm:$0xff]
  %v2175 = vld [vmem:[%s4 + $0x1d0] sm:$0xff]
  %v2176 = vld [vmem:[%s4 + $0x1d8] sm:$0xff]
  %v2177 = vld [vmem:[%s4 + $0x1e0] sm:$0xff]
  %v2178 = vld [vmem:[%s4 + $0x1e8] sm:$0xff]
  %v2179 = vld [vmem:[%s4 + $0x1f0] sm:$0xff]
  %v2180 = vld [vmem:[%s4 + $0x1f8] sm:$0xff]
  %2181 = vmatprep.subr.mxu0 0.0
  %2182 = vmatpush1.msra.mxu0 %v2117
  %2183 = vmatprep.subr.mxu0 0.0
  %2184 = vmatpush1.msra.mxu0 %v2118
  %2185 = vmatprep.subr.mxu0 0.0
  %2186 = vmatpush1.msra.mxu0 %v2119
  %2187 = vmatprep.subr.mxu0 0.0
  %2188 = vmatpush1.msra.mxu0 %v2120
  %2189 = vmatprep.subr.mxu0 0.0
  %2190 = vmatpush1.msra.mxu0 %v2121
  %2191 = vmatprep.subr.mxu0 0.0
  %2192 = vmatpush1.msra.mxu0 %v2122
  %2193 = vmatprep.subr.mxu0 0.0
  %2194 = vmatpush1.msra.mxu0 %v2123
  %2195 = vmatprep.subr.mxu0 0.0
  %2196 = vmatpush1.msra.mxu0 %v2124
  %2197 = vmatprep.subr.mxu0 0.0
  %2198 = vmatpush1.msra.mxu0 %v2125
  %2199 = vmatprep.subr.mxu0 0.0
  %2200 = vmatpush1.msra.mxu0 %v2126
  %2201 = vmatprep.subr.mxu0 0.0
  %2202 = vmatpush1.msra.mxu0 %v2127
  %2203 = vmatprep.subr.mxu0 0.0
  %2204 = vmatpush1.msra.mxu0 %v2128
  %2205 = vmatprep.subr.mxu0 0.0
  %2206 = vmatpush1.msra.mxu0 %v2129
  %2207 = vmatprep.subr.mxu0 0.0
  %2208 = vmatpush1.msra.mxu0 %v2130
  %2209 = vmatprep.subr.mxu0 0.0
  %2210 = vmatpush1.msra.mxu0 %v2131
  %2211 = vmatprep.subr.mxu0 0.0
  %2212 = vmatpush1.msra.mxu0 %v2132
  %2213 = vmatprep.subr.mxu0 0.0
  %2214 = vmatpush1.msra.mxu0 %v2133
  %2215 = vmatprep.subr.mxu0 0.0
  %2216 = vmatpush1.msra.mxu0 %v2134
  %2217 = vmatprep.subr.mxu0 0.0
  %2218 = vmatpush1.msra.mxu0 %v2135
  %2219 = vmatprep.subr.mxu0 0.0
  %2220 = vmatpush1.msra.mxu0 %v2136
  %2221 = vmatprep.subr.mxu0 0.0
  %2222 = vmatpush1.msra.mxu0 %v2137
  %2223 = vmatprep.subr.mxu0 0.0
  %2224 = vmatpush1.msra.mxu0 %v2138
  %2225 = vmatprep.subr.mxu0 0.0
  %2226 = vmatpush1.msra.mxu0 %v2139
  %2227 = vmatprep.subr.mxu0 0.0
  %2228 = vmatpush1.msra.mxu0 %v2140
  %2229 = vmatprep.subr.mxu0 0.0
  %2230 = vmatpush1.msra.mxu0 %v2141
  %2231 = vmatprep.subr.mxu0 0.0
  %2232 = vmatpush1.msra.mxu0 %v2142
  %2233 = vmatprep.subr.mxu0 0.0
  %2234 = vmatpush1.msra.mxu0 %v2143
  %2235 = vmatprep.subr.mxu0 0.0
  %2236 = vmatpush1.msra.mxu0 %v2144
  %2237 = vmatprep.subr.mxu0 0.0
  %2238 = vmatpush1.msra.mxu0 %v2145
  %2239 = vmatprep.subr.mxu0 0.0
  %2240 = vmatpush1.msra.mxu0 %v2146
  %2241 = vmatprep.subr.mxu0 0.0
  %2242 = vmatpush1.msra.mxu0 %v2147
  %2243 = vmatprep.subr.mxu0 0.0
  %2244 = vmatpush1.msra.mxu0 %v2148
  %2245 = vmatprep.mubr.f32.mxu0 %v2023
  %2246 = vmatmul.mubr.f32.gmra.mrb[0].mxu0 %v1960
  %v2247 = vpop.f32.mrb[0].mxu0
  %v2248 = vadd.f32 0.0, %v2247
  %v2249 = vpop.f32.mrb[0].mxu0
  %2250 = vmatprep.mubr.f32.mxu0 %v2053
  %2251 = vmatmul.mubr.f32.gmra.mrb[0].mxu0 %v1990
  %v2252 = vpop.f32.mrb[0].mxu0
  %v2253 = vadd.f32 0.0, %v2252
  %v2254 = vpop.f32.mrb[0].mxu0
  %2255 = vmatprep.mubr.f32.mxu0 %v2052
  %2256 = vmatmul.mubr.f32.gmra.mrb[0].mxu0 %v1989
  %v2257 = vpop.f32.mrb[0].mxu0
  %v2258 = vadd.f32 0.0, %v2257
  %v2259 = vpop.f32.mrb[0].mxu0
  %2260 = vmatprep.mubr.f32.mxu0 %v2051
  %2261 = vmatmul.mubr.f32.gmra.mrb[0].mxu0 %v1988
  %v2262 = vpop.f32.mrb[0].mxu0
  %v2263 = vadd.f32 0.0, %v2262
  %v2264 = vpop.f32.mrb[0].mxu0
  %2265 = vmatprep.mubr.f32.mxu0 %v2050
  %2266 = vmatmul.mubr.f32.gmra.mrb[0].mxu0 %v1987
  %v2267 = vpop.f32.mrb[0].mxu0
  %v2268 = vadd.f32 0.0, %v2267
  %v2269 = vpop.f32.mrb[0].mxu0
  %2270 = vmatprep.mubr.f32.mxu0 %v2049
  %2271 = vmatmul.mubr.f32.gmra.mrb[0].mxu0 %v1986
  %v2272 = vpop.f32.mrb[0].mxu0
  %v2273 = vadd.f32 0.0, %v2272
  %v2274 = vpop.f32.mrb[0].mxu0
  %2275 = vmatprep.mubr.f32.mxu0 %v2048
  %2276 = vmatmul.mubr.f32.gmra.mrb[0].mxu0 %v1985
  %v2277 = vpop.f32.mrb[0].mxu0
  %v2278 = vadd.f32 0.0, %v2277
  %v2279 = vpop.f32.mrb[0].mxu0
  %2280 = vmatprep.mubr.f32.mxu0 %v2047
  %2281 = vmatmul.mubr.f32.gmra.mrb[0].mxu0 %v1984
  %v2282 = vpop.f32.mrb[0].mxu0
  %v2283 = vadd.f32 0.0, %v2282
  %v2284 = vpop.f32.mrb[0].mxu0
  %2285 = vmatprep.mubr.f32.mxu0 %v2046
  %2286 = vmatmul.mubr.f32.gmra.mrb[0].mxu0 %v1983
  %v2287 = vpop.f32.mrb[0].mxu0
  %v2288 = vadd.f32 0.0, %v2287
  %v2289 = vpop.f32.mrb[0].mxu0
  %2290 = vmatprep.mubr.f32.mxu0 %v2045
  %2291 = vmatmul.mubr.f32.gmra.mrb[0].mxu0 %v1982
  %v2292 = vpop.f32.mrb[0].mxu0
  %v2293 = vadd.f32 0.0, %v2292
  %v2294 = vpop.f32.mrb[0].mxu0
  %2295 = vmatprep.mubr.f32.mxu0 %v2044
  %2296 = vmatmul.mubr.f32.gmra.mrb[0].mxu0 %v1981
  %v2297 = vpop.f32.mrb[0].mxu0
  %v2298 = vadd.f32 0.0, %v2297
  %v2299 = vpop.f32.mrb[0].mxu0
  %2300 = vmatprep.mubr.f32.mxu0 %v2043
  %2301 = vmatmul.mubr.f32.gmra.mrb[0].mxu0 %v1980
  %v2302 = vpop.f32.mrb[0].mxu0
  %v2303 = vadd.f32 0.0, %v2302
  %v2304 = vpop.f32.mrb[0].mxu0
  %2305 = vmatprep.mubr.f32.mxu0 %v2042
  %2306 = vmatmul.mubr.f32.gmra.mrb[0].mxu0 %v1979
  %v2307 = vpop.f32.mrb[0].mxu0
  %v2308 = vadd.f32 0.0, %v2307
  %v2309 = vpop.f32.mrb[0].mxu0
  %2310 = vmatprep.mubr.f32.mxu0 %v2041
  %2311 = vmatmul.mubr.f32.gmra.mrb[0].mxu0 %v1978
  %v2312 = vpop.f32.mrb[0].mxu0
  %v2313 = vadd.f32 0.0, %v2312
  %v2314 = vpop.f32.mrb[0].mxu0
  %2315 = vmatprep.mubr.f32.mxu0 %v2040
  %2316 = vmatmul.mubr.f32.gmra.mrb[0].mxu0 %v1977
  %v2317 = vpop.f32.mrb[0].mxu0
  %v2318 = vadd.f32 0.0, %v2317
  %v2319 = vpop.f32.mrb[0].mxu0
  %2320 = vmatprep.mubr.f32.mxu0 %v2039
  %2321 = vmatmul.mubr.f32.gmra.mrb[0].mxu0 %v1976
  %v2322 = vpop.f32.mrb[0].mxu0
  %v2323 = vadd.f32 0.0, %v2322
  %v2324 = vpop.f32.mrb[0].mxu0
  %2325 = vmatprep.mubr.f32.mxu0 %v2038
  %2326 = vmatmul.mubr.f32.gmra.mrb[0].mxu0 %v1975
  %v2327 = vpop.f32.mrb[0].mxu0
  %v2328 = vadd.f32 0.0, %v2327
  %v2329 = vpop.f32.mrb[0].mxu0
  %2330 = vmatprep.mubr.f32.mxu0 %v2037
  %2331 = vmatmul.mubr.f32.gmra.mrb[0].mxu0 %v1974
  %v2332 = vpop.f32.mrb[0].mxu0
  %v2333 = vadd.f32 0.0, %v2332
  %v2334 = vpop.f32.mrb[0].mxu0
  %2335 = vmatprep.mubr.f32.mxu0 %v2036
  %2336 = vmatmul.mubr.f32.gmra.mrb[0].mxu0 %v1973
  %v2337 = vpop.f32.mrb[0].mxu0
  %v2338 = vadd.f32 0.0, %v2337
  %v2339 = vpop.f32.mrb[0].mxu0
  %2340 = vmatprep.mubr.f32.mxu0 %v2035
  %2341 = vmatmul.mubr.f32.gmra.mrb[0].mxu0 %v1972
  %v2342 = vpop.f32.mrb[0].mxu0
  %v2343 = vadd.f32 0.0, %v2342
  %v2344 = vpop.f32.mrb[0].mxu0
  %2345 = vmatprep.mubr.f32.mxu0 %v2034
  %2346 = vmatmul.mubr.f32.gmra.mrb[0].mxu0 %v1971
  %v2347 = vpop.f32.mrb[0].mxu0
  %v2348 = vadd.f32 0.0, %v2347
  %v2349 = vpop.f32.mrb[0].mxu0
  %2350 = vmatprep.mubr.f32.mxu0 %v2033
  %2351 = vmatmul.mubr.f32.gmra.mrb[0].mxu0 %v1970
  %v2352 = vpop.f32.mrb[0].mxu0
  %v2353 = vadd.f32 0.0, %v2352
  %v2354 = vpop.f32.mrb[0].mxu0
  %2355 = vmatprep.mubr.f32.mxu0 %v2032
  %2356 = vmatmul.mubr.f32.gmra.mrb[0].mxu0 %v1969
  %v2357 = vpop.f32.mrb[0].mxu0
  %v2358 = vadd.f32 0.0, %v2357
  %v2359 = vpop.f32.mrb[0].mxu0
  %2360 = vmatprep.mubr.f32.mxu0 %v2031
  %2361 = vmatmul.mubr.f32.gmra.mrb[0].mxu0 %v1968
  %v2362 = vpop.f32.mrb[0].mxu0
  %v2363 = vadd.f32 0.0, %v2362
  %v2364 = vpop.f32.mrb[0].mxu0
  %2365 = vmatprep.mubr.f32.mxu0 %v2030
  %2366 = vmatmul.mubr.f32.gmra.mrb[0].mxu0 %v1967
  %v2367 = vpop.f32.mrb[0].mxu0
  %v2368 = vadd.f32 0.0, %v2367
  %v2369 = vpop.f32.mrb[0].mxu0
  %2370 = vmatprep.mubr.f32.mxu0 %v2029
  %2371 = vmatmul.mubr.f32.gmra.mrb[0].mxu0 %v1966
  %v2372 = vpop.f32.mrb[0].mxu0
  %v2373 = vadd.f32 0.0, %v2372
  %v2374 = vpop.f32.mrb[0].mxu0
  %2375 = vmatprep.mubr.f32.mxu0 %v2028
  %2376 = vmatmul.mubr.f32.gmra.mrb[0].mxu0 %v1965
  %v2377 = vpop.f32.mrb[0].mxu0
  %v2378 = vadd.f32 0.0, %v2377
  %v2379 = vpop.f32.mrb[0].mxu0
  %2380 = vmatprep.mubr.f32.mxu0 %v2027
  %2381 = vmatmul.mubr.f32.gmra.mrb[0].mxu0 %v1964
  %v2382 = vpop.f32.mrb[0].mxu0
  %v2383 = vadd.f32 0.0, %v2382
  %v2384 = vpop.f32.mrb[0].mxu0
  %2385 = vmatprep.mubr.f32.mxu0 %v2026
  %2386 = vmatmul.mubr.f32.gmra.mrb[0].mxu0 %v1963
  %v2387 = vpop.f32.mrb[0].mxu0
  %v2388 = vadd.f32 0.0, %v2387
  %v2389 = vpop.f32.mrb[0].mxu0
  %2390 = vmatprep.mubr.f32.mxu0 %v2025
  %2391 = vmatmul.mubr.f32.gmra.mrb[0].mxu0 %v1962
  %v2392 = vpop.f32.mrb[0].mxu0
  %v2393 = vadd.f32 0.0, %v2392
  %v2394 = vpop.f32.mrb[0].mxu0
  %2395 = vmatprep.mubr.f32.mxu0 %v2024
  %2396 = vmatmul.mubr.f32.gmra.mrb[0].mxu0 %v1961
  %v2397 = vpop.f32.mrb[0].mxu0
  %v2398 = vadd.f32 0.0, %v2397
  %v2399 = vpop.f32.mrb[0].mxu0
  %2400 = vdwg.mxu0
  %2401 = vmatprep.subr.mxu0 0.0
  %2402 = vmatpush1.msra.mxu0 %v2149
  %2403 = vmatprep.subr.mxu0 0.0
  %2404 = vmatpush1.msra.mxu0 %v2150
  %2405 = vmatprep.subr.mxu0 0.0
  %2406 = vmatpush1.msra.mxu0 %v2151
  %2407 = vmatprep.subr.mxu0 0.0
  %2408 = vmatpush1.msra.mxu0 %v2152
  %2409 = vmatprep.subr.mxu0 0.0
  %2410 = vmatpush1.msra.mxu0 %v2153
  %2411 = vmatprep.subr.mxu0 0.0
  %2412 = vmatpush1.msra.mxu0 %v2154
  %2413 = vmatprep.subr.mxu0 0.0
  %2414 = vmatpush1.msra.mxu0 %v2155
  %2415 = vmatprep.subr.mxu0 0.0
  %2416 = vmatpush1.msra.mxu0 %v2156
  %2417 = vmatprep.subr.mxu0 0.0
  %2418 = vmatpush1.msra.mxu0 %v2157
  %2419 = vmatprep.subr.mxu0 0.0
  %2420 = vmatpush1.msra.mxu0 %v2158
  %2421 = vmatprep.subr.mxu0 0.0
  %2422 = vmatpush1.msra.mxu0 %v2159
  %2423 = vmatprep.subr.mxu0 0.0
  %2424 = vmatpush1.msra.mxu0 %v2160
  %2425 = vmatprep.subr.mxu0 0.0
  %2426 = vmatpush1.msra.mxu0 %v2161
  %2427 = vmatprep.subr.mxu0 0.0
  %2428 = vmatpush1.msra.mxu0 %v2162
  %2429 = vmatprep.subr.mxu0 0.0
  %2430 = vmatpush1.msra.mxu0 %v2163
  %2431 = vmatprep.subr.mxu0 0.0
  %2432 = vmatpush1.msra.mxu0 %v2164
  %2433 = vmatprep.subr.mxu0 0.0
  %2434 = vmatpush1.msra.mxu0 %v2165
  %2435 = vmatprep.subr.mxu0 0.0
  %2436 = vmatpush1.msra.mxu0 %v2166
  %2437 = vmatprep.subr.mxu0 0.0
  %2438 = vmatpush1.msra.mxu0 %v2167
  %2439 = vmatprep.subr.mxu0 0.0
  %2440 = vmatpush1.msra.mxu0 %v2168
  %2441 = vmatprep.subr.mxu0 0.0
  %2442 = vmatpush1.msra.mxu0 %v2169
  %2443 = vmatprep.subr.mxu0 0.0
  %2444 = vmatpush1.msra.mxu0 %v2170
  %2445 = vmatprep.subr.mxu0 0.0
  %2446 = vmatpush1.msra.mxu0 %v2171
  %2447 = vmatprep.subr.mxu0 0.0
  %2448 = vmatpush1.msra.mxu0 %v2172
  %2449 = vmatprep.subr.mxu0 0.0
  %2450 = vmatpush1.msra.mxu0 %v2173
  %2451 = vmatprep.subr.mxu0 0.0
  %2452 = vmatpush1.msra.mxu0 %v2174
  %2453 = vmatprep.subr.mxu0 0.0
  %2454 = vmatpush1.msra.mxu0 %v2175
  %2455 = vmatprep.subr.mxu0 0.0
  %2456 = vmatpush1.msra.mxu0 %v2176
  %2457 = vmatprep.subr.mxu0 0.0
  %2458 = vmatpush1.msra.mxu0 %v2177
  %2459 = vmatprep.subr.mxu0 0.0
  %2460 = vmatpush1.msra.mxu0 %v2178
  %2461 = vmatprep.subr.mxu0 0.0
  %2462 = vmatpush1.msra.mxu0 %v2179
  %2463 = vmatprep.subr.mxu0 0.0
  %2464 = vmatpush1.msra.mxu0 %v2180
  %2465 = vmatprep.mubr.f32.mxu0 %v1898
  %2466 = vmatmul.mubr.f32.gmra.mrb[0].mxu0 %v2116
  %v2467 = vpop.f32.mrb[0].mxu0
  %v2468 = vadd.f32 %v2248, %v2467
  %v2469 = vpop.f32.mrb[0].mxu0
  %2470 = vmatprep.mubr.f32.mxu0 %v1899
  %2471 = vmatmul.mubr.f32.gmra.mrb[0].mxu0 %v2115
  %v2472 = vpop.f32.mrb[0].mxu0
  %v2473 = vadd.f32 %v2253, %v2472
  %v2474 = vpop.f32.mrb[0].mxu0
  %2475 = vmatprep.mubr.f32.mxu0 %v1900
  %2476 = vmatmul.mubr.f32.gmra.mrb[0].mxu0 %v2114
  %v2477 = vpop.f32.mrb[0].mxu0
  %v2478 = vadd.f32 %v2258, %v2477
  %v2479 = vpop.f32.mrb[0].mxu0
  %2480 = vmatprep.mubr.f32.mxu0 %v1901
  %2481 = vmatmul.mubr.f32.gmra.mrb[0].mxu0 %v2113
  %v2482 = vpop.f32.mrb[0].mxu0
  %v2483 = vadd.f32 %v2263, %v2482
  %v2484 = vpop.f32.mrb[0].mxu0
  %2485 = vmatprep.mubr.f32.mxu0 %v1902
  %2486 = vmatmul.mubr.f32.gmra.mrb[0].mxu0 %v2112
  %v2487 = vpop.f32.mrb[0].mxu0
  %v2488 = vadd.f32 %v2268, %v2487
  %v2489 = vpop.f32.mrb[0].mxu0
  %2490 = vmatprep.mubr.f32.mxu0 %v1903
  %2491 = vmatmul.mubr.f32.gmra.mrb[0].mxu0 %v2111
  %v2492 = vpop.f32.mrb[0].mxu0
  %v2493 = vadd.f32 %v2273, %v2492
  %v2494 = vpop.f32.mrb[0].mxu0
  %2495 = vmatprep.mubr.f32.mxu0 %v1904
  %2496 = vmatmul.mubr.f32.gmra.mrb[0].mxu0 %v2110
  %v2497 = vpop.f32.mrb[0].mxu0
  %v2498 = vadd.f32 %v2278, %v2497
  %v2499 = vpop.f32.mrb[0].mxu0
  %2500 = vmatprep.mubr.f32.mxu0 %v1905
  %2501 = vmatmul.mubr.f32.gmra.mrb[0].mxu0 %v2109
  %v2502 = vpop.f32.mrb[0].mxu0
  %v2503 = vadd.f32 %v2283, %v2502
  %v2504 = vpop.f32.mrb[0].mxu0
  %2505 = vmatprep.mubr.f32.mxu0 %v1906
  %2506 = vmatmul.mubr.f32.gmra.mrb[0].mxu0 %v2108
  %v2507 = vpop.f32.mrb[0].mxu0
  %v2508 = vadd.f32 %v2288, %v2507
  %v2509 = vpop.f32.mrb[0].mxu0
  %2510 = vmatprep.mubr.f32.mxu0 %v1907
  %2511 = vmatmul.mubr.f32.gmra.mrb[0].mxu0 %v2107
  %v2512 = vpop.f32.mrb[0].mxu0
  %v2513 = vadd.f32 %v2293, %v2512
  %v2514 = vpop.f32.mrb[0].mxu0
  %2515 = vmatprep.mubr.f32.mxu0 %v1908
  %2516 = vmatmul.mubr.f32.gmra.mrb[0].mxu0 %v2106
  %v2517 = vpop.f32.mrb[0].mxu0
  %v2518 = vadd.f32 %v2298, %v2517
  %v2519 = vpop.f32.mrb[0].mxu0
  %2520 = vmatprep.mubr.f32.mxu0 %v1909
  %2521 = vmatmul.mubr.f32.gmra.mrb[0].mxu0 %v2105
  %v2522 = vpop.f32.mrb[0].mxu0
  %v2523 = vadd.f32 %v2303, %v2522
  %v2524 = vpop.f32.mrb[0].mxu0
  %2525 = vmatprep.mubr.f32.mxu0 %v1910
  %2526 = vmatmul.mubr.f32.gmra.mrb[0].mxu0 %v2104
  %v2527 = vpop.f32.mrb[0].mxu0
  %v2528 = vadd.f32 %v2308, %v2527
  %v2529 = vpop.f32.mrb[0].mxu0
  %2530 = vmatprep.mubr.f32.mxu0 %v1911
  %2531 = vmatmul.mubr.f32.gmra.mrb[0].mxu0 %v2103
  %v2532 = vpop.f32.mrb[0].mxu0
  %v2533 = vadd.f32 %v2313, %v2532
  %v2534 = vpop.f32.mrb[0].mxu0
  %2535 = vmatprep.mubr.f32.mxu0 %v1912
  %2536 = vmatmul.mubr.f32.gmra.mrb[0].mxu0 %v2102
  %v2537 = vpop.f32.mrb[0].mxu0
  %v2538 = vadd.f32 %v2318, %v2537
  %v2539 = vpop.f32.mrb[0].mxu0
  %2540 = vmatprep.mubr.f32.mxu0 %v1913
  %2541 = vmatmul.mubr.f32.gmra.mrb[0].mxu0 %v2101
  %v2542 = vpop.f32.mrb[0].mxu0
  %v2543 = vadd.f32 %v2323, %v2542
  %v2544 = vpop.f32.mrb[0].mxu0
  %2545 = vmatprep.mubr.f32.mxu0 %v1914
  %2546 = vmatmul.mubr.f32.gmra.mrb[0].mxu0 %v2100
  %v2547 = vpop.f32.mrb[0].mxu0
  %v2548 = vadd.f32 %v2328, %v2547
  %v2549 = vpop.f32.mrb[0].mxu0
  %2550 = vmatprep.mubr.f32.mxu0 %v1915
  %2551 = vmatmul.mubr.f32.gmra.mrb[0].mxu0 %v2099
  %v2552 = vpop.f32.mrb[0].mxu0
  %v2553 = vadd.f32 %v2333, %v2552
  %v2554 = vpop.f32.mrb[0].mxu0
  %2555 = vmatprep.mubr.f32.mxu0 %v1916
  %2556 = vmatmul.mubr.f32.gmra.mrb[0].mxu0 %v2098
  %v2557 = vpop.f32.mrb[0].mxu0
  %v2558 = vadd.f32 %v2338, %v2557
  %v2559 = vpop.f32.mrb[0].mxu0
  %2560 = vmatprep.mubr.f32.mxu0 %v1917
  %2561 = vmatmul.mubr.f32.gmra.mrb[0].mxu0 %v2097
  %v2562 = vpop.f32.mrb[0].mxu0
  %v2563 = vadd.f32 %v2343, %v2562
  %v2564 = vpop.f32.mrb[0].mxu0
  %2565 = vmatprep.mubr.f32.mxu0 %v1918
  %2566 = vmatmul.mubr.f32.gmra.mrb[0].mxu0 %v2096
  %v2567 = vpop.f32.mrb[0].mxu0
  %v2568 = vadd.f32 %v2348, %v2567
  %v2569 = vpop.f32.mrb[0].mxu0
  %2570 = vmatprep.mubr.f32.mxu0 %v1919
  %2571 = vmatmul.mubr.f32.gmra.mrb[0].mxu0 %v2095
  %v2572 = vpop.f32.mrb[0].mxu0
  %v2573 = vadd.f32 %v2353, %v2572
  %v2574 = vpop.f32.mrb[0].mxu0
  %2575 = vmatprep.mubr.f32.mxu0 %v1920
  %2576 = vmatmul.mubr.f32.gmra.mrb[0].mxu0 %v2094
  %v2577 = vpop.f32.mrb[0].mxu0
  %v2578 = vadd.f32 %v2358, %v2577
  %v2579 = vpop.f32.mrb[0].mxu0
  %2580 = vmatprep.mubr.f32.mxu0 %v1921
  %2581 = vmatmul.mubr.f32.gmra.mrb[0].mxu0 %v2093
  %v2582 = vpop.f32.mrb[0].mxu0
  %v2583 = vadd.f32 %v2363, %v2582
  %v2584 = vpop.f32.mrb[0].mxu0
  %2585 = vmatprep.mubr.f32.mxu0 %v1922
  %2586 = vmatmul.mubr.f32.gmra.mrb[0].mxu0 %v2092
  %v2587 = vpop.f32.mrb[0].mxu0
  %v2588 = vadd.f32 %v2368, %v2587
  %v2589 = vpop.f32.mrb[0].mxu0
  %2590 = vmatprep.mubr.f32.mxu0 %v1923
  %2591 = vmatmul.mubr.f32.gmra.mrb[0].mxu0 %v2091
  %v2592 = vpop.f32.mrb[0].mxu0
  %v2593 = vadd.f32 %v2373, %v2592
  %v2594 = vpop.f32.mrb[0].mxu0
  %2595 = vmatprep.mubr.f32.mxu0 %v1924
  %2596 = vmatmul.mubr.f32.gmra.mrb[0].mxu0 %v2090
  %v2597 = vpop.f32.mrb[0].mxu0
  %v2598 = vadd.f32 %v2378, %v2597
  %v2599 = vpop.f32.mrb[0].mxu0
  %2600 = vmatprep.mubr.f32.mxu0 %v1925
  %2601 = vmatmul.mubr.f32.gmra.mrb[0].mxu0 %v2089
  %v2602 = vpop.f32.mrb[0].mxu0
  %v2603 = vadd.f32 %v2383, %v2602
  %v2604 = vpop.f32.mrb[0].mxu0
  %2605 = vmatprep.mubr.f32.mxu0 %v1926
  %2606 = vmatmul.mubr.f32.gmra.mrb[0].mxu0 %v2088
  %v2607 = vpop.f32.mrb[0].mxu0
  %v2608 = vadd.f32 %v2388, %v2607
  %v2609 = vpop.f32.mrb[0].mxu0
  %2610 = vmatprep.mubr.f32.mxu0 %v1927
  %2611 = vmatmul.mubr.f32.gmra.mrb[0].mxu0 %v2087
  %v2612 = vpop.f32.mrb[0].mxu0
  %v2613 = vadd.f32 %v2393, %v2612
  %v2614 = vpop.f32.mrb[0].mxu0
  %2615 = vmatprep.mubr.f32.mxu0 %v1928
  %2616 = vmatmul.mubr.f32.gmra.mrb[0].mxu0 %v2086
  %v2617 = vpop.f32.mrb[0].mxu0
  %v2618 = vadd.f32 %v2398, %v2617
  %v2619 = vpop.f32.mrb[0].mxu0
  %2620 = vdwg.mxu0
  %v2621 = vmul.f32 %v2468, %v926
  %v2622 = vmul.f32 %v2473, %v927
  %v2623 = vmul.f32 %v2478, %v928
  %v2624 = vmul.f32 %v2483, %v929
  %v2625 = vmul.f32 %v2488, %v930
  %v2626 = vmul.f32 %v2493, %v931
  %v2627 = vmul.f32 %v2498, %v932
  %v2628 = vmul.f32 %v2503, %v933
  %v2629 = vmul.f32 %v2508, %v934
  %v2630 = vmul.f32 %v2513, %v935
  %v2631 = vmul.f32 %v2518, %v936
  %v2632 = vmul.f32 %v2523, %v937
  %v2633 = vmul.f32 %v2528, %v938
  %v2634 = vmul.f32 %v2533, %v939
  %v2635 = vmul.f32 %v2538, %v940
  %v2636 = vmul.f32 %v2543, %v941
  %v2637 = vmul.f32 %v2548, %v942
  %v2638 = vmul.f32 %v2553, %v943
  %v2639 = vmul.f32 %v2558, %v944
  %v2640 = vmul.f32 %v2563, %v945
  %v2641 = vmul.f32 %v2568, %v946
  %v2642 = vmul.f32 %v2573, %v947
  %v2643 = vmul.f32 %v2578, %v948
  %v2644 = vmul.f32 %v2583, %v949
  %v2645 = vmul.f32 %v2588, %v950
  %v2646 = vmul.f32 %v2593, %v951
  %v2647 = vmul.f32 %v2598, %v952
  %v2648 = vmul.f32 %v2603, %v953
  %v2649 = vmul.f32 %v2608, %v954
  %v2650 = vmul.f32 %v2613, %v955
  %v2651 = vmul.f32 %v2618, %v956
  %v2652 = vadd.f32 %v2621, %v2622
  %v2653 = vadd.f32 %v2652, %v2623
  %v2654 = vadd.f32 %v2653, %v2624
  %v2655 = vadd.f32 %v2654, %v2625
  %v2656 = vadd.f32 %v2655, %v2626
  %v2657 = vadd.f32 %v2656, %v2627
  %v2658 = vadd.f32 %v2657, %v2628
  %v2659 = vadd.f32 %v2658, %v2629
  %v2660 = vadd.f32 %v2659, %v2630
  %v2661 = vadd.f32 %v2660, %v2631
  %v2662 = vadd.f32 %v2661, %v2632
  %v2663 = vadd.f32 %v2662, %v2633
  %v2664 = vadd.f32 %v2663, %v2634
  %v2665 = vadd.f32 %v2664, %v2635
  %v2666 = vadd.f32 %v2665, %v2636
  %v2667 = vadd.f32 %v2666, %v2637
  %v2668 = vadd.f32 %v2667, %v2638
  %v2669 = vadd.f32 %v2668, %v2639
  %v2670 = vadd.f32 %v2669, %v2640
  %v2671 = vadd.f32 %v2670, %v2641
  %v2672 = vadd.f32 %v2671, %v2642
  %v2673 = vadd.f32 %v2672, %v2643
  %v2674 = vadd.f32 %v2673, %v2644
  %v2675 = vadd.f32 %v2674, %v2645
  %v2676 = vadd.f32 %v2675, %v2646
  %v2677 = vadd.f32 %v2676, %v2647
  %v2678 = vadd.f32 %v2677, %v2648
  %v2679 = vadd.f32 %v2678, %v2649
  %v2680 = vadd.f32 %v2679, %v2650
  %v2681 = vadd.f32 %v2680, %v2651
  %v2682 = vrot.slane %v2681, 4
  %v2683 = vadd.f32 %v2681, %v2682
  %v2684 = vrot.slane %v2683, 2
  %v2685 = vadd.f32 %v2683, %v2684
  %v2686 = vrot.slane %v2685, 1
  %v2687 = vadd.f32 %v2685, %v2686
  %v2688 = vmul.f32 %v2687, 0.0061728396
  %v2689 = vmul.f32 %v2621, %v2468
  %v2690 = vmul.f32 %v2622, %v2473
  %v2691 = vmul.f32 %v2623, %v2478
  %v2692 = vmul.f32 %v2624, %v2483
  %v2693 = vmul.f32 %v2625, %v2488
  %v2694 = vmul.f32 %v2626, %v2493
  %v2695 = vmul.f32 %v2627, %v2498
  %v2696 = vmul.f32 %v2628, %v2503
  %v2697 = vmul.f32 %v2629, %v2508
  %v2698 = vmul.f32 %v2630, %v2513
  %v2699 = vmul.f32 %v2631, %v2518
  %v2700 = vmul.f32 %v2632, %v2523
  %v2701 = vmul.f32 %v2633, %v2528
  %v2702 = vmul.f32 %v2634, %v2533
  %v2703 = vmul.f32 %v2635, %v2538
  %v2704 = vmul.f32 %v2636, %v2543
  %v2705 = vmul.f32 %v2637, %v2548
  %v2706 = vmul.f32 %v2638, %v2553
  %v2707 = vmul.f32 %v2639, %v2558
  %v2708 = vmul.f32 %v2640, %v2563
  %v2709 = vmul.f32 %v2641, %v2568
  %v2710 = vmul.f32 %v2642, %v2573
  %v2711 = vmul.f32 %v2643, %v2578
  %v2712 = vmul.f32 %v2644, %v2583
  %v2713 = vmul.f32 %v2645, %v2588
  %v2714 = vmul.f32 %v2646, %v2593
  %v2715 = vmul.f32 %v2647, %v2598
  %v2716 = vmul.f32 %v2648, %v2603
  %v2717 = vmul.f32 %v2649, %v2608
  %v2718 = vmul.f32 %v2650, %v2613
  %v2719 = vmul.f32 %v2651, %v2618
  %v2720 = vadd.f32 %v2689, %v2690
  %v2721 = vadd.f32 %v2720, %v2691
  %v2722 = vadd.f32 %v2721, %v2692
  %v2723 = vadd.f32 %v2722, %v2693
  %v2724 = vadd.f32 %v2723, %v2694
  %v2725 = vadd.f32 %v2724, %v2695
  %v2726 = vadd.f32 %v2725, %v2696
  %v2727 = vadd.f32 %v2726, %v2697
  %v2728 = vadd.f32 %v2727, %v2698
  %v2729 = vadd.f32 %v2728, %v2699
  %v2730 = vadd.f32 %v2729, %v2700
  %v2731 = vadd.f32 %v2730, %v2701
  %v2732 = vadd.f32 %v2731, %v2702
  %v2733 = vadd.f32 %v2732, %v2703
  %v2734 = vadd.f32 %v2733, %v2704
  %v2735 = vadd.f32 %v2734, %v2705
  %v2736 = vadd.f32 %v2735, %v2706
  %v2737 = vadd.f32 %v2736, %v2707
  %v2738 = vadd.f32 %v2737, %v2708
  %v2739 = vadd.f32 %v2738, %v2709
  %v2740 = vadd.f32 %v2739, %v2710
  %v2741 = vadd.f32 %v2740, %v2711
  %v2742 = vadd.f32 %v2741, %v2712
  %v2743 = vadd.f32 %v2742, %v2713
  %v2744 = vadd.f32 %v2743, %v2714
  %v2745 = vadd.f32 %v2744, %v2715
  %v2746 = vadd.f32 %v2745, %v2716
  %v2747 = vadd.f32 %v2746, %v2717
  %v2748 = vadd.f32 %v2747, %v2718
  %v2749 = vadd.f32 %v2748, %v2719
  %v2750 = vrot.slane %v2749, 4
  %v2751 = vadd.f32 %v2749, %v2750
  %v2752 = vrot.slane %v2751, 2
  %v2753 = vadd.f32 %v2751, %v2752
  %v2754 = vrot.slane %v2753, 1
  %v2755 = vadd.f32 %v2753, %v2754
  %v2756 = vmul.f32 %v2755, 0.0061728396
  %v2757 = vmul.f32 %v2688, %v2688
  %v2758 = vsub.f32 %v2756, %v2757
  %v2759 = vld [vmem:[%s5] sm:$0x1]
  %v2760 = vadd.f32 %v2758, 1e-05
  %v2761 = vrsqrt.pop %v2760
  %v2762 = vmul.f32 %v2759, %v2761
  %v2763 = vsub.f32 %v2468, %v2688
  %v2764 = vsub.f32 %v2473, %v2688
  %v2765 = vsub.f32 %v2478, %v2688
  %v2766 = vsub.f32 %v2483, %v2688
  %v2767 = vsub.f32 %v2488, %v2688
  %v2768 = vsub.f32 %v2493, %v2688
  %v2769 = vsub.f32 %v2498, %v2688
  %v2770 = vsub.f32 %v2503, %v2688
  %v2771 = vsub.f32 %v2508, %v2688
  %v2772 = vsub.f32 %v2513, %v2688
  %v2773 = vsub.f32 %v2518, %v2688
  %v2774 = vsub.f32 %v2523, %v2688
  %v2775 = vsub.f32 %v2528, %v2688
  %v2776 = vsub.f32 %v2533, %v2688
  %v2777 = vsub.f32 %v2538, %v2688
  %v2778 = vsub.f32 %v2543, %v2688
  %v2779 = vsub.f32 %v2548, %v2688
  %v2780 = vsub.f32 %v2553, %v2688
  %v2781 = vsub.f32 %v2558, %v2688
  %v2782 = vsub.f32 %v2563, %v2688
  %v2783 = vsub.f32 %v2568, %v2688
  %v2784 = vsub.f32 %v2573, %v2688
  %v2785 = vsub.f32 %v2578, %v2688
  %v2786 = vsub.f32 %v2583, %v2688
  %v2787 = vsub.f32 %v2588, %v2688
  %v2788 = vsub.f32 %v2593, %v2688
  %v2789 = vsub.f32 %v2598, %v2688
  %v2790 = vsub.f32 %v2603, %v2688
  %v2791 = vsub.f32 %v2608, %v2688
  %v2792 = vsub.f32 %v2613, %v2688
  %v2793 = vsub.f32 %v2618, %v2688
  %v2795 = vlaneseq
  %v2796 = vshrl.u32 %v2795, 7
  %v2797 = vsub.s32 0, %v2796
  %v2798 = vrot.slane %v2762, %v2797
  %v2800 = vmul.f32 %v2763, %v2798
  %v2801 = vmul.f32 %v2764, %v2798
  %v2802 = vmul.f32 %v2765, %v2798
  %v2803 = vmul.f32 %v2766, %v2798
  %v2804 = vmul.f32 %v2767, %v2798
  %v2805 = vmul.f32 %v2768, %v2798
  %v2806 = vmul.f32 %v2769, %v2798
  %v2807 = vmul.f32 %v2770, %v2798
  %v2808 = vmul.f32 %v2771, %v2798
  %v2809 = vmul.f32 %v2772, %v2798
  %v2810 = vmul.f32 %v2773, %v2798
  %v2811 = vmul.f32 %v2774, %v2798
  %v2812 = vmul.f32 %v2775, %v2798
  %v2813 = vmul.f32 %v2776, %v2798
  %v2814 = vmul.f32 %v2777, %v2798
  %v2815 = vmul.f32 %v2778, %v2798
  %v2816 = vmul.f32 %v2779, %v2798
  %v2817 = vmul.f32 %v2780, %v2798
  %v2818 = vmul.f32 %v2781, %v2798
  %v2819 = vmul.f32 %v2782, %v2798
  %v2820 = vmul.f32 %v2783, %v2798
  %v2821 = vmul.f32 %v2784, %v2798
  %v2822 = vmul.f32 %v2785, %v2798
  %v2823 = vmul.f32 %v2786, %v2798
  %v2824 = vmul.f32 %v2787, %v2798
  %v2825 = vmul.f32 %v2788, %v2798
  %v2826 = vmul.f32 %v2789, %v2798
  %v2827 = vmul.f32 %v2790, %v2798
  %v2828 = vmul.f32 %v2791, %v2798
  %v2829 = vmul.f32 %v2792, %v2798
  %v2830 = vmul.f32 %v2793, %v2798
  %v2831 = vld [vmem:[%s6] sm:$0x1]
  %v2833 = vlaneseq
  %v2834 = vshrl.u32 %v2833, 7
  %v2835 = vsub.s32 0, %v2834
  %v2836 = vrot.slane %v2831, %v2835
  %v2838 = vadd.f32 %v2800, %v2836
  %v2839 = vadd.f32 %v2801, %v2836
  %v2840 = vadd.f32 %v2802, %v2836
  %v2841 = vadd.f32 %v2803, %v2836
  %v2842 = vadd.f32 %v2804, %v2836
  %v2843 = vadd.f32 %v2805, %v2836
  %v2844 = vadd.f32 %v2806, %v2836
  %v2845 = vadd.f32 %v2807, %v2836
  %v2846 = vadd.f32 %v2808, %v2836
  %v2847 = vadd.f32 %v2809, %v2836
  %v2848 = vadd.f32 %v2810, %v2836
  %v2849 = vadd.f32 %v2811, %v2836
  %v2850 = vadd.f32 %v2812, %v2836
  %v2851 = vadd.f32 %v2813, %v2836
  %v2852 = vadd.f32 %v2814, %v2836
  %v2853 = vadd.f32 %v2815, %v2836
  %v2854 = vadd.f32 %v2816, %v2836
  %v2855 = vadd.f32 %v2817, %v2836
  %v2856 = vadd.f32 %v2818, %v2836
  %v2857 = vadd.f32 %v2819, %v2836
  %v2858 = vadd.f32 %v2820, %v2836
  %v2859 = vadd.f32 %v2821, %v2836
  %v2860 = vadd.f32 %v2822, %v2836
  %v2861 = vadd.f32 %v2823, %v2836
  %v2862 = vadd.f32 %v2824, %v2836
  %v2863 = vadd.f32 %v2825, %v2836
  %v2864 = vadd.f32 %v2826, %v2836
  %v2865 = vadd.f32 %v2827, %v2836
  %v2866 = vadd.f32 %v2828, %v2836
  %v2867 = vadd.f32 %v2829, %v2836
  %v2868 = vadd.f32 %v2830, %v2836
  %v2869 = vadd.f32 %v2838, %v26
  %v2870 = vadd.f32 %v2839, %v27
  %v2871 = vadd.f32 %v2840, %v28
  %v2872 = vadd.f32 %v2841, %v29
  %v2873 = vadd.f32 %v2842, %v30
  %v2874 = vadd.f32 %v2843, %v31
  %v2875 = vadd.f32 %v2844, %v32
  %v2876 = vadd.f32 %v2845, %v33
  %v2877 = vadd.f32 %v2846, %v34
  %v2878 = vadd.f32 %v2847, %v35
  %v2879 = vadd.f32 %v2848, %v36
  %v2880 = vadd.f32 %v2849, %v37
  %v2881 = vadd.f32 %v2850, %v38
  %v2882 = vadd.f32 %v2851, %v39
  %v2883 = vadd.f32 %v2852, %v40
  %v2884 = vadd.f32 %v2853, %v41
  %v2885 = vadd.f32 %v2854, %v42
  %v2886 = vadd.f32 %v2855, %v43
  %v2887 = vadd.f32 %v2856, %v44
  %v2888 = vadd.f32 %v2857, %v45
  %v2889 = vadd.f32 %v2858, %v46
  %v2890 = vadd.f32 %v2859, %v47
  %v2891 = vadd.f32 %v2860, %v48
  %v2892 = vadd.f32 %v2861, %v49
  %v2893 = vadd.f32 %v2862, %v50
  %v2894 = vadd.f32 %v2863, %v51
  %v2895 = vadd.f32 %v2864, %v52
  %v2896 = vadd.f32 %v2865, %v53
  %v2897 = vadd.f32 %v2866, %v54
  %v2898 = vadd.f32 %v2867, %v55
  %v2899 = vadd.f32 %v2868, %v56
  %v2900 = vmax.f32 %v2869, 0.0
  %v2901 = vmax.f32 %v2870, 0.0
  %v2902 = vmax.f32 %v2871, 0.0
  %v2903 = vmax.f32 %v2872, 0.0
  %v2904 = vmax.f32 %v2873, 0.0
  %v2905 = vmax.f32 %v2874, 0.0
  %v2906 = vmax.f32 %v2875, 0.0
  %v2907 = vmax.f32 %v2876, 0.0
  %v2908 = vmax.f32 %v2877, 0.0
  %v2909 = vmax.f32 %v2878, 0.0
  %v2910 = vmax.f32 %v2879, 0.0
  %v2911 = vmax.f32 %v2880, 0.0
  %v2912 = vmax.f32 %v2881, 0.0
  %v2913 = vmax.f32 %v2882, 0.0
  %v2914 = vmax.f32 %v2883, 0.0
  %v2915 = vmax.f32 %v2884, 0.0
  %v2916 = vmax.f32 %v2885, 0.0
  %v2917 = vmax.f32 %v2886, 0.0
  %v2918 = vmax.f32 %v2887, 0.0
  %v2919 = vmax.f32 %v2888, 0.0
  %v2920 = vmax.f32 %v2889, 0.0
  %v2921 = vmax.f32 %v2890, 0.0
  %v2922 = vmax.f32 %v2891, 0.0
  %v2923 = vmax.f32 %v2892, 0.0
  %v2924 = vmax.f32 %v2893, 0.0
  %v2925 = vmax.f32 %v2894, 0.0
  %v2926 = vmax.f32 %v2895, 0.0
  %v2927 = vmax.f32 %v2896, 0.0
  %v2928 = vmax.f32 %v2897, 0.0
  %v2929 = vmax.f32 %v2898, 0.0
  %v2930 = vmax.f32 %v2899, 0.0
  %v2931 = vmul.f32 %v2900, %v926
  %v2932 = vmul.f32 %v2901, %v927
  %v2933 = vmul.f32 %v2902, %v928
  %v2934 = vmul.f32 %v2903, %v929
  %v2935 = vmul.f32 %v2904, %v930
  %v2936 = vmul.f32 %v2905, %v931
  %v2937 = vmul.f32 %v2906, %v932
  %v2938 = vmul.f32 %v2907, %v933
  %v2939 = vmul.f32 %v2908, %v934
  %v2940 = vmul.f32 %v2909, %v935
  %v2941 = vmul.f32 %v2910, %v936
  %v2942 = vmul.f32 %v2911, %v937
  %v2943 = vmul.f32 %v2912, %v938
  %v2944 = vmul.f32 %v2913, %v939
  %v2945 = vmul.f32 %v2914, %v940
  %v2946 = vmul.f32 %v2915, %v941
  %v2947 = vmul.f32 %v2916, %v942
  %v2948 = vmul.f32 %v2917, %v943
  %v2949 = vmul.f32 %v2918, %v944
  %v2950 = vmul.f32 %v2919, %v945
  %v2951 = vmul.f32 %v2920, %v946
  %v2952 = vmul.f32 %v2921, %v947
  %v2953 = vmul.f32 %v2922, %v948
  %v2954 = vmul.f32 %v2923, %v949
  %v2955 = vmul.f32 %v2924, %v950
  %v2956 = vmul.f32 %v2925, %v951
  %v2957 = vmul.f32 %v2926, %v952
  %v2958 = vmul.f32 %v2927, %v953
  %v2959 = vmul.f32 %v2928, %v954
  %v2960 = vmul.f32 %v2929, %v955
  %v2961 = vmul.f32 %v2930, %v956
  %2962 = vst [vmem:[%s7] sm:$0xff] %v2931
  %2963 = vst [vmem:[%s7 + $0x8] sm:$0xff] %v2932
  %2964 = vst [vmem:[%s7 + $0x10] sm:$0xff] %v2933
  %2965 = vst [vmem:[%s7 + $0x18] sm:$0xff] %v2934
  %2966 = vst [vmem:[%s7 + $0x20] sm:$0xff] %v2935
  %2967 = vst [vmem:[%s7 + $0x28] sm:$0xff] %v2936
  %2968 = vst [vmem:[%s7 + $0x30] sm:$0xff] %v2937
  %2969 = vst [vmem:[%s7 + $0x38] sm:$0xff] %v2938
  %2970 = vst [vmem:[%s7 + $0x40] sm:$0xff] %v2939
  %2971 = vst [vmem:[%s7 + $0x48] sm:$0xff] %v2940
  %2972 = vst [vmem:[%s7 + $0x50] sm:$0xff] %v2941
  %2973 = vst [vmem:[%s7 + $0x58] sm:$0xff] %v2942
  %2974 = vst [vmem:[%s7 + $0x60] sm:$0xff] %v2943
  %2975 = vst [vmem:[%s7 + $0x68] sm:$0xff] %v2944
  %2976 = vst [vmem:[%s7 + $0x70] sm:$0xff] %v2945
  %2977 = vst [vmem:[%s7 + $0x78] sm:$0xff] %v2946
  %2978 = vst [vmem:[%s7 + $0x80] sm:$0xff] %v2947
  %2979 = vst [vmem:[%s7 + $0x88] sm:$0xff] %v2948
  %2980 = vst [vmem:[%s7 + $0x90] sm:$0xff] %v2949
  %2981 = vst [vmem:[%s7 + $0x98] sm:$0xff] %v2950
  %2982 = vst [vmem:[%s7 + $0xa0] sm:$0xff] %v2951
  %2983 = vst [vmem:[%s7 + $0xa8] sm:$0xff] %v2952
  %2984 = vst [vmem:[%s7 + $0xb0] sm:$0xff] %v2953
  %2985 = vst [vmem:[%s7 + $0xb8] sm:$0xff] %v2954
  %2986 = vst [vmem:[%s7 + $0xc0] sm:$0xff] %v2955
  %2987 = vst [vmem:[%s7 + $0xc8] sm:$0xff] %v2956
  %2988 = vst [vmem:[%s7 + $0xd0] sm:$0xff] %v2957
  %2989 = vst [vmem:[%s7 + $0xd8] sm:$0xff] %v2958
  %2990 = vst [vmem:[%s7 + $0xe0] sm:$0xff] %v2959
  %2991 = vst [vmem:[%s7 + $0xe8] sm:$0xff] %v2960
  %2992 = vst [vmem:[%s7 + $0xf0] sm:$0xff] %v2961
  // Predicated region
  $region30: #{block_forward.1} parent=0 // pred_check
    _
  $region31: #{block_forward.1} parent=0 // pred_check_branch
    %2994 = sbr.rel (0) target = $region33
  $region32: #{block_forward.1} parent=0 // pred_region
    _
  $region33: #{block_forward.1} parent=0 // pred_fallthru
    _
  // Predicated region
  $region34: #{block_forward.1} parent=0 // pred_check
    _
  $region35: #{block_forward.1} parent=0 // pred_check_branch
    %2996 = sbr.rel (0) target = $region37
  $region36: #{block_forward.1} parent=0 // pred_region
    _
  $region37: #{block_forward.1} parent=0 // pred_fallthru
    _

</llo_original>
